<compile_context>
chip_gen: v7x
topology: tpu7x:2x2x1
jax: 0.10.0
libtpu: 0.0.40
codegen_flags: <defaults>
</compile_context>

<pallas_src>
import functools

import jax
import jax.numpy as jnp
from jax.experimental import pallas as pl
from jax.experimental.pallas import tpu as pltpu

# tanh-GELU runs on the EUP (otherwise-idle VLIW slot) instead of a long VPU
# erf polynomial.  Set False if bit-parity with torch's exact-erf GELU is
# required (error vs erf is ~1e-3).
APPROX_GELU = True

VMEM_WORKSET_BUDGET = 40 * 1024 * 1024   # per-step working-set target (v7x: 64 MiB physical VMEM)
VMEM_LIMIT_BYTES = 48 * 1024 * 1024      # raised scoped-VMEM limit (default is 16/32 MiB)
MAX_LANE_TILE = 32768                    # upper bound on the lane tile


def _gelu(x):
    return jax.nn.gelu(x, approximate=APPROX_GELU)


def _choose_lane_tile(m, bytes_per_lane, group_steps):
    """Pad m up to a multiple of 128 and pick the largest lane tile that
    (a) divides the padded extent, (b) keeps the per-step VMEM working set
    under VMEM_WORKSET_BUDGET, and (c) leaves >= 2 lane-grid steps when the
    group axis alone cannot feed both TensorCores (v7x has 2 TCs/chip)."""
    mp = ((m + 127) // 128) * 128
    cap = (VMEM_WORKSET_BUDGET // max(int(bytes_per_lane * 1.5), 1)) // 128 * 128
    cap = max(128, min(cap, MAX_LANE_TILE, mp))
    if group_steps < 2 and mp >= 256:
        cap = min(cap, max(128, (mp // 2) // 128 * 128))
    tl = cap
    while mp % tl != 0:
        tl -= 128
    return mp, tl


# --------------------------------------------------------------------------
# Pallas kernels (channel-major: channels on sublanes, pixels on lanes)
# --------------------------------------------------------------------------

def _mlp_kernel(final_act, x_ref, w1_ref, b1_ref, w2_ref, b2_ref, o_ref):
    # x: (C_in, TL)  w1: (C_mid, C_in)  b1: (C_mid, 1) f32
    # w2: (C_out, C_mid)  b2: (C_out, 1) f32  o: (C_out, TL)
    h = jnp.dot(w1_ref[...], x_ref[...], preferred_element_type=jnp.float32)
    h = _gelu(h + b1_ref[...])                    # f32 activation (v5e-safe)
    y = jnp.dot(w2_ref[...], h.astype(w2_ref.dtype),
                preferred_element_type=jnp.float32) + b2_ref[...]
    if final_act == "sigmoid":
        y = jax.nn.sigmoid(y)
    o_ref[...] = y.astype(o_ref.dtype)


def _block_kernel_merged(c_mid, final_gelu, x1_ref, x_ref, wcat_ref, bcat_ref,
                         w2_ref, b2_ref, o_ref, xcat_ref):
    # Fused NeuralOperator pointwise path with the two K=C_in matmuls merged:
    #   [h; y2] = blockdiag(w1, ww) @ [x1; x] + [b1; bw]
    #   out     = w2 @ gelu(h) + b2 + y2   [+ gelu]
    c_in = x1_ref.shape[0]
    xcat_ref[:c_in, :] = x1_ref[...]              # channel-stack in VMEM scratch
    xcat_ref[c_in:, :] = x_ref[...]
    hy = jnp.dot(wcat_ref[...], xcat_ref[...],
                 preferred_element_type=jnp.float32) + bcat_ref[...]
    h = _gelu(hy[:c_mid, :])
    y = jnp.dot(w2_ref[...], h.astype(w2_ref.dtype),
                preferred_element_type=jnp.float32) + b2_ref[...]
    y = y + hy[c_mid:, :]
    if final_gelu:
        y = _gelu(y)
    o_ref[...] = y.astype(o_ref.dtype)


def _block_kernel_split(final_gelu, x1_ref, x_ref, w1_ref, b1_ref, w2_ref,
                        b2_ref, ww_ref, bw_ref, o_ref):
    # Fallback (channels not sublane-aligned): two separate K=C_in matmuls.
    h = jnp.dot(w1_ref[...], x1_ref[...], preferred_element_type=jnp.float32)
    h = _gelu(h + b1_ref[...])
    y = jnp.dot(w2_ref[...], h.astype(w2_ref.dtype),
                preferred_element_type=jnp.float32) + b2_ref[...]
    y = y + jnp.dot(ww_ref[...], x_ref[...],
                    preferred_element_type=jnp.float32) + bw_ref[...]
    if final_gelu:
        y = _gelu(y)
    o_ref[...] = y.astype(o_ref.dtype)


# --------------------------------------------------------------------------
# Wrappers
# --------------------------------------------------------------------------

def pointwise_mlp(x, w1, b1, w2, b2, *, final_act="none", act_dtype=None):
    """Fused per-pixel 2-layer MLP (Linear->GELU->Linear[->sigmoid]).

    x : (G, C_in, M) channel-major; G is any leading group axis, M on lanes.
    w1: (C_mid, C_in)  b1: (C_mid,)  w2: (C_out, C_mid)  b2: (C_out,)
    Returns (G, C_out, M) in act_dtype.
    """
    G, C_in, M = x.shape
    C_mid, C_out = w1.shape[0], w2.shape[0]
    if act_dtype is None:
        act_dtype = x.dtype
    bpe = jnp.dtype(act_dtype).itemsize
    # per-lane bytes: double-buffered in/out tiles + f32 kernel intermediates
    bpl = 2 * bpe * (C_in + C_out) + 4 * (C_mid + C_out)
    Mp, tl = _choose_lane_tile(M, bpl, G)

    x = x.astype(act_dtype)
    if Mp != M:
        # TODO(synk): only triggers when H*W is not a multiple of 128 (never
        # for power-of-two FNO grids); a masked ragged-tile store would avoid
        # this extra HBM pass.
        x = jnp.pad(x, ((0, 0), (0, 0), (0, Mp - M)))
    w1 = w1.astype(act_dtype)
    w2 = w2.astype(act_dtype)
    b1 = b1.astype(jnp.float32).reshape(C_mid, 1)
    b2 = b2.astype(jnp.float32).reshape(C_out, 1)

    cost = pl.CostEstimate(
        flops=2 * G * Mp * (C_in * C_mid + C_mid * C_out),
        transcendentals=G * Mp * (C_mid + (C_out if final_act == "sigmoid" else 0)),
        bytes_accessed=bpe * G * Mp * (C_in + C_out)
        + bpe * (C_in * C_mid + C_mid * C_out) + 4 * (C_mid + C_out),
    )
    out = pl.pallas_call(
        functools.partial(_mlp_kernel, final_act),
        out_shape=jax.ShapeDtypeStruct((G, C_out, Mp), act_dtype),
        grid_spec=pltpu.PrefetchScalarGridSpec(
            num_scalar_prefetch=0,
            grid=(G, Mp // tl),
            in_specs=[
                pl.BlockSpec((None, C_in, tl), lambda g, j: (g, 0, j)),  # x tile
                # Weights/biases: constant index_map -> DMA'd once, resident.
                pl.BlockSpec((C_mid, C_in), lambda g, j: (0, 0)),
                pl.BlockSpec((C_mid, 1), lambda g, j: (0, 0)),
                pl.BlockSpec((C_out, C_mid), lambda g, j: (0, 0)),
                pl.BlockSpec((C_out, 1), lambda g, j: (0, 0)),
            ],
            out_specs=pl.BlockSpec((None, C_out, tl), lambda g, j: (g, 0, j)),
        ),
        compiler_params=pltpu.CompilerParams(
            dimension_semantics=("parallel", "parallel"),
            vmem_limit_bytes=VMEM_LIMIT_BYTES),
        cost_estimate=cost,
    )(x, w1, b1, w2, b2)
    return out[:, :, :M] if Mp != M else out


def neural_operator_pointwise(x1, x, w1, b1, w2, b2, ww, bw, *, final_gelu,
                              act_dtype=None):
    """Fused NeuralOperator pointwise path: ConvMLP(x1) + (ww@x + bw) [+ GELU].

    x1, x: (B, C_in, M) channel-major (x1 = spectral-conv output, x = block input).
    """
    B, C_in, M = x.shape
    C_mid, C_out = w1.shape[0], w2.shape[0]
    if act_dtype is None:
        act_dtype = x.dtype
    bpe = jnp.dtype(act_dtype).itemsize
    bpl = (2 * bpe * (2 * C_in + C_out)      # double-buffered x1/x/out tiles
           + bpe * 2 * C_in                  # xcat scratch
           + 4 * (C_mid + 2 * C_out))        # f32 intermediates
    Mp, tl = _choose_lane_tile(M, bpl, B)

    x1 = x1.astype(act_dtype)
    x = x.astype(act_dtype)
    if Mp != M:
        x1 = jnp.pad(x1, ((0, 0), (0, 0), (0, Mp - M)))
        x = jnp.pad(x, ((0, 0), (0, 0), (0, Mp - M)))
    w1 = w1.astype(act_dtype)
    w2 = w2.astype(act_dtype)
    ww = ww.astype(act_dtype)
    b1f = b1.astype(jnp.float32)
    bwf = bw.astype(jnp.float32)
    b2f = b2.astype(jnp.float32).reshape(C_out, 1)

    cost = pl.CostEstimate(
        flops=2 * B * Mp * (C_in * C_mid + C_mid * C_out + C_in * C_out),
        transcendentals=B * Mp * (C_mid + (C_out if final_gelu else 0)),
        bytes_accessed=bpe * B * Mp * (2 * C_in + C_out)
        + bpe * (C_in * C_mid + C_mid * C_out + C_in * C_out)
        + 4 * (C_mid + 2 * C_out),
    )
    common = dict(
        out_shape=jax.ShapeDtypeStruct((B, C_out, Mp), act_dtype),
        compiler_params=pltpu.CompilerParams(
            dimension_semantics=("parallel", "parallel"),
            vmem_limit_bytes=VMEM_LIMIT_BYTES),
        cost_estimate=cost,
    )

    sub = 16 if bpe == 2 else 8
    if C_in % sub == 0:
        # Merge the two K=C_in matmuls into one K=2*C_in MXU pass.
        wcat = jnp.concatenate(
            [jnp.concatenate([w1, jnp.zeros((C_mid, C_in), act_dtype)], axis=1),
             jnp.concatenate([jnp.zeros((C_out, C_in), act_dtype), ww], axis=1)],
            axis=0)                                           # (C_mid+C_out, 2*C_in)
        bcat = jnp.concatenate([b1f, bwf]).reshape(C_mid + C_out, 1)
        out = pl.pallas_call(
            functools.partial(_block_kernel_merged, C_mid, final_gelu),
            grid_spec=pltpu.PrefetchScalarGridSpec(
                num_scalar_prefetch=0,
                grid=(B, Mp // tl),
                in_specs=[
                    pl.BlockSpec((None, C_in, tl), lambda b, j: (b, 0, j)),  # x1
                    pl.BlockSpec((None, C_in, tl), lambda b, j: (b, 0, j)),  # x
                    pl.BlockSpec((C_mid + C_out, 2 * C_in), lambda b, j: (0, 0)),
                    pl.BlockSpec((C_mid + C_out, 1), lambda b, j: (0, 0)),
                    pl.BlockSpec((C_out, C_mid), lambda b, j: (0, 0)),
                    pl.BlockSpec((C_out, 1), lambda b, j: (0, 0)),
                ],
                out_specs=pl.BlockSpec((None, C_out, tl), lambda b, j: (b, 0, j)),
                scratch_shapes=[pltpu.VMEM((2 * C_in, tl), act_dtype)],
            ),
            **common,
        )(x1, x, wcat, bcat, w2, b2f)
    else:
        out = pl.pallas_call(
            functools.partial(_block_kernel_split, final_gelu),
            grid_spec=pltpu.PrefetchScalarGridSpec(
                num_scalar_prefetch=0,
                grid=(B, Mp // tl),
                in_specs=[
                    pl.BlockSpec((None, C_in, tl), lambda b, j: (b, 0, j)),
                    pl.BlockSpec((None, C_in, tl), lambda b, j: (b, 0, j)),
                    pl.BlockSpec((C_mid, C_in), lambda b, j: (0, 0)),
                    pl.BlockSpec((C_mid, 1), lambda b, j: (0, 0)),
                    pl.BlockSpec((C_out, C_mid), lambda b, j: (0, 0)),
                    pl.BlockSpec((C_out, 1), lambda b, j: (0, 0)),
                    pl.BlockSpec((C_out, C_in), lambda b, j: (0, 0)),
                    pl.BlockSpec((C_out, 1), lambda b, j: (0, 0)),
                ],
                out_specs=pl.BlockSpec((None, C_out, tl), lambda b, j: (b, 0, j)),
            ),
            **common,
        )(x1, x, w1, b1f.reshape(C_mid, 1), w2, b2f, ww, bwf.reshape(C_out, 1))
    return out[:, :, :M] if Mp != M else out


def spectral_conv2d(x, w1_re, w1_im, w2_re, w2_im, modes1, modes2):
    """SpectralConv2d forward (plain JAX).
    # TODO(synk): rfft2/irfft2 and complex dtypes have no Pallas TPU
    # equivalent (no FFT primitive in Mosaic); the FFTs stay in XLA.
    x: (B, C_in, H, W) real.  w*: (C_in, C_out, modes1, modes2) real/imag parts.
    """
    B, Cin, H, W = x.shape
    Cout = w1_re.shape[1]
    Wf = W // 2 + 1
    x_ft = jnp.fft.rfft2(x.astype(jnp.float32))              # (B,Cin,H,Wf) c64

    # Stack top/bottom retained mode bands and mix with one batched real-GEMM
    # set (complex product split into 4 real einsums).
    xm = jnp.concatenate([x_ft[:, :, :modes1, :modes2],
                          x_ft[:, :, H - modes1:, :modes2]], axis=2)
    wr = jnp.concatenate([w1_re, w2_re], axis=2)
    wi = jnp.concatenate([w1_im, w2_im], axis=2)
    xr, xi = jnp.real(xm), jnp.imag(xm)
    o_re = (jnp.einsum('bixy,ioxy->boxy', xr, wr)
            - jnp.einsum('bixy,ioxy->boxy', xi, wi))
    o_im = (jnp.einsum('bixy,ioxy->boxy', xr, wi)
            + jnp.einsum('bixy,ioxy->boxy', xi, wr))
    om = jax.lax.complex(o_re, o_im)                         # (B,Cout,2*m1,m2)

    if 2 * modes1 <= H:
        # Build the full spectrum by concatenating zero bands (no full-spectrum
        # dynamic-update-slice scatters).
        zc = jnp.zeros((B, Cout, modes1, Wf - modes2), om.dtype)
        top = jnp.concatenate([om[:, :, :modes1], zc], axis=3)
        bot = jnp.concatenate([om[:, :, modes1:], zc], axis=3)
        mid = jnp.zeros((B, Cout, H - 2 * modes1, Wf), om.dtype)
        out_ft = jnp.concatenate([top, mid, bot], axis=2)
    else:  # degenerate overlap case: keep torch's overwrite-last semantics
        out_ft = jnp.zeros((B, Cout, H, Wf), om.dtype)
        out_ft = out_ft.at[:, :, :modes1, :modes2].set(om[:, :, :modes1])
        out_ft = out_ft.at[:, :, H - modes1:, :modes2].set(om[:, :, modes1:])
    return jnp.fft.irfft2(out_ft, s=(H, W))


# --------------------------------------------------------------------------
# Full FNO2d forward
# --------------------------------------------------------------------------

def fno2d_forward(params, x, grid, cfg, act_dtype=jnp.float32):
    # act_dtype=jnp.bfloat16 halves HBM traffic of the pointwise kernels on
    # v6e/v7x; f32 is kept around the XLA FFTs.  DROP_RATE is unused in the
    # torch forward as well.
    B, H, W, _ = x.shape
    latent = cfg['LATENT_DIMS']
    steps_out = cfg['TIME_STEPS_OUT']
    m1, m2 = cfg['MODES1'], cfg['MODES2']
    M = H * W

    xin = jnp.concatenate([x, grid], axis=-1)                  # (B,H,W,in_dims)
    # Single layout change to channel-major (B,C,M); the per-pixel project MLP
    # commutes with this permute, so it replaces torch's post-project permute.
    xin = jnp.transpose(xin, (0, 3, 1, 2)).reshape(B, -1, M)

    z = pointwise_mlp(xin, params['proj_w1'], params['proj_b1'],
                      params['proj_w2'], params['proj_b2'],
                      act_dtype=act_dtype)                     # (B, latent, M)

    lat_steps = []
    for _ in range(steps_out):
        for blk in params['blocks']:
            x1 = spectral_conv2d(z.reshape(B, latent, H, W),
                                 blk['sc_w1_re'], blk['sc_w1_im'],
                                 blk['sc_w2_re'], blk['sc_w2_im'], m1, m2)
            z = neural_operator_pointwise(
                x1.reshape(B, latent, M), z,
                blk['mlp_w1'], blk['mlp_b1'], blk['mlp_w2'], blk['mlp_b2'],
                blk['w_w'], blk['w_b'],
                final_gelu=(blk['act'] == 'gelu'), act_dtype=act_dtype)
        lat_steps.append(z)

    lat = jnp.stack(lat_steps, axis=0).reshape(steps_out * B, latent, M)
    dec = pointwise_mlp(lat, params['dec_w1'], params['dec_b1'],
                        params['dec_w2'], params['dec_b2'],
                        final_act='sigmoid', act_dtype=act_dtype)  # (T*B,1,M)
    dec = dec.reshape(steps_out, B, H, W)
    return jnp.transpose(dec, (1, 2, 3, 0))                    # (B,H,W,steps_out)


# --------------------------------------------------------------------------
# Pure-JAX reference (same math, jnp.einsum instead of Pallas kernels)
# --------------------------------------------------------------------------

def _ref_mlp(x_cm, w1, b1, w2, b2, final_act='none'):
    hp = jax.lax.Precision.HIGHEST
    h = jnp.einsum('oc,...cm->...om', w1, x_cm, precision=hp) + b1[:, None]
    h = _gelu(h)
    y = jnp.einsum('oc,...cm->...om', w2, h, precision=hp) + b2[:, None]
    if final_act == 'sigmoid':
        y = jax.nn.sigmoid(y)
    return y


def fno2d_reference(params, x, grid, cfg):
    hp = jax.lax.Precision.HIGHEST
    B, H, W, _ = x.shape
    latent = cfg['LATENT_DIMS']
    steps_out = cfg['TIME_STEPS_OUT']
    m1, m2 = cfg['MODES1'], cfg['MODES2']
    M = H * W
    xin = jnp.concatenate([x, grid], axis=-1)
    xin = jnp.transpose(xin, (0, 3, 1, 2)).reshape(B, -1, M)
    z = _ref_mlp(xin, params['proj_w1'], params['proj_b1'],
                 params['proj_w2'], params['proj_b2'])
    lat_steps = []
    for _ in range(steps_out):
        for blk in params['blocks']:
            x1 = spectral_conv2d(z.reshape(B, latent, H, W),
                                 blk['sc_w1_re'], blk['sc_w1_im'],
                                 blk['sc_w2_re'], blk['sc_w2_im'], m1, m2)
            y1 = _ref_mlp(x1.reshape(B, latent, M),
                          blk['mlp_w1'], blk['mlp_b1'],
                          blk['mlp_w2'], blk['mlp_b2'])
            y2 = jnp.einsum('oc,bcm->bom', blk['w_w'], z,
                            precision=hp) + blk['w_b'][:, None]
            z = y1 + y2
            if blk['act'] == 'gelu':
                z = _gelu(z)
        lat_steps.append(z)
    lat = jnp.stack(lat_steps, axis=0).reshape(steps_out * B, latent, M)
    dec = _ref_mlp(lat, params['dec_w1'], params['dec_b1'],
                   params['dec_w2'], params['dec_b2'], final_act='sigmoid')
    return jnp.transpose(dec.reshape(steps_out, B, H, W), (1, 2, 3, 0))


# --------------------------------------------------------------------------
# Parameter init + demo
# --------------------------------------------------------------------------

def init_params(key, cfg):
    latent = cfg['LATENT_DIMS']
    mid = latent * cfg['MLP_RATIO']
    in_dims = cfg['TIME_STEPS_IN'] + 2
    m1, m2 = cfg['MODES1'], cfg['MODES2']
    depth = cfg['DEPTH']
    keys = jax.random.split(key, 4 + depth)

    def lin(k, c_out, c_in, scale=0.1):
        kw, kb = jax.random.split(k)
        return (scale * jax.random.normal(kw, (c_out, c_in), jnp.float32),
                scale * jax.random.normal(kb, (c_out,), jnp.float32))

    p = {}
    p['proj_w1'], p['proj_b1'] = lin(keys[0], mid, in_dims)
    p['proj_w2'], p['proj_b2'] = lin(keys[1], latent, mid)
    p['dec_w1'], p['dec_b1'] = lin(keys[2], mid, latent)
    p['dec_w2'], p['dec_b2'] = lin(keys[3], 1, mid)

    sc_scale = 1.0 / (latent * latent)
    blocks = []
    for d in range(depth):
        bk = jax.random.split(keys[4 + d], 7)
        blk = {
            'sc_w1_re': sc_scale * jax.random.uniform(bk[0], (latent, latent, m1, m2), jnp.float32),
            'sc_w1_im': sc_scale * jax.random.uniform(bk[1], (latent, latent, m1, m2), jnp.float32),
            'sc_w2_re': sc_scale * jax.random.uniform(bk[2], (latent, latent, m1, m2), jnp.float32),
            'sc_w2_im': sc_scale * jax.random.uniform(bk[3], (latent, latent, m1, m2), jnp.float32),
        }
        blk['mlp_w1'], blk['mlp_b1'] = lin(bk[4], latent, latent)
        blk['mlp_w2'], blk['mlp_b2'] = lin(bk[5], latent, latent)
        blk['w_w'], blk['w_b'] = lin(bk[6], latent, latent)
        blk['act'] = 'gelu' if d < depth - 1 else 'none'
        blocks.append(blk)
    p['blocks'] = blocks
    return p


if __name__ == "__main__":
    cfg = dict(LATENT_DIMS=16, TIME_STEPS_IN=4, TIME_STEPS_OUT=2,
               MLP_RATIO=2, DEPTH=2, MODES1=4, MODES2=4, DROP_RATE=0.0)
    B, H, W = 2, 16, 16

    key = jax.random.PRNGKey(0)
    kp, kx = jax.random.split(key)
    params = init_params(kp, cfg)

    x = jax.random.normal(kx, (B, H, W, cfg['TIME_STEPS_IN']), dtype=jnp.float32)
    gy, gx = jnp.meshgrid(jnp.linspace(0.0, 1.0, H), jnp.linspace(0.0, 1.0, W),
                          indexing='ij')
    grid = jnp.broadcast_to(jnp.stack([gy, gx], axis=-1),
                            (B, H, W, 2)).astype(jnp.float32)

    # f32 path: tight check against the pure-JAX reference.
    fwd = jax.jit(lambda xx, gg: fno2d_forward(params, xx, gg, cfg))
    out = jax.block_until_ready(fwd(x, grid))
    ref = jax.block_until_ready(fno2d_reference(params, x, grid, cfg))

    assert out.shape == (B, H, W, cfg['TIME_STEPS_OUT']), out.shape
    assert bool(jnp.all(jnp.isfinite(out)))
    assert jnp.allclose(out, ref, atol=5e-4, rtol=5e-4), \
        float(jnp.max(jnp.abs(out - ref)))

    # bf16 activation path (recommended storage dtype on v6e/v7x): smoke test.
    fwd_bf16 = jax.jit(lambda xx, gg: fno2d_forward(params, xx, gg, cfg,
                                                    act_dtype=jnp.bfloat16))
    out_bf16 = jax.block_until_ready(fwd_bf16(x, grid))
    assert out_bf16.shape == out.shape
    assert bool(jnp.all(jnp.isfinite(out_bf16.astype(jnp.float32))))

    print("KERNEL_OK")
</pallas_src>

<mosaic_0001>
module attributes {stable_mosaic.version = 11 : i64} {
  func.func @_mlp_kernel(%arg0: i32, %arg1: i32, %arg2: memref<1x6x256xf32, #tpu.memory_space<vmem>>, %arg3: memref<32x6xf32, #tpu.memory_space<vmem>>, %arg4: memref<32x1xf32, #tpu.memory_space<vmem>>, %arg5: memref<16x32xf32, #tpu.memory_space<vmem>>, %arg6: memref<16x1xf32, #tpu.memory_space<vmem>>, %arg7: memref<1x16x256xf32, #tpu.memory_space<vmem>>) attributes {dimension_semantics = [#tpu.dimension_semantics<parallel>, #tpu.dimension_semantics<parallel>], iteration_bounds = array<i64: 2, 1>, scalar_prefetch = 0 : i64, scratch_operands = 0 : i64, tpu.core_type = #tpu.core_type<tc>, window_params = [{transform_indices = @transform_0, window_bounds = array<i64: 1, 6, 256>}, {pipeline_mode = #tpu.pipeline_mode<synchronous>, transform_indices = @transform_1, window_bounds = array<i64: 32, 6>}, {pipeline_mode = #tpu.pipeline_mode<synchronous>, transform_indices = @transform_2, window_bounds = array<i64: 32, 1>}, {pipeline_mode = #tpu.pipeline_mode<synchronous>, transform_indices = @transform_3, window_bounds = array<i64: 16, 32>}, {pipeline_mode = #tpu.pipeline_mode<synchronous>, transform_indices = @transform_4, window_bounds = array<i64: 16, 1>}, {transform_indices = @transform_5, window_bounds = array<i64: 1, 16, 256>}]} {
    %c0 = arith.constant 0 : index
    %c0_0 = arith.constant 0 : index
    %0 = vector.load %arg3[%c0, %c0_0] : memref<32x6xf32, #tpu.memory_space<vmem>>, vector<32x6xf32>
    %c0_1 = arith.constant 0 : index
    %c0_2 = arith.constant 0 : index
    %c0_3 = arith.constant 0 : index
    %1 = vector.load %arg2[%c0_1, %c0_2, %c0_3] : memref<1x6x256xf32, #tpu.memory_space<vmem>>, vector<1x6x256xf32>
    %2 = vector.shape_cast %1 : vector<1x6x256xf32> to vector<6x256xf32>
    %cst = arith.constant dense<0.000000e+00> : vector<32x256xf32>
    %3 = tpu.matmul %0, %2, %cst {dimension_numbers = #tpu.dot_dimension_numbers<[1], [0], [0], [1], [0, 0, 1, 1], [], []>} : vector<32x6xf32>, vector<6x256xf32>, vector<32x256xf32> -> vector<32x256xf32>
    %c0_4 = arith.constant 0 : index
    %c0_5 = arith.constant 0 : index
    %4 = vector.load %arg4[%c0_4, %c0_5] : memref<32x1xf32, #tpu.memory_space<vmem>>, vector<32x1xf32>
    %5 = vector.broadcast %4 : vector<32x1xf32> to vector<32x256xf32>
    %6 = arith.addf %3, %5 : vector<32x256xf32>
    %7 = arith.mulf %6, %6 : vector<32x256xf32>
    %8 = arith.mulf %6, %7 : vector<32x256xf32>
    %cst_6 = arith.constant 4.471500e-02 : f32
    %9 = vector.broadcast %cst_6 : f32 to vector<32x256xf32>
    %10 = arith.mulf %9, %8 : vector<32x256xf32>
    %11 = arith.addf %6, %10 : vector<32x256xf32>
    %cst_7 = arith.constant 0.797884583 : f32
    %12 = vector.broadcast %cst_7 : f32 to vector<32x256xf32>
    %13 = arith.mulf %12, %11 : vector<32x256xf32>
    %14 = math.tanh %13 : vector<32x256xf32>
    %cst_8 = arith.constant 1.000000e+00 : f32
    %15 = vector.broadcast %cst_8 : f32 to vector<32x256xf32>
    %16 = arith.addf %15, %14 : vector<32x256xf32>
    %cst_9 = arith.constant 5.000000e-01 : f32
    %17 = vector.broadcast %cst_9 : f32 to vector<32x256xf32>
    %18 = arith.mulf %17, %16 : vector<32x256xf32>
    %19 = arith.mulf %6, %18 : vector<32x256xf32>
    %c0_10 = arith.constant 0 : index
    %c0_11 = arith.constant 0 : index
    %20 = vector.load %arg5[%c0_10, %c0_11] : memref<16x32xf32, #tpu.memory_space<vmem>>, vector<16x32xf32>
    %cst_12 = arith.constant dense<0.000000e+00> : vector<16x256xf32>
    %21 = tpu.matmul %20, %19, %cst_12 {dimension_numbers = #tpu.dot_dimension_numbers<[1], [0], [0], [1], [0, 0, 1, 1], [], []>} : vector<16x32xf32>, vector<32x256xf32>, vector<16x256xf32> -> vector<16x256xf32>
    %c0_13 = arith.constant 0 : index
    %c0_14 = arith.constant 0 : index
    %22 = vector.load %arg6[%c0_13, %c0_14] : memref<16x1xf32, #tpu.memory_space<vmem>>, vector<16x1xf32>
    %23 = vector.broadcast %22 : vector<16x1xf32> to vector<16x256xf32>
    %24 = arith.addf %21, %23 : vector<16x256xf32>
    %c0_15 = arith.constant 0 : index
    %c0_16 = arith.constant 0 : index
    %c0_17 = arith.constant 0 : index
    %25 = vector.load %arg7[%c0_15, %c0_16, %c0_17] : memref<1x16x256xf32, #tpu.memory_space<vmem>>, vector<1x16x256xf32>
    %26 = vector.shape_cast %25 : vector<1x16x256xf32> to vector<16x256xf32>
    %27 = vector.shape_cast %24 : vector<16x256xf32> to vector<1x16x256xf32>
    tpu.vector_store %arg7[%c0_15, %c0_16, %c0_17], %27 {strides = array<i32>} : memref<1x16x256xf32, #tpu.memory_space<vmem>>, vector<1x16x256xf32>,
    return
  }
  func.func @transform_0(%arg0: i32, %arg1: i32) -> (i32, i32, i32) {
    %c0_i32 = arith.constant 0 : i32
    %c0_i32_0 = arith.constant 0 : i32
    return %arg0, %c0_i32, %arg1 : i32, i32, i32
  }
  func.func @transform_1(%arg0: i32, %arg1: i32) -> (i32, i32) {
    %c0_i32 = arith.constant 0 : i32
    %c0_i32_0 = arith.constant 0 : i32
    %c0_i32_1 = arith.constant 0 : i32
    return %c0_i32, %c0_i32_0 : i32, i32
  }
  func.func @transform_2(%arg0: i32, %arg1: i32) -> (i32, i32) {
    %c0_i32 = arith.constant 0 : i32
    %c0_i32_0 = arith.constant 0 : i32
    %c0_i32_1 = arith.constant 0 : i32
    return %c0_i32, %c0_i32_0 : i32, i32
  }
  func.func @transform_3(%arg0: i32, %arg1: i32) -> (i32, i32) {
    %c0_i32 = arith.constant 0 : i32
    %c0_i32_0 = arith.constant 0 : i32
    %c0_i32_1 = arith.constant 0 : i32
    return %c0_i32, %c0_i32_0 : i32, i32
  }
  func.func @transform_4(%arg0: i32, %arg1: i32) -> (i32, i32) {
    %c0_i32 = arith.constant 0 : i32
    %c0_i32_0 = arith.constant 0 : i32
    %c0_i32_1 = arith.constant 0 : i32
    return %c0_i32, %c0_i32_0 : i32, i32
  }
  func.func @transform_5(%arg0: i32, %arg1: i32) -> (i32, i32, i32) {
    %c0_i32 = arith.constant 0 : i32
    %c0_i32_0 = arith.constant 0 : i32
    return %arg0, %c0_i32, %arg1 : i32, i32, i32
  }
}

module attributes {stable_mosaic.version = 11 : i64} {
  func.func @_block_kernel_merged(%arg0: i32, %arg1: i32, %arg2: memref<1x16x256xf32, #tpu.memory_space<vmem>>, %arg3: memref<1x16x256xf32, #tpu.memory_space<vmem>>, %arg4: memref<32x32xf32, #tpu.memory_space<vmem>>, %arg5: memref<32x1xf32, #tpu.memory_space<vmem>>, %arg6: memref<16x16xf32, #tpu.memory_space<vmem>>, %arg7: memref<16x1xf32, #tpu.memory_space<vmem>>, %arg8: memref<1x16x256xf32, #tpu.memory_space<vmem>>, %arg9: memref<32x256xf32, #tpu.memory_space<vmem>>) attributes {dimension_semantics = [#tpu.dimension_semantics<parallel>, #tpu.dimension_semantics<parallel>], iteration_bounds = array<i64: 2, 1>, scalar_prefetch = 0 : i64, scratch_operands = 1 : i64, tpu.core_type = #tpu.core_type<tc>, window_params = [{transform_indices = @transform_0, window_bounds = array<i64: 1, 16, 256>}, {transform_indices = @transform_1, window_bounds = array<i64: 1, 16, 256>}, {pipeline_mode = #tpu.pipeline_mode<synchronous>, transform_indices = @transform_2, window_bounds = array<i64: 32, 32>}, {pipeline_mode = #tpu.pipeline_mode<synchronous>, transform_indices = @transform_3, window_bounds = array<i64: 32, 1>}, {pipeline_mode = #tpu.pipeline_mode<synchronous>, transform_indices = @transform_4, window_bounds = array<i64: 16, 16>}, {pipeline_mode = #tpu.pipeline_mode<synchronous>, transform_indices = @transform_5, window_bounds = array<i64: 16, 1>}, {transform_indices = @transform_6, window_bounds = array<i64: 1, 16, 256>}]} {
    %c0 = arith.constant 0 : index
    %c0_0 = arith.constant 0 : index
    %c0_1 = arith.constant 0 : index
    %0 = vector.load %arg2[%c0, %c0_0, %c0_1] : memref<1x16x256xf32, #tpu.memory_space<vmem>>, vector<1x16x256xf32>
    %1 = vector.shape_cast %0 : vector<1x16x256xf32> to vector<16x256xf32>
    %c0_2 = arith.constant 0 : index
    %c0_3 = arith.constant 0 : index
    %2 = vector.load %arg9[%c0_2, %c0_3] : memref<32x256xf32, #tpu.memory_space<vmem>>, vector<16x256xf32>
    tpu.vector_store %arg9[%c0_2, %c0_3], %1 {strides = array<i32>} : memref<32x256xf32, #tpu.memory_space<vmem>>, vector<16x256xf32>,
    %c0_4 = arith.constant 0 : index
    %c0_5 = arith.constant 0 : index
    %c0_6 = arith.constant 0 : index
    %3 = vector.load %arg3[%c0_4, %c0_5, %c0_6] : memref<1x16x256xf32, #tpu.memory_space<vmem>>, vector<1x16x256xf32>
    %4 = vector.shape_cast %3 : vector<1x16x256xf32> to vector<16x256xf32>
    %c16 = arith.constant 16 : index
    %c0_7 = arith.constant 0 : index
    %5 = vector.load %arg9[%c16, %c0_7] : memref<32x256xf32, #tpu.memory_space<vmem>>, vector<16x256xf32>
    tpu.vector_store %arg9[%c16, %c0_7], %4 {strides = array<i32>} : memref<32x256xf32, #tpu.memory_space<vmem>>, vector<16x256xf32>,
    %c0_8 = arith.constant 0 : index
    %c0_9 = arith.constant 0 : index
    %6 = vector.load %arg4[%c0_8, %c0_9] : memref<32x32xf32, #tpu.memory_space<vmem>>, vector<32x32xf32>
    %c0_10 = arith.constant 0 : index
    %c0_11 = arith.constant 0 : index
    %7 = vector.load %arg9[%c0_10, %c0_11] : memref<32x256xf32, #tpu.memory_space<vmem>>, vector<32x256xf32>
    %cst = arith.constant dense<0.000000e+00> : vector<32x256xf32>
    %8 = tpu.matmul %6, %7, %cst {dimension_numbers = #tpu.dot_dimension_numbers<[1], [0], [0], [1], [0, 0, 1, 1], [], []>} : vector<32x32xf32>, vector<32x256xf32>, vector<32x256xf32> -> vector<32x256xf32>
    %c0_12 = arith.constant 0 : index
    %c0_13 = arith.constant 0 : index
    %9 = vector.load %arg5[%c0_12, %c0_13] : memref<32x1xf32, #tpu.memory_space<vmem>>, vector<32x1xf32>
    %10 = vector.broadcast %9 : vector<32x1xf32> to vector<32x256xf32>
    %11 = arith.addf %8, %10 : vector<32x256xf32>
    %12 = vector.extract_strided_slice %11 {offsets = [0, 0], sizes = [16, 256], strides = [1, 1]} : vector<32x256xf32> to vector<16x256xf32>
    %13 = arith.mulf %12, %12 : vector<16x256xf32>
    %14 = arith.mulf %12, %13 : vector<16x256xf32>
    %cst_14 = arith.constant 4.471500e-02 : f32
    %15 = vector.broadcast %cst_14 : f32 to vector<16x256xf32>
    %16 = arith.mulf %15, %14 : vector<16x256xf32>
    %17 = arith.addf %12, %16 : vector<16x256xf32>
    %cst_15 = arith.constant 0.797884583 : f32
    %18 = vector.broadcast %cst_15 : f32 to vector<16x256xf32>
    %19 = arith.mulf %18, %17 : vector<16x256xf32>
    %20 = math.tanh %19 : vector<16x256xf32>
    %cst_16 = arith.constant 1.000000e+00 : f32
    %21 = vector.broadcast %cst_16 : f32 to vector<16x256xf32>
    %22 = arith.addf %21, %20 : vector<16x256xf32>
    %cst_17 = arith.constant 5.000000e-01 : f32
    %23 = vector.broadcast %cst_17 : f32 to vector<16x256xf32>
    %24 = arith.mulf %23, %22 : vector<16x256xf32>
    %25 = arith.mulf %12, %24 : vector<16x256xf32>
    %c0_18 = arith.constant 0 : index
    %c0_19 = arith.constant 0 : index
    %26 = vector.load %arg6[%c0_18, %c0_19] : memref<16x16xf32, #tpu.memory_space<vmem>>, vector<16x16xf32>
    %cst_20 = arith.constant dense<0.000000e+00> : vector<16x256xf32>
    %27 = tpu.matmul %26, %25, %cst_20 {dimension_numbers = #tpu.dot_dimension_numbers<[1], [0], [0], [1], [0, 0, 1, 1], [], []>} : vector<16x16xf32>, vector<16x256xf32>, vector<16x256xf32> -> vector<16x256xf32>
    %c0_21 = arith.constant 0 : index
    %c0_22 = arith.constant 0 : index
    %28 = vector.load %arg7[%c0_21, %c0_22] : memref<16x1xf32, #tpu.memory_space<vmem>>, vector<16x1xf32>
    %29 = vector.broadcast %28 : vector<16x1xf32> to vector<16x256xf32>
    %30 = arith.addf %27, %29 : vector<16x256xf32>
    %31 = vector.extract_strided_slice %11 {offsets = [16, 0], sizes = [16, 256], strides = [1, 1]} : vector<32x256xf32> to vector<16x256xf32>
    %32 = arith.addf %30, %31 : vector<16x256xf32>
    %33 = arith.mulf %32, %32 : vector<16x256xf32>
    %34 = arith.mulf %32, %33 : vector<16x256xf32>
    %cst_23 = arith.constant 4.471500e-02 : f32
    %35 = vector.broadcast %cst_23 : f32 to vector<16x256xf32>
    %36 = arith.mulf %35, %34 : vector<16x256xf32>
    %37 = arith.addf %32, %36 : vector<16x256xf32>
    %cst_24 = arith.constant 0.797884583 : f32
    %38 = vector.broadcast %cst_24 : f32 to vector<16x256xf32>
    %39 = arith.mulf %38, %37 : vector<16x256xf32>
    %40 = math.tanh %39 : vector<16x256xf32>
    %cst_25 = arith.constant 1.000000e+00 : f32
    %41 = vector.broadcast %cst_25 : f32 to vector<16x256xf32>
    %42 = arith.addf %41, %40 : vector<16x256xf32>
    %cst_26 = arith.constant 5.000000e-01 : f32
    %43 = vector.broadcast %cst_26 : f32 to vector<16x256xf32>
    %44 = arith.mulf %43, %42 : vector<16x256xf32>
    %45 = arith.mulf %32, %44 : vector<16x256xf32>
    %c0_27 = arith.constant 0 : index
    %c0_28 = arith.constant 0 : index
    %c0_29 = arith.constant 0 : index
    %46 = vector.load %arg8[%c0_27, %c0_28, %c0_29] : memref<1x16x256xf32, #tpu.memory_space<vmem>>, vector<1x16x256xf32>
    %47 = vector.shape_cast %46 : vector<1x16x256xf32> to vector<16x256xf32>
    %48 = vector.shape_cast %45 : vector<16x256xf32> to vector<1x16x256xf32>
    tpu.vector_store %arg8[%c0_27, %c0_28, %c0_29], %48 {strides = array<i32>} : memref<1x16x256xf32, #tpu.memory_space<vmem>>, vector<1x16x256xf32>,
    return
  }
  func.func @transform_0(%arg0: i32, %arg1: i32) -> (i32, i32, i32) {
    %c0_i32 = arith.constant 0 : i32
    %c0_i32_0 = arith.constant 0 : i32
    return %arg0, %c0_i32, %arg1 : i32, i32, i32
  }
  func.func @transform_1(%arg0: i32, %arg1: i32) -> (i32, i32, i32) {
    %c0_i32 = arith.constant 0 : i32
    %c0_i32_0 = arith.constant 0 : i32
    return %arg0, %c0_i32, %arg1 : i32, i32, i32
  }
  func.func @transform_2(%arg0: i32, %arg1: i32) -> (i32, i32) {
    %c0_i32 = arith.constant 0 : i32
    %c0_i32_0 = arith.constant 0 : i32
    %c0_i32_1 = arith.constant 0 : i32
    return %c0_i32, %c0_i32_0 : i32, i32
  }
  func.func @transform_3(%arg0: i32, %arg1: i32) -> (i32, i32) {
    %c0_i32 = arith.constant 0 : i32
    %c0_i32_0 = arith.constant 0 : i32
    %c0_i32_1 = arith.constant 0 : i32
    return %c0_i32, %c0_i32_0 : i32, i32
  }
  func.func @transform_4(%arg0: i32, %arg1: i32) -> (i32, i32) {
    %c0_i32 = arith.constant 0 : i32
    %c0_i32_0 = arith.constant 0 : i32
    %c0_i32_1 = arith.constant 0 : i32
    return %c0_i32, %c0_i32_0 : i32, i32
  }
  func.func @transform_5(%arg0: i32, %arg1: i32) -> (i32, i32) {
    %c0_i32 = arith.constant 0 : i32
    %c0_i32_0 = arith.constant 0 : i32
    %c0_i32_1 = arith.constant 0 : i32
    return %c0_i32, %c0_i32_0 : i32, i32
  }
  func.func @transform_6(%arg0: i32, %arg1: i32) -> (i32, i32, i32) {
    %c0_i32 = arith.constant 0 : i32
    %c0_i32_0 = arith.constant 0 : i32
    return %arg0, %c0_i32, %arg1 : i32, i32, i32
  }
}

module attributes {stable_mosaic.version = 11 : i64} {
  func.func @_block_kernel_merged(%arg0: i32, %arg1: i32, %arg2: memref<1x16x256xf32, #tpu.memory_space<vmem>>, %arg3: memref<1x16x256xf32, #tpu.memory_space<vmem>>, %arg4: memref<32x32xf32, #tpu.memory_space<vmem>>, %arg5: memref<32x1xf32, #tpu.memory_space<vmem>>, %arg6: memref<16x16xf32, #tpu.memory_space<vmem>>, %arg7: memref<16x1xf32, #tpu.memory_space<vmem>>, %arg8: memref<1x16x256xf32, #tpu.memory_space<vmem>>, %arg9: memref<32x256xf32, #tpu.memory_space<vmem>>) attributes {dimension_semantics = [#tpu.dimension_semantics<parallel>, #tpu.dimension_semantics<parallel>], iteration_bounds = array<i64: 2, 1>, scalar_prefetch = 0 : i64, scratch_operands = 1 : i64, tpu.core_type = #tpu.core_type<tc>, window_params = [{transform_indices = @transform_0, window_bounds = array<i64: 1, 16, 256>}, {transform_indices = @transform_1, window_bounds = array<i64: 1, 16, 256>}, {pipeline_mode = #tpu.pipeline_mode<synchronous>, transform_indices = @transform_2, window_bounds = array<i64: 32, 32>}, {pipeline_mode = #tpu.pipeline_mode<synchronous>, transform_indices = @transform_3, window_bounds = array<i64: 32, 1>}, {pipeline_mode = #tpu.pipeline_mode<synchronous>, transform_indices = @transform_4, window_bounds = array<i64: 16, 16>}, {pipeline_mode = #tpu.pipeline_mode<synchronous>, transform_indices = @transform_5, window_bounds = array<i64: 16, 1>}, {transform_indices = @transform_6, window_bounds = array<i64: 1, 16, 256>}]} {
    %c0 = arith.constant 0 : index
    %c0_0 = arith.constant 0 : index
    %c0_1 = arith.constant 0 : index
    %0 = vector.load %arg2[%c0, %c0_0, %c0_1] : memref<1x16x256xf32, #tpu.memory_space<vmem>>, vector<1x16x256xf32>
    %1 = vector.shape_cast %0 : vector<1x16x256xf32> to vector<16x256xf32>
    %c0_2 = arith.constant 0 : index
    %c0_3 = arith.constant 0 : index
    %2 = vector.load %arg9[%c0_2, %c0_3] : memref<32x256xf32, #tpu.memory_space<vmem>>, vector<16x256xf32>
    tpu.vector_store %arg9[%c0_2, %c0_3], %1 {strides = array<i32>} : memref<32x256xf32, #tpu.memory_space<vmem>>, vector<16x256xf32>,
    %c0_4 = arith.constant 0 : index
    %c0_5 = arith.constant 0 : index
    %c0_6 = arith.constant 0 : index
    %3 = vector.load %arg3[%c0_4, %c0_5, %c0_6] : memref<1x16x256xf32, #tpu.memory_space<vmem>>, vector<1x16x256xf32>
    %4 = vector.shape_cast %3 : vector<1x16x256xf32> to vector<16x256xf32>
    %c16 = arith.constant 16 : index
    %c0_7 = arith.constant 0 : index
    %5 = vector.load %arg9[%c16, %c0_7] : memref<32x256xf32, #tpu.memory_space<vmem>>, vector<16x256xf32>
    tpu.vector_store %arg9[%c16, %c0_7], %4 {strides = array<i32>} : memref<32x256xf32, #tpu.memory_space<vmem>>, vector<16x256xf32>,
    %c0_8 = arith.constant 0 : index
    %c0_9 = arith.constant 0 : index
    %6 = vector.load %arg4[%c0_8, %c0_9] : memref<32x32xf32, #tpu.memory_space<vmem>>, vector<32x32xf32>
    %c0_10 = arith.constant 0 : index
    %c0_11 = arith.constant 0 : index
    %7 = vector.load %arg9[%c0_10, %c0_11] : memref<32x256xf32, #tpu.memory_space<vmem>>, vector<32x256xf32>
    %cst = arith.constant dense<0.000000e+00> : vector<32x256xf32>
    %8 = tpu.matmul %6, %7, %cst {dimension_numbers = #tpu.dot_dimension_numbers<[1], [0], [0], [1], [0, 0, 1, 1], [], []>} : vector<32x32xf32>, vector<32x256xf32>, vector<32x256xf32> -> vector<32x256xf32>
    %c0_12 = arith.constant 0 : index
    %c0_13 = arith.constant 0 : index
    %9 = vector.load %arg5[%c0_12, %c0_13] : memref<32x1xf32, #tpu.memory_space<vmem>>, vector<32x1xf32>
    %10 = vector.broadcast %9 : vector<32x1xf32> to vector<32x256xf32>
    %11 = arith.addf %8, %10 : vector<32x256xf32>
    %12 = vector.extract_strided_slice %11 {offsets = [0, 0], sizes = [16, 256], strides = [1, 1]} : vector<32x256xf32> to vector<16x256xf32>
    %13 = arith.mulf %12, %12 : vector<16x256xf32>
    %14 = arith.mulf %12, %13 : vector<16x256xf32>
    %cst_14 = arith.constant 4.471500e-02 : f32
    %15 = vector.broadcast %cst_14 : f32 to vector<16x256xf32>
    %16 = arith.mulf %15, %14 : vector<16x256xf32>
    %17 = arith.addf %12, %16 : vector<16x256xf32>
    %cst_15 = arith.constant 0.797884583 : f32
    %18 = vector.broadcast %cst_15 : f32 to vector<16x256xf32>
    %19 = arith.mulf %18, %17 : vector<16x256xf32>
    %20 = math.tanh %19 : vector<16x256xf32>
    %cst_16 = arith.constant 1.000000e+00 : f32
    %21 = vector.broadcast %cst_16 : f32 to vector<16x256xf32>
    %22 = arith.addf %21, %20 : vector<16x256xf32>
    %cst_17 = arith.constant 5.000000e-01 : f32
    %23 = vector.broadcast %cst_17 : f32 to vector<16x256xf32>
    %24 = arith.mulf %23, %22 : vector<16x256xf32>
    %25 = arith.mulf %12, %24 : vector<16x256xf32>
    %c0_18 = arith.constant 0 : index
    %c0_19 = arith.constant 0 : index
    %26 = vector.load %arg6[%c0_18, %c0_19] : memref<16x16xf32, #tpu.memory_space<vmem>>, vector<16x16xf32>
    %cst_20 = arith.constant dense<0.000000e+00> : vector<16x256xf32>
    %27 = tpu.matmul %26, %25, %cst_20 {dimension_numbers = #tpu.dot_dimension_numbers<[1], [0], [0], [1], [0, 0, 1, 1], [], []>} : vector<16x16xf32>, vector<16x256xf32>, vector<16x256xf32> -> vector<16x256xf32>
    %c0_21 = arith.constant 0 : index
    %c0_22 = arith.constant 0 : index
    %28 = vector.load %arg7[%c0_21, %c0_22] : memref<16x1xf32, #tpu.memory_space<vmem>>, vector<16x1xf32>
    %29 = vector.broadcast %28 : vector<16x1xf32> to vector<16x256xf32>
    %30 = arith.addf %27, %29 : vector<16x256xf32>
    %31 = vector.extract_strided_slice %11 {offsets = [16, 0], sizes = [16, 256], strides = [1, 1]} : vector<32x256xf32> to vector<16x256xf32>
    %32 = arith.addf %30, %31 : vector<16x256xf32>
    %c0_23 = arith.constant 0 : index
    %c0_24 = arith.constant 0 : index
    %c0_25 = arith.constant 0 : index
    %33 = vector.load %arg8[%c0_23, %c0_24, %c0_25] : memref<1x16x256xf32, #tpu.memory_space<vmem>>, vector<1x16x256xf32>
    %34 = vector.shape_cast %33 : vector<1x16x256xf32> to vector<16x256xf32>
    %35 = vector.shape_cast %32 : vector<16x256xf32> to vector<1x16x256xf32>
    tpu.vector_store %arg8[%c0_23, %c0_24, %c0_25], %35 {strides = array<i32>} : memref<1x16x256xf32, #tpu.memory_space<vmem>>, vector<1x16x256xf32>,
    return
  }
  func.func @transform_0(%arg0: i32, %arg1: i32) -> (i32, i32, i32) {
    %c0_i32 = arith.constant 0 : i32
    %c0_i32_0 = arith.constant 0 : i32
    return %arg0, %c0_i32, %arg1 : i32, i32, i32
  }
  func.func @transform_1(%arg0: i32, %arg1: i32) -> (i32, i32, i32) {
    %c0_i32 = arith.constant 0 : i32
    %c0_i32_0 = arith.constant 0 : i32
    return %arg0, %c0_i32, %arg1 : i32, i32, i32
  }
  func.func @transform_2(%arg0: i32, %arg1: i32) -> (i32, i32) {
    %c0_i32 = arith.constant 0 : i32
    %c0_i32_0 = arith.constant 0 : i32
    %c0_i32_1 = arith.constant 0 : i32
    return %c0_i32, %c0_i32_0 : i32, i32
  }
  func.func @transform_3(%arg0: i32, %arg1: i32) -> (i32, i32) {
    %c0_i32 = arith.constant 0 : i32
    %c0_i32_0 = arith.constant 0 : i32
    %c0_i32_1 = arith.constant 0 : i32
    return %c0_i32, %c0_i32_0 : i32, i32
  }
  func.func @transform_4(%arg0: i32, %arg1: i32) -> (i32, i32) {
    %c0_i32 = arith.constant 0 : i32
    %c0_i32_0 = arith.constant 0 : i32
    %c0_i32_1 = arith.constant 0 : i32
    return %c0_i32, %c0_i32_0 : i32, i32
  }
  func.func @transform_5(%arg0: i32, %arg1: i32) -> (i32, i32) {
    %c0_i32 = arith.constant 0 : i32
    %c0_i32_0 = arith.constant 0 : i32
    %c0_i32_1 = arith.constant 0 : i32
    return %c0_i32, %c0_i32_0 : i32, i32
  }
  func.func @transform_6(%arg0: i32, %arg1: i32) -> (i32, i32, i32) {
    %c0_i32 = arith.constant 0 : i32
    %c0_i32_0 = arith.constant 0 : i32
    return %arg0, %c0_i32, %arg1 : i32, i32, i32
  }
}

module attributes {stable_mosaic.version = 11 : i64} {
  func.func @_mlp_kernel(%arg0: i32, %arg1: i32, %arg2: memref<1x16x256xf32, #tpu.memory_space<vmem>>, %arg3: memref<32x16xf32, #tpu.memory_space<vmem>>, %arg4: memref<32x1xf32, #tpu.memory_space<vmem>>, %arg5: memref<1x32xf32, #tpu.memory_space<vmem>>, %arg6: memref<1x1xf32, #tpu.memory_space<vmem>>, %arg7: memref<1x1x256xf32, #tpu.memory_space<vmem>>) attributes {dimension_semantics = [#tpu.dimension_semantics<parallel>, #tpu.dimension_semantics<parallel>], iteration_bounds = array<i64: 4, 1>, scalar_prefetch = 0 : i64, scratch_operands = 0 : i64, tpu.core_type = #tpu.core_type<tc>, window_params = [{transform_indices = @transform_0, window_bounds = array<i64: 1, 16, 256>}, {pipeline_mode = #tpu.pipeline_mode<synchronous>, transform_indices = @transform_1, window_bounds = array<i64: 32, 16>}, {pipeline_mode = #tpu.pipeline_mode<synchronous>, transform_indices = @transform_2, window_bounds = array<i64: 32, 1>}, {pipeline_mode = #tpu.pipeline_mode<synchronous>, transform_indices = @transform_3, window_bounds = array<i64: 1, 32>}, {pipeline_mode = #tpu.pipeline_mode<synchronous>, transform_indices = @transform_4, window_bounds = array<i64: 1, 1>}, {transform_indices = @transform_5, window_bounds = array<i64: 1, 1, 256>}]} {
    %c0 = arith.constant 0 : index
    %c0_0 = arith.constant 0 : index
    %0 = vector.load %arg3[%c0, %c0_0] : memref<32x16xf32, #tpu.memory_space<vmem>>, vector<32x16xf32>
    %c0_1 = arith.constant 0 : index
    %c0_2 = arith.constant 0 : index
    %c0_3 = arith.constant 0 : index
    %1 = vector.load %arg2[%c0_1, %c0_2, %c0_3] : memref<1x16x256xf32, #tpu.memory_space<vmem>>, vector<1x16x256xf32>
    %2 = vector.shape_cast %1 : vector<1x16x256xf32> to vector<16x256xf32>
    %cst = arith.constant dense<0.000000e+00> : vector<32x256xf32>
    %3 = tpu.matmul %0, %2, %cst {dimension_numbers = #tpu.dot_dimension_numbers<[1], [0], [0], [1], [0, 0, 1, 1], [], []>} : vector<32x16xf32>, vector<16x256xf32>, vector<32x256xf32> -> vector<32x256xf32>
    %c0_4 = arith.constant 0 : index
    %c0_5 = arith.constant 0 : index
    %4 = vector.load %arg4[%c0_4, %c0_5] : memref<32x1xf32, #tpu.memory_space<vmem>>, vector<32x1xf32>
    %5 = vector.broadcast %4 : vector<32x1xf32> to vector<32x256xf32>
    %6 = arith.addf %3, %5 : vector<32x256xf32>
    %7 = arith.mulf %6, %6 : vector<32x256xf32>
    %8 = arith.mulf %6, %7 : vector<32x256xf32>
    %cst_6 = arith.constant 4.471500e-02 : f32
    %9 = vector.broadcast %cst_6 : f32 to vector<32x256xf32>
    %10 = arith.mulf %9, %8 : vector<32x256xf32>
    %11 = arith.addf %6, %10 : vector<32x256xf32>
    %cst_7 = arith.constant 0.797884583 : f32
    %12 = vector.broadcast %cst_7 : f32 to vector<32x256xf32>
    %13 = arith.mulf %12, %11 : vector<32x256xf32>
    %14 = math.tanh %13 : vector<32x256xf32>
    %cst_8 = arith.constant 1.000000e+00 : f32
    %15 = vector.broadcast %cst_8 : f32 to vector<32x256xf32>
    %16 = arith.addf %15, %14 : vector<32x256xf32>
    %cst_9 = arith.constant 5.000000e-01 : f32
    %17 = vector.broadcast %cst_9 : f32 to vector<32x256xf32>
    %18 = arith.mulf %17, %16 : vector<32x256xf32>
    %19 = arith.mulf %6, %18 : vector<32x256xf32>
    %c0_10 = arith.constant 0 : index
    %c0_11 = arith.constant 0 : index
    %20 = vector.load %arg5[%c0_10, %c0_11] : memref<1x32xf32, #tpu.memory_space<vmem>>, vector<1x32xf32>
    %cst_12 = arith.constant dense<0.000000e+00> : vector<1x256xf32>
    %21 = tpu.matmul %20, %19, %cst_12 {dimension_numbers = #tpu.dot_dimension_numbers<[1], [0], [0], [1], [0, 0, 1, 1], [], []>} : vector<1x32xf32>, vector<32x256xf32>, vector<1x256xf32> -> vector<1x256xf32>
    %c0_13 = arith.constant 0 : index
    %c0_14 = arith.constant 0 : index
    %22 = vector.load %arg6[%c0_13, %c0_14] : memref<1x1xf32, #tpu.memory_space<vmem>>, vector<1x1xf32>
    %23 = vector.broadcast %22 : vector<1x1xf32> to vector<1x256xf32>
    %24 = arith.addf %21, %23 : vector<1x256xf32>
    %25 = arith.negf %24 : vector<1x256xf32>
    %26 = math.exp %25 : vector<1x256xf32>
    %cst_15 = arith.constant 1.000000e+00 : f32
    %27 = vector.broadcast %cst_15 : f32 to vector<1x256xf32>
    %28 = arith.addf %27, %26 : vector<1x256xf32>
    %29 = arith.divf %27, %28 : vector<1x256xf32>
    %c0_16 = arith.constant 0 : index
    %c0_17 = arith.constant 0 : index
    %c0_18 = arith.constant 0 : index
    %30 = vector.load %arg7[%c0_16, %c0_17, %c0_18] : memref<1x1x256xf32, #tpu.memory_space<vmem>>, vector<1x1x256xf32>
    %31 = vector.shape_cast %30 : vector<1x1x256xf32> to vector<1x256xf32>
    %32 = vector.shape_cast %29 : vector<1x256xf32> to vector<1x1x256xf32>
    tpu.vector_store %arg7[%c0_16, %c0_17, %c0_18], %32 {strides = array<i32>} : memref<1x1x256xf32, #tpu.memory_space<vmem>>, vector<1x1x256xf32>,
    return
  }
  func.func @transform_0(%arg0: i32, %arg1: i32) -> (i32, i32, i32) {
    %c0_i32 = arith.constant 0 : i32
    %c0_i32_0 = arith.constant 0 : i32
    return %arg0, %c0_i32, %arg1 : i32, i32, i32
  }
  func.func @transform_1(%arg0: i32, %arg1: i32) -> (i32, i32) {
    %c0_i32 = arith.constant 0 : i32
    %c0_i32_0 = arith.constant 0 : i32
    %c0_i32_1 = arith.constant 0 : i32
    return %c0_i32, %c0_i32_0 : i32, i32
  }
  func.func @transform_2(%arg0: i32, %arg1: i32) -> (i32, i32) {
    %c0_i32 = arith.constant 0 : i32
    %c0_i32_0 = arith.constant 0 : i32
    %c0_i32_1 = arith.constant 0 : i32
    return %c0_i32, %c0_i32_0 : i32, i32
  }
  func.func @transform_3(%arg0: i32, %arg1: i32) -> (i32, i32) {
    %c0_i32 = arith.constant 0 : i32
    %c0_i32_0 = arith.constant 0 : i32
    %c0_i32_1 = arith.constant 0 : i32
    return %c0_i32, %c0_i32_0 : i32, i32
  }
  func.func @transform_4(%arg0: i32, %arg1: i32) -> (i32, i32) {
    %c0_i32 = arith.constant 0 : i32
    %c0_i32_0 = arith.constant 0 : i32
    %c0_i32_1 = arith.constant 0 : i32
    return %c0_i32, %c0_i32_0 : i32, i32
  }
  func.func @transform_5(%arg0: i32, %arg1: i32) -> (i32, i32, i32) {
    %c0_i32 = arith.constant 0 : i32
    %c0_i32_0 = arith.constant 0 : i32
    return %arg0, %c0_i32, %arg1 : i32, i32, i32
  }
}

</mosaic_0001>

<llo_original>
// kernel: _lambda_.6
$region0: #{_lambda_.6}
  #allocation0 [shape = 'u32[]', space=smem, size = 0x4, offset = 0x4, fixed_abs, tag = 'smem constant byte address 0x4 - core index']
  #allocation1 [shape = 'u32[144,128]{1,0:T(1,128)}', space=vmem, size = 0x12000, scoped, tag = 'internal scratch']
  %s0 = inlined_call_operand.vmem [shape: f32[2,6,256], index: 0, kind: input, shape index: {}]
  %s1 = inlined_call_operand.vmem [shape: f32[32,6], index: 1, kind: input, shape index: {}]
  %s2 = inlined_call_operand.vmem [shape: f32[32,1], index: 2, kind: input, shape index: {}]
  %s3 = inlined_call_operand.vmem [shape: f32[16,32], index: 3, kind: input, shape index: {}]
  %s4 = inlined_call_operand.vmem [shape: f32[16,1], index: 4, kind: input, shape index: {}]
  %s5 = inlined_call_operand.vmem [shape: f32[2,16,256], index: 5, kind: output, shape index: {}]
  %s6 = sld [smem:[#allocation0]]
  $region53: #{_lambda_.6} parent=0
    _
  %s8 = ssub.s32 1, %s6
  %s9 = scalar_select 0, %s8, %s6
  loop: start=0, step=1, limit=4
  $region2: #{_lambda_.6} parent=0 // loop_pre_header
    _
  $region3: #{_lambda_.6} parent=0 // loop_header
    %s11 = sphi 0, %s15
    %p12 = scmp.ge.s32.totalorder %s11, 4
    %s18 = sphi 0, %s30
    %s19 = sphi 0, %s26
    %s20 = sphi 0, %s18
    %s21 = sphi 0, %s19
    %s22 = sphi 0, %s20
    %s23 = sphi 0, %s21
    %s35 = sphi 0, %s37
    %s38 = sphi 0, %s35
    %s39 = sphi 0, %s38
    %s55 = sphi 0, %s39
    %s59 = sphi 0, %s59
    %s61 = sphi 0, %s59
    %s62 = sphi 0, %s61
    %s76 = sphi 0, %s62
    %s80 = sphi 0, %s80
    %s82 = sphi 0, %s80
    %s83 = sphi 0, %s82
    %s97 = sphi 0, %s83
    %s101 = sphi 0, %s101
    %s103 = sphi 0, %s101
    %s104 = sphi 0, %s103
    %s118 = sphi 0, %s104
    %s122 = sphi 0, %s122
    %s124 = sphi 0, %s122
    %s125 = sphi 0, %s124
    %s139 = sphi 0, %s125
    %s147 = sphi 0, %s149
    %s150 = sphi 0, %s147
    %s151 = sphi 0, %s150
    %s167 = sphi 0, %s151
  $region4: #{_lambda_.6} parent=0 // loop_header_branch
    %14 = sbr.rel (%p12) target = $region8
  $region5: #{_lambda_.6} parent=0 // loop_body
    %s16 = ssub.s32 %s11, 1
    %s17 = ssub.s32 %s11, 2
    %s24 = sadd.s32 1, %s19
    %p25 = scmp.ge.s32.totalorder %s24, 1
    %s26 = scalar_select %p25, 0, %s24
    %s27 = sadd.s32 1, %s18
    %s28 = scalar_select %p25, %s27, %s18
    %p29 = scmp.ge.s32.totalorder %s28, 2
    %s30 = scalar_select %p29, 0, %s28
    %s31 = ssub.s32 %s18, %s30
    %s32 = ssub.s32 %s19, %s26
    %s33 = sor.u32 %s31, %s32
    %p34 = scmp.eq.s32.totalorder %s33, 0
    %s36 = sadd.s32 %s35, 1
    %s37 = scalar_select %p34, %s35, %s36
    %p40 = pneg %p34
    %p41 = scmp.eq.s32.totalorder %s11, 1
    %p42 = por %p40, %p41
    %p43 = scmp.ne.s32.totalorder %s35, %s38
    %p44 = scmp.eq.s32.totalorder %s11, 0
    %p45 = por %p43, %p44
    %p46 = scmp.ne.s32.totalorder %s35, %s38
    %p47 = scmp.eq.s32.totalorder %s16, 1
    %p48 = por %p46, %p47
    %p49 = scmp.ne.s32.totalorder %s38, %s39
    %p50 = scmp.eq.s32.totalorder %s16, 0
    %p51 = por %p49, %p50
    %p52 = scmp.ne.s32.totalorder %s38, %s39
    %p53 = scmp.eq.s32.totalorder %s17, 1
    %p54 = por %p52, %p53
    %p56 = scmp.ne.s32.totalorder %s39, %s55
    %p57 = scmp.eq.s32.totalorder %s17, 0
    %p58 = por %p56, %p57
    %s60 = sadd.s32 %s59, 1
    %p63 = scmp.eq.s32.totalorder %s11, 1
    %p64 = scmp.ne.s32.totalorder %s59, %s61
    %p65 = scmp.eq.s32.totalorder %s11, 0
    %p66 = por %p64, %p65
    %p67 = scmp.ne.s32.totalorder %s59, %s61
    %p68 = scmp.eq.s32.totalorder %s16, 1
    %p69 = por %p67, %p68
    %p70 = scmp.ne.s32.totalorder %s61, %s62
    %p71 = scmp.eq.s32.totalorder %s16, 0
    %p72 = por %p70, %p71
    %p73 = scmp.ne.s32.totalorder %s61, %s62
    %p74 = scmp.eq.s32.totalorder %s17, 1
    %p75 = por %p73, %p74
    %p77 = scmp.ne.s32.totalorder %s62, %s76
    %p78 = scmp.eq.s32.totalorder %s17, 0
    %p79 = por %p77, %p78
    %s81 = sadd.s32 %s80, 1
    %p84 = scmp.eq.s32.totalorder %s11, 1
    %p85 = scmp.ne.s32.totalorder %s80, %s82
    %p86 = scmp.eq.s32.totalorder %s11, 0
    %p87 = por %p85, %p86
    %p88 = scmp.ne.s32.totalorder %s80, %s82
    %p89 = scmp.eq.s32.totalorder %s16, 1
    %p90 = por %p88, %p89
    %p91 = scmp.ne.s32.totalorder %s82, %s83
    %p92 = scmp.eq.s32.totalorder %s16, 0
    %p93 = por %p91, %p92
    %p94 = scmp.ne.s32.totalorder %s82, %s83
    %p95 = scmp.eq.s32.totalorder %s17, 1
    %p96 = por %p94, %p95
    %p98 = scmp.ne.s32.totalorder %s83, %s97
    %p99 = scmp.eq.s32.totalorder %s17, 0
    %p100 = por %p98, %p99
    %s102 = sadd.s32 %s101, 1
    %p105 = scmp.eq.s32.totalorder %s11, 1
    %p106 = scmp.ne.s32.totalorder %s101, %s103
    %p107 = scmp.eq.s32.totalorder %s11, 0
    %p108 = por %p106, %p107
    %p109 = scmp.ne.s32.totalorder %s101, %s103
    %p110 = scmp.eq.s32.totalorder %s16, 1
    %p111 = por %p109, %p110
    %p112 = scmp.ne.s32.totalorder %s103, %s104
    %p113 = scmp.eq.s32.totalorder %s16, 0
    %p114 = por %p112, %p113
    %p115 = scmp.ne.s32.totalorder %s103, %s104
    %p116 = scmp.eq.s32.totalorder %s17, 1
    %p117 = por %p115, %p116
    %p119 = scmp.ne.s32.totalorder %s104, %s118
    %p120 = scmp.eq.s32.totalorder %s17, 0
    %p121 = por %p119, %p120
    %s123 = sadd.s32 %s122, 1
    %p126 = scmp.eq.s32.totalorder %s11, 1
    %p127 = scmp.ne.s32.totalorder %s122, %s124
    %p128 = scmp.eq.s32.totalorder %s11, 0
    %p129 = por %p127, %p128
    %p130 = scmp.ne.s32.totalorder %s122, %s124
    %p131 = scmp.eq.s32.totalorder %s16, 1
    %p132 = por %p130, %p131
    %p133 = scmp.ne.s32.totalorder %s124, %s125
    %p134 = scmp.eq.s32.totalorder %s16, 0
    %p135 = por %p133, %p134
    %p136 = scmp.ne.s32.totalorder %s124, %s125
    %p137 = scmp.eq.s32.totalorder %s17, 1
    %p138 = por %p136, %p137
    %p140 = scmp.ne.s32.totalorder %s125, %s139
    %p141 = scmp.eq.s32.totalorder %s17, 0
    %p142 = por %p140, %p141
    %s143 = ssub.s32 %s18, %s30
    %s144 = ssub.s32 %s19, %s26
    %s145 = sor.u32 %s143, %s144
    %p146 = scmp.eq.s32.totalorder %s145, 0
    %s148 = sadd.s32 %s147, 1
    %s149 = scalar_select %p146, %s147, %s148
    %p152 = pneg %p146
    %p153 = scmp.eq.s32.totalorder %s11, 1
    %p154 = por %p152, %p153
    %p155 = scmp.ne.s32.totalorder %s147, %s150
    %p156 = scmp.eq.s32.totalorder %s11, 0
    %p157 = por %p155, %p156
    %p158 = scmp.ne.s32.totalorder %s147, %s150
    %p159 = scmp.eq.s32.totalorder %s16, 1
    %p160 = por %p158, %p159
    %p161 = scmp.ne.s32.totalorder %s150, %s151
    %p162 = scmp.eq.s32.totalorder %s16, 0
    %p163 = por %p161, %p162
    %p164 = scmp.ne.s32.totalorder %s150, %s151
    %p165 = scmp.eq.s32.totalorder %s17, 1
    %p166 = por %p164, %p165
    %p168 = scmp.ne.s32.totalorder %s151, %s167
    %p169 = scmp.eq.s32.totalorder %s17, 0
    %p170 = por %p168, %p169
    %p171 = scmp.le.s32.totalorder 1, %s11
    %p172 = scmp.lt.s32.totalorder %s11, 3
    %p173 = pnand %p171, %p172
    %p174 = pneg %p173
    // Predicated region
    $region9: #{_lambda_.6} parent=5 // pred_check
      _
    $region10: #{_lambda_.6} parent=5 // pred_check_branch
      %176 = sbr.rel (%p173) target = $region12
    $region11: #{_lambda_.6} parent=5 // pred_region
      %s177 = ssub.s32 %s11, 1
      // Predicated region
      $region13: #{_lambda_.6} parent=11 // pred_check
        %p178 = pneg %p72
      $region14: #{_lambda_.6} parent=11 // pred_check_branch
        %180 = sbr.rel (%p178) target = $region16
      $region15: #{_lambda_.6} parent=11 // pred_region
        _
      $region16: #{_lambda_.6} parent=11 // pred_fallthru
        _
      // Predicated region
      $region17: #{_lambda_.6} parent=11 // pred_check
        %p181 = pneg %p93
      $region18: #{_lambda_.6} parent=11 // pred_check_branch
        %183 = sbr.rel (%p181) target = $region20
      $region19: #{_lambda_.6} parent=11 // pred_region
        _
      $region20: #{_lambda_.6} parent=11 // pred_fallthru
        _
      // Predicated region
      $region21: #{_lambda_.6} parent=11 // pred_check
        %p184 = pneg %p114
      $region22: #{_lambda_.6} parent=11 // pred_check_branch
        %186 = sbr.rel (%p184) target = $region24
      $region23: #{_lambda_.6} parent=11 // pred_region
        _
      $region24: #{_lambda_.6} parent=11 // pred_fallthru
        _
      // Predicated region
      $region25: #{_lambda_.6} parent=11 // pred_check
        %p187 = pneg %p135
      $region26: #{_lambda_.6} parent=11 // pred_check_branch
        %189 = sbr.rel (%p187) target = $region28
      $region27: #{_lambda_.6} parent=11 // pred_region
        _
      $region28: #{_lambda_.6} parent=11 // pred_fallthru
        _
    $region12: #{_lambda_.6} parent=5 // pred_fallthru
      _
    %p190 = scmp.lt.s32.totalorder %s11, 2
    // Predicated region
    $region29: #{_lambda_.6} parent=5 // pred_check
      %p191 = pneg %p190
    $region30: #{_lambda_.6} parent=5 // pred_check_branch
      %193 = sbr.rel (%p191) target = $region32
    $region31: #{_lambda_.6} parent=5 // pred_region
      // Predicated region
      $region33: #{_lambda_.6} parent=31 // pred_check
        %p194 = pneg %p45
      $region34: #{_lambda_.6} parent=31 // pred_check_branch
        %196 = sbr.rel (%p194) target = $region36
      $region35: #{_lambda_.6} parent=31 // pred_region
        %s197 = smul.u32 2, %s19
        %p198 = scmp.lt.s32.totalorder %s18, 1
        %s199 = scalar_select %p198, %s18, 1
        %p200 = scmp.lt.s32.totalorder %s197, 1
        %s201 = scalar_select %p200, %s197, 1
        %s202 = smul.addr %s199, 2
        %s203 = sadd.s32 %s201, %s202
        %s204 = smul.addr %s203, 8
        %s205 = scalar_lea.vmem %s0, %s204
        %s206 = smul.u32 2, %s19
      $region36: #{_lambda_.6} parent=31 // pred_fallthru
        _
    $region32: #{_lambda_.6} parent=5 // pred_fallthru
      _
    %p207 = scmp.le.s32.totalorder 1, %s11
    %p208 = scmp.lt.s32.totalorder %s11, 3
    %p209 = pnand %p207, %p208
    %p210 = pneg %p209
    // Predicated region
    $region37: #{_lambda_.6} parent=5 // pred_check
      _
    $region38: #{_lambda_.6} parent=5 // pred_check_branch
      %212 = sbr.rel (%p209) target = $region40
    $region39: #{_lambda_.6} parent=5 // pred_region
      %s213 = ssub.s32 %s11, 1
      %s214 = smul.u32 2, %s21
      %p215 = scmp.lt.s32.totalorder %s20, 1
      %s216 = scalar_select %p215, %s20, 1
      %p217 = scmp.lt.s32.totalorder %s214, 1
      %s218 = scalar_select %p217, %s214, 1
      %s219 = smul.addr %s216, 2
      %s220 = sadd.s32 %s218, %s219
      %s221 = smul.addr %s220, 8
      %s222 = scalar_lea.vmem %s0, %s221
      %p223 = pneg %p51
      %p224 = pneg %p48
      %p225 = pneg %p72
      %p226 = pneg %p69
      %p227 = pneg %p93
      %p228 = pneg %p90
      %p229 = pneg %p114
      %p230 = pneg %p111
      %p231 = pneg %p135
      %p232 = pneg %p132
      %p233 = pneg %p163
      %p234 = pneg %p160
      %s235 = smul.u32 2, %s21
      %p236 = scmp.lt.s32.totalorder %s20, 1
      %s237 = scalar_select %p236, %s20, 1
      %p238 = scmp.lt.s32.totalorder %s235, 1
      %s239 = scalar_select %p238, %s235, 1
      %s240 = smul.addr %s237, 4
      %s241 = sadd.s32 %s239, %s240
      %s242 = smul.addr %s241, 8
      %s243 = scalar_lea.vmem %s5, %s242
      %s244 = smul.u32 2, %s21
      %p245 = scmp.lt.s32.totalorder %s20, 1
      %s246 = scalar_select %p245, %s20, 1
      %p247 = scmp.lt.s32.totalorder %s244, 1
      %s248 = scalar_select %p247, %s244, 1
      %s249 = smul.addr %s246, 2
      %s250 = sadd.s32 %s248, %s249
      %s251 = smul.addr %s250, 8
      %s252 = scalar_lea.vmem %s0, %s251
      %s253 = smul.u32 2, %s21
      %s254 = smul.u32 2, %s21
      %p255 = scmp.lt.s32.totalorder %s20, 1
      %s256 = scalar_select %p255, %s20, 1
      %p257 = scmp.lt.s32.totalorder %s254, 1
      %s258 = scalar_select %p257, %s254, 1
      %s259 = smul.addr %s256, 4
      %s260 = sadd.s32 %s258, %s259
      %s261 = smul.addr %s260, 8
      %s262 = scalar_lea.vmem %s5, %s261
      %s263 = smul.u32 2, %s21
      %v264 = vld [vmem:[%s1] sm:$0xff]
      %v265 = vld [vmem:[%s1 + $0x8] sm:$0xff]
      %v266 = vld [vmem:[%s1 + $0x10] sm:$0xff]
      %v267 = vld [vmem:[%s1 + $0x18] sm:$0xff]
      %v268 = vld [vmem:[%s252] sm:$0x3f]
      %v269 = vld [vmem:[%s252 + $0x8] sm:$0x3f]
      %v270 = vld [vmem:[%s2] sm:$0xff]
      %v271 = vld [vmem:[%s2 + $0x8] sm:$0xff]
      %v272 = vld [vmem:[%s2 + $0x10] sm:$0xff]
      %v273 = vld [vmem:[%s2 + $0x18] sm:$0xff]
      %275 = vset.pattern.permute.xlu0 0
      %276 = vperm.xlu0 %275, %v270
      %v277 = vpop.permute.xlu0 %276
      %280 = vset.pattern.permute.xlu0 0
      %281 = vperm.xlu0 %280, %v271
      %v282 = vpop.permute.xlu0 %281
      %285 = vset.pattern.permute.xlu0 0
      %286 = vperm.xlu0 %285, %v272
      %v287 = vpop.permute.xlu0 %286
      %290 = vset.pattern.permute.xlu0 0
      %291 = vperm.xlu0 %290, %v273
      %v292 = vpop.permute.xlu0 %291
      %vm294 = vcmask 48128
      %v296 = vsel %vm294, %v264, 0
      %v299 = vsel %vm294, %v265, 0
      %v302 = vsel %vm294, %v266, 0
      %v305 = vsel %vm294, %v267, 0
      %vm307 = vcmask 1045504
      %v309 = vsel %vm307, %v268, 0
      %v312 = vsel %vm307, %v269, 0
      %314 = vmatprep.subr.mxu0 %v312
      %315 = vmatpush1.msra.mxu0 %v309
      %316 = vmatprep.subr.mxu0 0.0
      %317 = vmatpush1.msra.mxu0 0.0
      %318 = vmatprep.subr.mxu0 0.0
      %319 = vmatpush1.msra.mxu0 0.0
      %320 = vmatprep.subr.mxu0 0.0
      %321 = vmatpush1.msra.mxu0 0.0
      %322 = vmatprep.subr.mxu0 0.0
      %323 = vmatpush1.msra.mxu0 0.0
      %324 = vmatprep.subr.mxu0 0.0
      %325 = vmatpush1.msra.mxu0 0.0
      %326 = vmatprep.subr.mxu0 0.0
      %327 = vmatpush1.msra.mxu0 0.0
      %328 = vmatprep.subr.mxu0 0.0
      %329 = vmatpush1.msra.mxu0 0.0
      %330 = vmatprep.subr.mxu0 0.0
      %331 = vmatpush1.msra.mxu0 0.0
      %332 = vmatprep.subr.mxu0 0.0
      %333 = vmatpush1.msra.mxu0 0.0
      %334 = vmatprep.subr.mxu0 0.0
      %335 = vmatpush1.msra.mxu0 0.0
      %336 = vmatprep.subr.mxu0 0.0
      %337 = vmatpush1.msra.mxu0 0.0
      %338 = vmatprep.subr.mxu0 0.0
      %339 = vmatpush1.msra.mxu0 0.0
      %340 = vmatprep.subr.mxu0 0.0
      %341 = vmatpush1.msra.mxu0 0.0
      %342 = vmatprep.subr.mxu0 0.0
      %343 = vmatpush1.msra.mxu0 0.0
      %344 = vmatprep.subr.mxu0 0.0
      %345 = vmatpush1.msra.mxu0 0.0
      %346 = vmatprep.subr.mxu0 0.0
      %347 = vmatpush1.msra.mxu0 0.0
      %348 = vmatprep.subr.mxu0 0.0
      %349 = vmatpush1.msra.mxu0 0.0
      %350 = vmatprep.subr.mxu0 0.0
      %351 = vmatpush1.msra.mxu0 0.0
      %352 = vmatprep.subr.mxu0 0.0
      %353 = vmatpush1.msra.mxu0 0.0
      %354 = vmatprep.subr.mxu0 0.0
      %355 = vmatpush1.msra.mxu0 0.0
      %356 = vmatprep.subr.mxu0 0.0
      %357 = vmatpush1.msra.mxu0 0.0
      %358 = vmatprep.subr.mxu0 0.0
      %359 = vmatpush1.msra.mxu0 0.0
      %360 = vmatprep.subr.mxu0 0.0
      %361 = vmatpush1.msra.mxu0 0.0
      %362 = vmatprep.subr.mxu0 0.0
      %363 = vmatpush1.msra.mxu0 0.0
      %364 = vmatprep.subr.mxu0 0.0
      %365 = vmatpush1.msra.mxu0 0.0
      %366 = vmatprep.subr.mxu0 0.0
      %367 = vmatpush1.msra.mxu0 0.0
      %368 = vmatprep.subr.mxu0 0.0
      %369 = vmatpush1.msra.mxu0 0.0
      %370 = vmatprep.subr.mxu0 0.0
      %371 = vmatpush1.msra.mxu0 0.0
      %372 = vmatprep.subr.mxu0 0.0
      %373 = vmatpush1.msra.mxu0 0.0
      %374 = vmatprep.subr.mxu0 0.0
      %375 = vmatpush1.msra.mxu0 0.0
      %376 = vmatprep.subr.mxu0 0.0
      %377 = vmatpush1.msra.mxu0 0.0
      %378 = vmatprep.mubr.f32.mxu0 0.0
      %379 = vmatmul.mubr.f32.gmra.mrb[0].mxu0 %v296
      %v380 = vpop.f32.mrb[0].mxu0
      %v381 = vadd.f32 %v277, %v380
      %v382 = vpop.f32.mrb[0].mxu0
      %v383 = vadd.f32 %v277, %v382
      %384 = vmatprep.mubr.f32.mxu0 0.0
      %385 = vmatmul.mubr.f32.gmra.mrb[0].mxu0 %v299
      %v386 = vpop.f32.mrb[0].mxu0
      %v387 = vadd.f32 %v282, %v386
      %v388 = vpop.f32.mrb[0].mxu0
      %v389 = vadd.f32 %v282, %v388
      %390 = vmatprep.mubr.f32.mxu0 0.0
      %391 = vmatmul.mubr.f32.gmra.mrb[0].mxu0 %v302
      %v392 = vpop.f32.mrb[0].mxu0
      %v393 = vadd.f32 %v287, %v392
      %v394 = vpop.f32.mrb[0].mxu0
      %v395 = vadd.f32 %v287, %v394
      %396 = vmatprep.mubr.f32.mxu0 0.0
      %397 = vmatmul.mubr.f32.gmra.mrb[0].mxu0 %v305
      %v398 = vpop.f32.mrb[0].mxu0
      %v399 = vadd.f32 %v292, %v398
      %v400 = vpop.f32.mrb[0].mxu0
      %v401 = vadd.f32 %v292, %v400
      %402 = vdwg.mxu0
      %v403 = vmul.f32 %v381, %v381
      %v404 = vmul.f32 %v383, %v383
      %v405 = vmul.f32 %v387, %v387
      %v406 = vmul.f32 %v389, %v389
      %v407 = vmul.f32 %v393, %v393
      %v408 = vmul.f32 %v395, %v395
      %v409 = vmul.f32 %v399, %v399
      %v410 = vmul.f32 %v401, %v401
      %v411 = vmul.f32 %v381, %v403
      %v412 = vmul.f32 %v383, %v404
      %v413 = vmul.f32 %v387, %v405
      %v414 = vmul.f32 %v389, %v406
      %v415 = vmul.f32 %v393, %v407
      %v416 = vmul.f32 %v395, %v408
      %v417 = vmul.f32 %v399, %v409
      %v418 = vmul.f32 %v401, %v410
      %v419 = vmul.f32 %v411, 0.044715
      %v420 = vmul.f32 %v412, 0.044715
      %v421 = vmul.f32 %v413, 0.044715
      %v422 = vmul.f32 %v414, 0.044715
      %v423 = vmul.f32 %v415, 0.044715
      %v424 = vmul.f32 %v416, 0.044715
      %v425 = vmul.f32 %v417, 0.044715
      %v426 = vmul.f32 %v418, 0.044715
      %v427 = vadd.f32 %v381, %v419
      %v428 = vadd.f32 %v383, %v420
      %v429 = vadd.f32 %v387, %v421
      %v430 = vadd.f32 %v389, %v422
      %v431 = vadd.f32 %v393, %v423
      %v432 = vadd.f32 %v395, %v424
      %v433 = vadd.f32 %v399, %v425
      %v434 = vadd.f32 %v401, %v426
      %v435 = vmul.f32 %v427, 0.7978846
      %v436 = vmul.f32 %v428, 0.7978846
      %v437 = vmul.f32 %v429, 0.7978846
      %v438 = vmul.f32 %v430, 0.7978846
      %v439 = vmul.f32 %v431, 0.7978846
      %v440 = vmul.f32 %v432, 0.7978846
      %v441 = vmul.f32 %v433, 0.7978846
      %v442 = vmul.f32 %v434, 0.7978846
      %v443 = vtanh.pop %v435
      %v444 = vtanh.pop %v436
      %v445 = vtanh.pop %v437
      %v446 = vtanh.pop %v438
      %v447 = vtanh.pop %v439
      %v448 = vtanh.pop %v440
      %v449 = vtanh.pop %v441
      %v450 = vtanh.pop %v442
      %v451 = vadd.f32 %v443, 1.0
      %v452 = vadd.f32 %v444, 1.0
      %v453 = vadd.f32 %v445, 1.0
      %v454 = vadd.f32 %v446, 1.0
      %v455 = vadd.f32 %v447, 1.0
      %v456 = vadd.f32 %v448, 1.0
      %v457 = vadd.f32 %v449, 1.0
      %v458 = vadd.f32 %v450, 1.0
      %v459 = vmul.f32 %v451, 0.5
      %v460 = vmul.f32 %v452, 0.5
      %v461 = vmul.f32 %v453, 0.5
      %v462 = vmul.f32 %v454, 0.5
      %v463 = vmul.f32 %v455, 0.5
      %v464 = vmul.f32 %v456, 0.5
      %v465 = vmul.f32 %v457, 0.5
      %v466 = vmul.f32 %v458, 0.5
      %v467 = vmul.f32 %v381, %v459
      %v468 = vmul.f32 %v383, %v460
      %v469 = vmul.f32 %v387, %v461
      %v470 = vmul.f32 %v389, %v462
      %v471 = vmul.f32 %v393, %v463
      %v472 = vmul.f32 %v395, %v464
      %v473 = vmul.f32 %v399, %v465
      %v474 = vmul.f32 %v401, %v466
      %v475 = vld [vmem:[%s3] sm:$0xff]
      %v476 = vld [vmem:[%s3 + $0x8] sm:$0xff]
      %v477 = vld [vmem:[%s4] sm:$0xff]
      %v478 = vld [vmem:[%s4 + $0x8] sm:$0xff]
      %480 = vset.pattern.permute.xlu0 0
      %481 = vperm.xlu0 %480, %v477
      %v482 = vpop.permute.xlu0 %481
      %485 = vset.pattern.permute.xlu0 0
      %486 = vperm.xlu0 %485, %v478
      %v487 = vpop.permute.xlu0 %486
      %vm489 = vcmask 261120
      %v491 = vsel %vm489, %v475, 0
      %v494 = vsel %vm489, %v476, 0
      %496 = vmatprep.subr.mxu0 %v468
      %497 = vmatpush1.msra.mxu0 %v467
      %498 = vmatprep.subr.mxu0 %v470
      %499 = vmatpush1.msra.mxu0 %v469
      %500 = vmatprep.subr.mxu0 %v472
      %501 = vmatpush1.msra.mxu0 %v471
      %502 = vmatprep.subr.mxu0 %v474
      %503 = vmatpush1.msra.mxu0 %v473
      %504 = vmatprep.subr.mxu0 0.0
      %505 = vmatpush1.msra.mxu0 0.0
      %506 = vmatprep.subr.mxu0 0.0
      %507 = vmatpush1.msra.mxu0 0.0
      %508 = vmatprep.subr.mxu0 0.0
      %509 = vmatpush1.msra.mxu0 0.0
      %510 = vmatprep.subr.mxu0 0.0
      %511 = vmatpush1.msra.mxu0 0.0
      %512 = vmatprep.subr.mxu0 0.0
      %513 = vmatpush1.msra.mxu0 0.0
      %514 = vmatprep.subr.mxu0 0.0
      %515 = vmatpush1.msra.mxu0 0.0
      %516 = vmatprep.subr.mxu0 0.0
      %517 = vmatpush1.msra.mxu0 0.0
      %518 = vmatprep.subr.mxu0 0.0
      %519 = vmatpush1.msra.mxu0 0.0
      %520 = vmatprep.subr.mxu0 0.0
      %521 = vmatpush1.msra.mxu0 0.0
      %522 = vmatprep.subr.mxu0 0.0
      %523 = vmatpush1.msra.mxu0 0.0
      %524 = vmatprep.subr.mxu0 0.0
      %525 = vmatpush1.msra.mxu0 0.0
      %526 = vmatprep.subr.mxu0 0.0
      %527 = vmatpush1.msra.mxu0 0.0
      %528 = vmatprep.subr.mxu0 0.0
      %529 = vmatpush1.msra.mxu0 0.0
      %530 = vmatprep.subr.mxu0 0.0
      %531 = vmatpush1.msra.mxu0 0.0
      %532 = vmatprep.subr.mxu0 0.0
      %533 = vmatpush1.msra.mxu0 0.0
      %534 = vmatprep.subr.mxu0 0.0
      %535 = vmatpush1.msra.mxu0 0.0
      %536 = vmatprep.subr.mxu0 0.0
      %537 = vmatpush1.msra.mxu0 0.0
      %538 = vmatprep.subr.mxu0 0.0
      %539 = vmatpush1.msra.mxu0 0.0
      %540 = vmatprep.subr.mxu0 0.0
      %541 = vmatpush1.msra.mxu0 0.0
      %542 = vmatprep.subr.mxu0 0.0
      %543 = vmatpush1.msra.mxu0 0.0
      %544 = vmatprep.subr.mxu0 0.0
      %545 = vmatpush1.msra.mxu0 0.0
      %546 = vmatprep.subr.mxu0 0.0
      %547 = vmatpush1.msra.mxu0 0.0
      %548 = vmatprep.subr.mxu0 0.0
      %549 = vmatpush1.msra.mxu0 0.0
      %550 = vmatprep.subr.mxu0 0.0
      %551 = vmatpush1.msra.mxu0 0.0
      %552 = vmatprep.subr.mxu0 0.0
      %553 = vmatpush1.msra.mxu0 0.0
      %554 = vmatprep.subr.mxu0 0.0
      %555 = vmatpush1.msra.mxu0 0.0
      %556 = vmatprep.subr.mxu0 0.0
      %557 = vmatpush1.msra.mxu0 0.0
      %558 = vmatprep.subr.mxu0 0.0
      %559 = vmatpush1.msra.mxu0 0.0
      %560 = vmatprep.mubr.f32.mxu0 0.0
      %561 = vmatmul.mubr.f32.gmra.mrb[0].mxu0 %v491
      %v562 = vpop.f32.mrb[0].mxu0
      %v563 = vadd.f32 %v482, %v562
      %v564 = vpop.f32.mrb[0].mxu0
      %v565 = vadd.f32 %v482, %v564
      %566 = vmatprep.mubr.f32.mxu0 0.0
      %567 = vmatmul.mubr.f32.gmra.mrb[0].mxu0 %v494
      %v568 = vpop.f32.mrb[0].mxu0
      %v569 = vadd.f32 %v487, %v568
      %v570 = vpop.f32.mrb[0].mxu0
      %v571 = vadd.f32 %v487, %v570
      %572 = vdwg.mxu0
      %573 = vst [vmem:[%s262] sm:$0xff] %v563
      %574 = vst [vmem:[%s262 + $0x8] sm:$0xff] %v565
      %575 = vst [vmem:[%s262 + $0x10] sm:$0xff] %v569
      %576 = vst [vmem:[%s262 + $0x18] sm:$0xff] %v571
      %s577 = smul.u32 2, %s21
      %p578 = scmp.lt.s32.totalorder %s20, 1
      %s579 = scalar_select %p578, %s20, 1
      %p580 = scmp.lt.s32.totalorder %s577, 1
      %s581 = scalar_select %p580, %s577, 1
      %s582 = smul.addr %s579, 4
      %s583 = sadd.s32 %s581, %s582
      %s584 = smul.addr %s583, 8
      %s585 = scalar_lea.vmem %s5, %s584
      // Predicated region
      $region41: #{_lambda_.6} parent=39 // pred_check
        %p586 = pneg %p160
      $region42: #{_lambda_.6} parent=39 // pred_check_branch
        %588 = sbr.rel (%p586) target = $region44
      $region43: #{_lambda_.6} parent=39 // pred_region
        %s589 = smul.u32 2, %s21
      $region44: #{_lambda_.6} parent=39 // pred_fallthru
        _
    $region40: #{_lambda_.6} parent=5 // pred_fallthru
      _
    %p590 = scmp.le.s32.totalorder 2, %s11
    // Predicated region
    $region45: #{_lambda_.6} parent=5 // pred_check
      %p591 = pneg %p590
    $region46: #{_lambda_.6} parent=5 // pred_check_branch
      %593 = sbr.rel (%p591) target = $region48
    $region47: #{_lambda_.6} parent=5 // pred_region
      %s594 = ssub.s32 %s11, 2
      // Predicated region
      $region49: #{_lambda_.6} parent=47 // pred_check
        %p595 = pneg %p166
      $region50: #{_lambda_.6} parent=47 // pred_check_branch
        %597 = sbr.rel (%p595) target = $region52
      $region51: #{_lambda_.6} parent=47 // pred_region
        %s598 = smul.u32 2, %s23
        %p599 = scmp.lt.s32.totalorder %s22, 1
        %s600 = scalar_select %p599, %s22, 1
        %p601 = scmp.lt.s32.totalorder %s598, 1
        %s602 = scalar_select %p601, %s598, 1
        %s603 = smul.addr %s600, 4
        %s604 = sadd.s32 %s602, %s603
        %s605 = smul.addr %s604, 8
        %s606 = scalar_lea.vmem %s5, %s605
      $region52: #{_lambda_.6} parent=47 // pred_fallthru
        _
    $region48: #{_lambda_.6} parent=5 // pred_fallthru
      _
  $region6: #{_lambda_.6} parent=0 // loop_footer
    %s15 = sadd.s32 1, %s11
  $region7: #{_lambda_.6} parent=0 // loop_footer_branch
    %10 = sbr.rel target = $region3
  $region8: #{_lambda_.6} parent=0 // loop_exit
    _

// kernel: reverse.8
$region0: #{reverse.8}
  #allocation0 [shape = 's32[1]{0}', space=sflag, size = 0x4, scoped, tag = 'scoped memory for reverse.8']
  %s0 = inlined_call_operand.vmem [shape: f32[2,16,16,7], index: 0, kind: input, shape index: {}]
  %s1 = inlined_call_operand.vmem [shape: f32[2,16,16,7], index: 1, kind: output, shape index: {}]
  %s2 = scalar_lea.vmem %s0, 96
  %v3 = vld [vmem:[%s2] sm:$0xff]
  %4 = vst [vmem:[%s1] sm:$0xff] %v3
  %s5 = scalar_lea.vmem %s0, 208
  %v6 = vld [vmem:[%s5] sm:$0xff]
  %s7 = scalar_lea.vmem %s1, 112
  %8 = vst [vmem:[%s7] sm:$0xff] %v6
  %s9 = scalar_lea.vmem %s0, 80
  %v10 = vld [vmem:[%s9] sm:$0xff]
  %s11 = scalar_lea.vmem %s1, 16
  %12 = vst [vmem:[%s11] sm:$0xff] %v10
  %s13 = scalar_lea.vmem %s0, 192
  %v14 = vld [vmem:[%s13] sm:$0xff]
  %s15 = scalar_lea.vmem %s1, 128
  %16 = vst [vmem:[%s15] sm:$0xff] %v14
  %s17 = scalar_lea.vmem %s0, 64
  %v18 = vld [vmem:[%s17] sm:$0xff]
  %s19 = scalar_lea.vmem %s1, 32
  %20 = vst [vmem:[%s19] sm:$0xff] %v18
  %s21 = scalar_lea.vmem %s0, 176
  %v22 = vld [vmem:[%s21] sm:$0xff]
  %s23 = scalar_lea.vmem %s1, 144
  %24 = vst [vmem:[%s23] sm:$0xff] %v22
  %s25 = scalar_lea.vmem %s0, 48
  %v26 = vld [vmem:[%s25] sm:$0xff]
  %s27 = scalar_lea.vmem %s1, 48
  %28 = vst [vmem:[%s27] sm:$0xff] %v26
  %s29 = scalar_lea.vmem %s0, 160
  %v30 = vld [vmem:[%s29] sm:$0xff]
  %s31 = scalar_lea.vmem %s1, 160
  %32 = vst [vmem:[%s31] sm:$0xff] %v30
  %s33 = scalar_lea.vmem %s0, 32
  %v34 = vld [vmem:[%s33] sm:$0xff]
  %s35 = scalar_lea.vmem %s1, 64
  %36 = vst [vmem:[%s35] sm:$0xff] %v34
  %s37 = scalar_lea.vmem %s0, 144
  %v38 = vld [vmem:[%s37] sm:$0xff]
  %s39 = scalar_lea.vmem %s1, 176
  %40 = vst [vmem:[%s39] sm:$0xff] %v38
  %s41 = scalar_lea.vmem %s0, 16
  %v42 = vld [vmem:[%s41] sm:$0xff]
  %s43 = scalar_lea.vmem %s1, 80
  %44 = vst [vmem:[%s43] sm:$0xff] %v42
  %s45 = scalar_lea.vmem %s0, 128
  %v46 = vld [vmem:[%s45] sm:$0xff]
  %s47 = scalar_lea.vmem %s1, 192
  %48 = vst [vmem:[%s47] sm:$0xff] %v46
  %v49 = vld [vmem:[%s0] sm:$0xff]
  %s50 = scalar_lea.vmem %s1, 96
  %51 = vst [vmem:[%s50] sm:$0xff] %v49
  %s52 = scalar_lea.vmem %s0, 112
  %v53 = vld [vmem:[%s52] sm:$0xff]
  %s54 = scalar_lea.vmem %s1, 208
  %55 = vst [vmem:[%s54] sm:$0xff] %v53
  %s56 = scalar_lea.vmem %s0, 104
  %v57 = vld [vmem:[%s56] sm:$0xff]
  %s58 = scalar_lea.vmem %s1, 8
  %59 = vst [vmem:[%s58] sm:$0xff] %v57
  %s60 = scalar_lea.vmem %s0, 216
  %v61 = vld [vmem:[%s60] sm:$0xff]
  %s62 = scalar_lea.vmem %s1, 120
  %63 = vst [vmem:[%s62] sm:$0xff] %v61
  %s64 = scalar_lea.vmem %s0, 88
  %v65 = vld [vmem:[%s64] sm:$0xff]
  %s66 = scalar_lea.vmem %s1, 24
  %67 = vst [vmem:[%s66] sm:$0xff] %v65
  %s68 = scalar_lea.vmem %s0, 200
  %v69 = vld [vmem:[%s68] sm:$0xff]
  %s70 = scalar_lea.vmem %s1, 136
  %71 = vst [vmem:[%s70] sm:$0xff] %v69
  %s72 = scalar_lea.vmem %s0, 72
  %v73 = vld [vmem:[%s72] sm:$0xff]
  %s74 = scalar_lea.vmem %s1, 40
  %75 = vst [vmem:[%s74] sm:$0xff] %v73
  %s76 = scalar_lea.vmem %s0, 184
  %v77 = vld [vmem:[%s76] sm:$0xff]
  %s78 = scalar_lea.vmem %s1, 152
  %79 = vst [vmem:[%s78] sm:$0xff] %v77
  %s80 = scalar_lea.vmem %s0, 56
  %v81 = vld [vmem:[%s80] sm:$0xff]
  %s82 = scalar_lea.vmem %s1, 56
  %83 = vst [vmem:[%s82] sm:$0xff] %v81
  %s84 = scalar_lea.vmem %s0, 168
  %v85 = vld [vmem:[%s84] sm:$0xff]
  %s86 = scalar_lea.vmem %s1, 168
  %87 = vst [vmem:[%s86] sm:$0xff] %v85
  %s88 = scalar_lea.vmem %s0, 40
  %v89 = vld [vmem:[%s88] sm:$0xff]
  %s90 = scalar_lea.vmem %s1, 72
  %91 = vst [vmem:[%s90] sm:$0xff] %v89
  %s92 = scalar_lea.vmem %s0, 152
  %v93 = vld [vmem:[%s92] sm:$0xff]
  %s94 = scalar_lea.vmem %s1, 184
  %95 = vst [vmem:[%s94] sm:$0xff] %v93
  %s96 = scalar_lea.vmem %s0, 24
  %v97 = vld [vmem:[%s96] sm:$0xff]
  %s98 = scalar_lea.vmem %s1, 88
  %99 = vst [vmem:[%s98] sm:$0xff] %v97
  %s100 = scalar_lea.vmem %s0, 136
  %v101 = vld [vmem:[%s100] sm:$0xff]
  %s102 = scalar_lea.vmem %s1, 200
  %103 = vst [vmem:[%s102] sm:$0xff] %v101
  %s104 = scalar_lea.vmem %s0, 8
  %v105 = vld [vmem:[%s104] sm:$0xff]
  %s106 = scalar_lea.vmem %s1, 104
  %107 = vst [vmem:[%s106] sm:$0xff] %v105
  %s108 = scalar_lea.vmem %s0, 120
  %v109 = vld [vmem:[%s108] sm:$0xff]
  %s110 = scalar_lea.vmem %s1, 216
  %111 = vst [vmem:[%s110] sm:$0xff] %v109

// kernel: _lambda_.7
$region0: #{_lambda_.7}
  #allocation0 [shape = 'u32[]', space=smem, size = 0x4, offset = 0x4, fixed_abs, tag = 'smem constant byte address 0x4 - core index']
  #allocation1 [shape = 'u32[144,128]{1,0:T(1,128)}', space=vmem, size = 0x12000, scoped, tag = 'internal scratch']
  #allocation2 [shape = 'f32[32,256]{1,0:T(8,128)}', space=vmem, size = 0x8000, scoped, tag = 'scratch operand']
  %s0 = inlined_call_operand.vmem [shape: f32[2,16,256], index: 0, kind: input, shape index: {}]
  %s1 = inlined_call_operand.vmem [shape: f32[2,16,256], index: 1, kind: input, shape index: {}]
  %s2 = inlined_call_operand.vmem [shape: f32[32,32], index: 2, kind: input, shape index: {}]
  %s3 = inlined_call_operand.vmem [shape: f32[32,1], index: 3, kind: input, shape index: {}]
  %s4 = inlined_call_operand.vmem [shape: f32[16,16], index: 4, kind: input, shape index: {}]
  %s5 = inlined_call_operand.vmem [shape: f32[16,1], index: 5, kind: input, shape index: {}]
  %s6 = inlined_call_operand.vmem [shape: f32[2,16,256], index: 6, kind: output, shape index: {}]
  %s7 = sld [smem:[#allocation0]]
  $region57: #{_lambda_.7} parent=0
    _
  %s9 = ssub.s32 1, %s7
  %s10 = scalar_select 0, %s9, %s7
  loop: start=0, step=1, limit=4
  $region2: #{_lambda_.7} parent=0 // loop_pre_header
    _
  $region3: #{_lambda_.7} parent=0 // loop_header
    %s12 = sphi 0, %s16
    %p13 = scmp.ge.s32.totalorder %s12, 4
    %s19 = sphi 0, %s31
    %s20 = sphi 0, %s27
    %s21 = sphi 0, %s19
    %s22 = sphi 0, %s20
    %s23 = sphi 0, %s21
    %s24 = sphi 0, %s22
    %s36 = sphi 0, %s38
    %s39 = sphi 0, %s36
    %s40 = sphi 0, %s39
    %s56 = sphi 0, %s40
    %s64 = sphi 0, %s66
    %s67 = sphi 0, %s64
    %s68 = sphi 0, %s67
    %s84 = sphi 0, %s68
    %s88 = sphi 0, %s88
    %s90 = sphi 0, %s88
    %s91 = sphi 0, %s90
    %s105 = sphi 0, %s91
    %s109 = sphi 0, %s109
    %s111 = sphi 0, %s109
    %s112 = sphi 0, %s111
    %s126 = sphi 0, %s112
    %s130 = sphi 0, %s130
    %s132 = sphi 0, %s130
    %s133 = sphi 0, %s132
    %s147 = sphi 0, %s133
    %s151 = sphi 0, %s151
    %s153 = sphi 0, %s151
    %s154 = sphi 0, %s153
    %s168 = sphi 0, %s154
    %s176 = sphi 0, %s178
    %s179 = sphi 0, %s176
    %s180 = sphi 0, %s179
    %s196 = sphi 0, %s180
  $region4: #{_lambda_.7} parent=0 // loop_header_branch
    %15 = sbr.rel (%p13) target = $region8
  $region5: #{_lambda_.7} parent=0 // loop_body
    %s17 = ssub.s32 %s12, 1
    %s18 = ssub.s32 %s12, 2
    %s25 = sadd.s32 1, %s20
    %p26 = scmp.ge.s32.totalorder %s25, 1
    %s27 = scalar_select %p26, 0, %s25
    %s28 = sadd.s32 1, %s19
    %s29 = scalar_select %p26, %s28, %s19
    %p30 = scmp.ge.s32.totalorder %s29, 2
    %s31 = scalar_select %p30, 0, %s29
    %s32 = ssub.s32 %s19, %s31
    %s33 = ssub.s32 %s20, %s27
    %s34 = sor.u32 %s32, %s33
    %p35 = scmp.eq.s32.totalorder %s34, 0
    %s37 = sadd.s32 %s36, 1
    %s38 = scalar_select %p35, %s36, %s37
    %p41 = pneg %p35
    %p42 = scmp.eq.s32.totalorder %s12, 1
    %p43 = por %p41, %p42
    %p44 = scmp.ne.s32.totalorder %s36, %s39
    %p45 = scmp.eq.s32.totalorder %s12, 0
    %p46 = por %p44, %p45
    %p47 = scmp.ne.s32.totalorder %s36, %s39
    %p48 = scmp.eq.s32.totalorder %s17, 1
    %p49 = por %p47, %p48
    %p50 = scmp.ne.s32.totalorder %s39, %s40
    %p51 = scmp.eq.s32.totalorder %s17, 0
    %p52 = por %p50, %p51
    %p53 = scmp.ne.s32.totalorder %s39, %s40
    %p54 = scmp.eq.s32.totalorder %s18, 1
    %p55 = por %p53, %p54
    %p57 = scmp.ne.s32.totalorder %s40, %s56
    %p58 = scmp.eq.s32.totalorder %s18, 0
    %p59 = por %p57, %p58
    %s60 = ssub.s32 %s19, %s31
    %s61 = ssub.s32 %s20, %s27
    %s62 = sor.u32 %s60, %s61
    %p63 = scmp.eq.s32.totalorder %s62, 0
    %s65 = sadd.s32 %s64, 1
    %s66 = scalar_select %p63, %s64, %s65
    %p69 = pneg %p63
    %p70 = scmp.eq.s32.totalorder %s12, 1
    %p71 = por %p69, %p70
    %p72 = scmp.ne.s32.totalorder %s64, %s67
    %p73 = scmp.eq.s32.totalorder %s12, 0
    %p74 = por %p72, %p73
    %p75 = scmp.ne.s32.totalorder %s64, %s67
    %p76 = scmp.eq.s32.totalorder %s17, 1
    %p77 = por %p75, %p76
    %p78 = scmp.ne.s32.totalorder %s67, %s68
    %p79 = scmp.eq.s32.totalorder %s17, 0
    %p80 = por %p78, %p79
    %p81 = scmp.ne.s32.totalorder %s67, %s68
    %p82 = scmp.eq.s32.totalorder %s18, 1
    %p83 = por %p81, %p82
    %p85 = scmp.ne.s32.totalorder %s68, %s84
    %p86 = scmp.eq.s32.totalorder %s18, 0
    %p87 = por %p85, %p86
    %s89 = sadd.s32 %s88, 1
    %p92 = scmp.eq.s32.totalorder %s12, 1
    %p93 = scmp.ne.s32.totalorder %s88, %s90
    %p94 = scmp.eq.s32.totalorder %s12, 0
    %p95 = por %p93, %p94
    %p96 = scmp.ne.s32.totalorder %s88, %s90
    %p97 = scmp.eq.s32.totalorder %s17, 1
    %p98 = por %p96, %p97
    %p99 = scmp.ne.s32.totalorder %s90, %s91
    %p100 = scmp.eq.s32.totalorder %s17, 0
    %p101 = por %p99, %p100
    %p102 = scmp.ne.s32.totalorder %s90, %s91
    %p103 = scmp.eq.s32.totalorder %s18, 1
    %p104 = por %p102, %p103
    %p106 = scmp.ne.s32.totalorder %s91, %s105
    %p107 = scmp.eq.s32.totalorder %s18, 0
    %p108 = por %p106, %p107
    %s110 = sadd.s32 %s109, 1
    %p113 = scmp.eq.s32.totalorder %s12, 1
    %p114 = scmp.ne.s32.totalorder %s109, %s111
    %p115 = scmp.eq.s32.totalorder %s12, 0
    %p116 = por %p114, %p115
    %p117 = scmp.ne.s32.totalorder %s109, %s111
    %p118 = scmp.eq.s32.totalorder %s17, 1
    %p119 = por %p117, %p118
    %p120 = scmp.ne.s32.totalorder %s111, %s112
    %p121 = scmp.eq.s32.totalorder %s17, 0
    %p122 = por %p120, %p121
    %p123 = scmp.ne.s32.totalorder %s111, %s112
    %p124 = scmp.eq.s32.totalorder %s18, 1
    %p125 = por %p123, %p124
    %p127 = scmp.ne.s32.totalorder %s112, %s126
    %p128 = scmp.eq.s32.totalorder %s18, 0
    %p129 = por %p127, %p128
    %s131 = sadd.s32 %s130, 1
    %p134 = scmp.eq.s32.totalorder %s12, 1
    %p135 = scmp.ne.s32.totalorder %s130, %s132
    %p136 = scmp.eq.s32.totalorder %s12, 0
    %p137 = por %p135, %p136
    %p138 = scmp.ne.s32.totalorder %s130, %s132
    %p139 = scmp.eq.s32.totalorder %s17, 1
    %p140 = por %p138, %p139
    %p141 = scmp.ne.s32.totalorder %s132, %s133
    %p142 = scmp.eq.s32.totalorder %s17, 0
    %p143 = por %p141, %p142
    %p144 = scmp.ne.s32.totalorder %s132, %s133
    %p145 = scmp.eq.s32.totalorder %s18, 1
    %p146 = por %p144, %p145
    %p148 = scmp.ne.s32.totalorder %s133, %s147
    %p149 = scmp.eq.s32.totalorder %s18, 0
    %p150 = por %p148, %p149
    %s152 = sadd.s32 %s151, 1
    %p155 = scmp.eq.s32.totalorder %s12, 1
    %p156 = scmp.ne.s32.totalorder %s151, %s153
    %p157 = scmp.eq.s32.totalorder %s12, 0
    %p158 = por %p156, %p157
    %p159 = scmp.ne.s32.totalorder %s151, %s153
    %p160 = scmp.eq.s32.totalorder %s17, 1
    %p161 = por %p159, %p160
    %p162 = scmp.ne.s32.totalorder %s153, %s154
    %p163 = scmp.eq.s32.totalorder %s17, 0
    %p164 = por %p162, %p163
    %p165 = scmp.ne.s32.totalorder %s153, %s154
    %p166 = scmp.eq.s32.totalorder %s18, 1
    %p167 = por %p165, %p166
    %p169 = scmp.ne.s32.totalorder %s154, %s168
    %p170 = scmp.eq.s32.totalorder %s18, 0
    %p171 = por %p169, %p170
    %s172 = ssub.s32 %s19, %s31
    %s173 = ssub.s32 %s20, %s27
    %s174 = sor.u32 %s172, %s173
    %p175 = scmp.eq.s32.totalorder %s174, 0
    %s177 = sadd.s32 %s176, 1
    %s178 = scalar_select %p175, %s176, %s177
    %p181 = pneg %p175
    %p182 = scmp.eq.s32.totalorder %s12, 1
    %p183 = por %p181, %p182
    %p184 = scmp.ne.s32.totalorder %s176, %s179
    %p185 = scmp.eq.s32.totalorder %s12, 0
    %p186 = por %p184, %p185
    %p187 = scmp.ne.s32.totalorder %s176, %s179
    %p188 = scmp.eq.s32.totalorder %s17, 1
    %p189 = por %p187, %p188
    %p190 = scmp.ne.s32.totalorder %s179, %s180
    %p191 = scmp.eq.s32.totalorder %s17, 0
    %p192 = por %p190, %p191
    %p193 = scmp.ne.s32.totalorder %s179, %s180
    %p194 = scmp.eq.s32.totalorder %s18, 1
    %p195 = por %p193, %p194
    %p197 = scmp.ne.s32.totalorder %s180, %s196
    %p198 = scmp.eq.s32.totalorder %s18, 0
    %p199 = por %p197, %p198
    %p200 = scmp.le.s32.totalorder 1, %s12
    %p201 = scmp.lt.s32.totalorder %s12, 3
    %p202 = pnand %p200, %p201
    %p203 = pneg %p202
    // Predicated region
    $region9: #{_lambda_.7} parent=5 // pred_check
      _
    $region10: #{_lambda_.7} parent=5 // pred_check_branch
      %205 = sbr.rel (%p202) target = $region12
    $region11: #{_lambda_.7} parent=5 // pred_region
      %s206 = ssub.s32 %s12, 1
      // Predicated region
      $region13: #{_lambda_.7} parent=11 // pred_check
        %p207 = pneg %p101
      $region14: #{_lambda_.7} parent=11 // pred_check_branch
        %209 = sbr.rel (%p207) target = $region16
      $region15: #{_lambda_.7} parent=11 // pred_region
        _
      $region16: #{_lambda_.7} parent=11 // pred_fallthru
        _
      // Predicated region
      $region17: #{_lambda_.7} parent=11 // pred_check
        %p210 = pneg %p122
      $region18: #{_lambda_.7} parent=11 // pred_check_branch
        %212 = sbr.rel (%p210) target = $region20
      $region19: #{_lambda_.7} parent=11 // pred_region
        _
      $region20: #{_lambda_.7} parent=11 // pred_fallthru
        _
      // Predicated region
      $region21: #{_lambda_.7} parent=11 // pred_check
        %p213 = pneg %p143
      $region22: #{_lambda_.7} parent=11 // pred_check_branch
        %215 = sbr.rel (%p213) target = $region24
      $region23: #{_lambda_.7} parent=11 // pred_region
        _
      $region24: #{_lambda_.7} parent=11 // pred_fallthru
        _
      // Predicated region
      $region25: #{_lambda_.7} parent=11 // pred_check
        %p216 = pneg %p164
      $region26: #{_lambda_.7} parent=11 // pred_check_branch
        %218 = sbr.rel (%p216) target = $region28
      $region27: #{_lambda_.7} parent=11 // pred_region
        _
      $region28: #{_lambda_.7} parent=11 // pred_fallthru
        _
    $region12: #{_lambda_.7} parent=5 // pred_fallthru
      _
    %p219 = scmp.lt.s32.totalorder %s12, 2
    // Predicated region
    $region29: #{_lambda_.7} parent=5 // pred_check
      %p220 = pneg %p219
    $region30: #{_lambda_.7} parent=5 // pred_check_branch
      %222 = sbr.rel (%p220) target = $region32
    $region31: #{_lambda_.7} parent=5 // pred_region
      // Predicated region
      $region33: #{_lambda_.7} parent=31 // pred_check
        %p223 = pneg %p46
      $region34: #{_lambda_.7} parent=31 // pred_check_branch
        %225 = sbr.rel (%p223) target = $region36
      $region35: #{_lambda_.7} parent=31 // pred_region
        %s226 = smul.u32 2, %s20
        %p227 = scmp.lt.s32.totalorder %s19, 1
        %s228 = scalar_select %p227, %s19, 1
        %p229 = scmp.lt.s32.totalorder %s226, 1
        %s230 = scalar_select %p229, %s226, 1
        %s231 = smul.addr %s228, 4
        %s232 = sadd.s32 %s230, %s231
        %s233 = smul.addr %s232, 8
        %s234 = scalar_lea.vmem %s0, %s233
        %s235 = smul.u32 2, %s20
      $region36: #{_lambda_.7} parent=31 // pred_fallthru
        _
      // Predicated region
      $region37: #{_lambda_.7} parent=31 // pred_check
        %p236 = pneg %p74
      $region38: #{_lambda_.7} parent=31 // pred_check_branch
        %238 = sbr.rel (%p236) target = $region40
      $region39: #{_lambda_.7} parent=31 // pred_region
        %s239 = smul.u32 2, %s20
        %p240 = scmp.lt.s32.totalorder %s19, 1
        %s241 = scalar_select %p240, %s19, 1
        %p242 = scmp.lt.s32.totalorder %s239, 1
        %s243 = scalar_select %p242, %s239, 1
        %s244 = smul.addr %s241, 4
        %s245 = sadd.s32 %s243, %s244
        %s246 = smul.addr %s245, 8
        %s247 = scalar_lea.vmem %s1, %s246
        %s248 = smul.u32 2, %s20
      $region40: #{_lambda_.7} parent=31 // pred_fallthru
        _
    $region32: #{_lambda_.7} parent=5 // pred_fallthru
      _
    %p249 = scmp.le.s32.totalorder 1, %s12
    %p250 = scmp.lt.s32.totalorder %s12, 3
    %p251 = pnand %p249, %p250
    %p252 = pneg %p251
    // Predicated region
    $region41: #{_lambda_.7} parent=5 // pred_check
      _
    $region42: #{_lambda_.7} parent=5 // pred_check_branch
      %254 = sbr.rel (%p251) target = $region44
    $region43: #{_lambda_.7} parent=5 // pred_region
      %s255 = ssub.s32 %s12, 1
      %s256 = smul.u32 2, %s22
      %p257 = scmp.lt.s32.totalorder %s21, 1
      %s258 = scalar_select %p257, %s21, 1
      %p259 = scmp.lt.s32.totalorder %s256, 1
      %s260 = scalar_select %p259, %s256, 1
      %s261 = smul.addr %s258, 4
      %s262 = sadd.s32 %s260, %s261
      %s263 = smul.addr %s262, 8
      %s264 = scalar_lea.vmem %s0, %s263
      %p265 = pneg %p52
      %p266 = pneg %p49
      %s267 = smul.u32 2, %s22
      %p268 = scmp.lt.s32.totalorder %s21, 1
      %s269 = scalar_select %p268, %s21, 1
      %p270 = scmp.lt.s32.totalorder %s267, 1
      %s271 = scalar_select %p270, %s267, 1
      %s272 = smul.addr %s269, 4
      %s273 = sadd.s32 %s271, %s272
      %s274 = smul.addr %s273, 8
      %s275 = scalar_lea.vmem %s1, %s274
      %p276 = pneg %p80
      %p277 = pneg %p77
      %p278 = pneg %p101
      %p279 = pneg %p98
      %p280 = pneg %p122
      %p281 = pneg %p119
      %p282 = pneg %p143
      %p283 = pneg %p140
      %p284 = pneg %p164
      %p285 = pneg %p161
      %p286 = pneg %p192
      %p287 = pneg %p189
      %s288 = smul.u32 2, %s22
      %p289 = scmp.lt.s32.totalorder %s21, 1
      %s290 = scalar_select %p289, %s21, 1
      %p291 = scmp.lt.s32.totalorder %s288, 1
      %s292 = scalar_select %p291, %s288, 1
      %s293 = smul.addr %s290, 4
      %s294 = sadd.s32 %s292, %s293
      %s295 = smul.addr %s294, 8
      %s296 = scalar_lea.vmem %s6, %s295
      %s297 = smul.u32 2, %s22
      %p298 = scmp.lt.s32.totalorder %s21, 1
      %s299 = scalar_select %p298, %s21, 1
      %p300 = scmp.lt.s32.totalorder %s297, 1
      %s301 = scalar_select %p300, %s297, 1
      %s302 = smul.addr %s299, 4
      %s303 = sadd.s32 %s301, %s302
      %s304 = smul.addr %s303, 8
      %s305 = scalar_lea.vmem %s0, %s304
      %s306 = smul.u32 2, %s22
      %s307 = smul.u32 2, %s22
      %p308 = scmp.lt.s32.totalorder %s21, 1
      %s309 = scalar_select %p308, %s21, 1
      %p310 = scmp.lt.s32.totalorder %s307, 1
      %s311 = scalar_select %p310, %s307, 1
      %s312 = smul.addr %s309, 4
      %s313 = sadd.s32 %s311, %s312
      %s314 = smul.addr %s313, 8
      %s315 = scalar_lea.vmem %s1, %s314
      %s316 = smul.u32 2, %s22
      %s317 = smul.u32 2, %s22
      %p318 = scmp.lt.s32.totalorder %s21, 1
      %s319 = scalar_select %p318, %s21, 1
      %p320 = scmp.lt.s32.totalorder %s317, 1
      %s321 = scalar_select %p320, %s317, 1
      %s322 = smul.addr %s319, 4
      %s323 = sadd.s32 %s321, %s322
      %s324 = smul.addr %s323, 8
      %s325 = scalar_lea.vmem %s6, %s324
      %s326 = smul.u32 2, %s22
      %v327 = vld [vmem:[%s305] sm:$0xff]
      %v328 = vld [vmem:[%s305 + $0x8] sm:$0xff]
      %v329 = vld [vmem:[%s305 + $0x10] sm:$0xff]
      %v330 = vld [vmem:[%s305 + $0x18] sm:$0xff]
      %331 = vst [vmem:[#allocation2] sm:$0xff] %v327
      %332 = vst [vmem:[#allocation2 + $0x8] sm:$0xff] %v328
      %333 = vst [vmem:[#allocation2 + $0x10] sm:$0xff] %v329
      %334 = vst [vmem:[#allocation2 + $0x18] sm:$0xff] %v330
      %v335 = vld [vmem:[%s315] sm:$0xff]
      %v336 = vld [vmem:[%s315 + $0x8] sm:$0xff]
      %v337 = vld [vmem:[%s315 + $0x10] sm:$0xff]
      %v338 = vld [vmem:[%s315 + $0x18] sm:$0xff]
      %339 = vst [vmem:[#allocation2 + $0x20] sm:$0xff] %v335
      %340 = vst [vmem:[#allocation2 + $0x28] sm:$0xff] %v336
      %341 = vst [vmem:[#allocation2 + $0x30] sm:$0xff] %v337
      %342 = vst [vmem:[#allocation2 + $0x38] sm:$0xff] %v338
      %v343 = vld [vmem:[%s2] sm:$0xff]
      %v344 = vld [vmem:[%s2 + $0x8] sm:$0xff]
      %v345 = vld [vmem:[%s2 + $0x10] sm:$0xff]
      %v346 = vld [vmem:[%s2 + $0x18] sm:$0xff]
      %v347 = vld [vmem:[#allocation2] sm:$0xff]
      %v348 = vld [vmem:[#allocation2 + $0x8] sm:$0xff]
      %v349 = vld [vmem:[#allocation2 + $0x10] sm:$0xff]
      %v350 = vld [vmem:[#allocation2 + $0x18] sm:$0xff]
      %v351 = vld [vmem:[#allocation2 + $0x20] sm:$0xff]
      %v352 = vld [vmem:[#allocation2 + $0x28] sm:$0xff]
      %v353 = vld [vmem:[#allocation2 + $0x30] sm:$0xff]
      %v354 = vld [vmem:[#allocation2 + $0x38] sm:$0xff]
      %v355 = vld [vmem:[%s3] sm:$0xff]
      %v356 = vld [vmem:[%s3 + $0x8] sm:$0xff]
      %v357 = vld [vmem:[%s3 + $0x10] sm:$0xff]
      %v358 = vld [vmem:[%s3 + $0x18] sm:$0xff]
      %360 = vset.pattern.permute.xlu0 0
      %361 = vperm.xlu0 %360, %v355
      %v362 = vpop.permute.xlu0 %361
      %365 = vset.pattern.permute.xlu0 0
      %366 = vperm.xlu0 %365, %v356
      %v367 = vpop.permute.xlu0 %366
      %370 = vset.pattern.permute.xlu0 0
      %371 = vperm.xlu0 %370, %v357
      %v372 = vpop.permute.xlu0 %371
      %375 = vset.pattern.permute.xlu0 0
      %376 = vperm.xlu0 %375, %v358
      %v377 = vpop.permute.xlu0 %376
      %vm379 = vcmask 261120
      %v381 = vsel %vm379, %v343, 0
      %v384 = vsel %vm379, %v344, 0
      %v387 = vsel %vm379, %v345, 0
      %v390 = vsel %vm379, %v346, 0
      %392 = vmatprep.subr.mxu0 %v348
      %393 = vmatpush1.msra.mxu0 %v347
      %394 = vmatprep.subr.mxu0 %v350
      %395 = vmatpush1.msra.mxu0 %v349
      %396 = vmatprep.subr.mxu0 %v352
      %397 = vmatpush1.msra.mxu0 %v351
      %398 = vmatprep.subr.mxu0 %v354
      %399 = vmatpush1.msra.mxu0 %v353
      %400 = vmatprep.subr.mxu0 0.0
      %401 = vmatpush1.msra.mxu0 0.0
      %402 = vmatprep.subr.mxu0 0.0
      %403 = vmatpush1.msra.mxu0 0.0
      %404 = vmatprep.subr.mxu0 0.0
      %405 = vmatpush1.msra.mxu0 0.0
      %406 = vmatprep.subr.mxu0 0.0
      %407 = vmatpush1.msra.mxu0 0.0
      %408 = vmatprep.subr.mxu0 0.0
      %409 = vmatpush1.msra.mxu0 0.0
      %410 = vmatprep.subr.mxu0 0.0
      %411 = vmatpush1.msra.mxu0 0.0
      %412 = vmatprep.subr.mxu0 0.0
      %413 = vmatpush1.msra.mxu0 0.0
      %414 = vmatprep.subr.mxu0 0.0
      %415 = vmatpush1.msra.mxu0 0.0
      %416 = vmatprep.subr.mxu0 0.0
      %417 = vmatpush1.msra.mxu0 0.0
      %418 = vmatprep.subr.mxu0 0.0
      %419 = vmatpush1.msra.mxu0 0.0
      %420 = vmatprep.subr.mxu0 0.0
      %421 = vmatpush1.msra.mxu0 0.0
      %422 = vmatprep.subr.mxu0 0.0
      %423 = vmatpush1.msra.mxu0 0.0
      %424 = vmatprep.subr.mxu0 0.0
      %425 = vmatpush1.msra.mxu0 0.0
      %426 = vmatprep.subr.mxu0 0.0
      %427 = vmatpush1.msra.mxu0 0.0
      %428 = vmatprep.subr.mxu0 0.0
      %429 = vmatpush1.msra.mxu0 0.0
      %430 = vmatprep.subr.mxu0 0.0
      %431 = vmatpush1.msra.mxu0 0.0
      %432 = vmatprep.subr.mxu0 0.0
      %433 = vmatpush1.msra.mxu0 0.0
      %434 = vmatprep.subr.mxu0 0.0
      %435 = vmatpush1.msra.mxu0 0.0
      %436 = vmatprep.subr.mxu0 0.0
      %437 = vmatpush1.msra.mxu0 0.0
      %438 = vmatprep.subr.mxu0 0.0
      %439 = vmatpush1.msra.mxu0 0.0
      %440 = vmatprep.subr.mxu0 0.0
      %441 = vmatpush1.msra.mxu0 0.0
      %442 = vmatprep.subr.mxu0 0.0
      %443 = vmatpush1.msra.mxu0 0.0
      %444 = vmatprep.subr.mxu0 0.0
      %445 = vmatpush1.msra.mxu0 0.0
      %446 = vmatprep.subr.mxu0 0.0
      %447 = vmatpush1.msra.mxu0 0.0
      %448 = vmatprep.subr.mxu0 0.0
      %449 = vmatpush1.msra.mxu0 0.0
      %450 = vmatprep.subr.mxu0 0.0
      %451 = vmatpush1.msra.mxu0 0.0
      %452 = vmatprep.subr.mxu0 0.0
      %453 = vmatpush1.msra.mxu0 0.0
      %454 = vmatprep.subr.mxu0 0.0
      %455 = vmatpush1.msra.mxu0 0.0
      %456 = vmatprep.mubr.f32.mxu0 0.0
      %457 = vmatmul.mubr.f32.gmra.mrb[0].mxu0 %v381
      %v458 = vpop.f32.mrb[0].mxu0
      %v459 = vadd.f32 %v362, %v458
      %v460 = vpop.f32.mrb[0].mxu0
      %v461 = vadd.f32 %v362, %v460
      %462 = vmatprep.mubr.f32.mxu0 0.0
      %463 = vmatmul.mubr.f32.gmra.mrb[0].mxu0 %v384
      %v464 = vpop.f32.mrb[0].mxu0
      %v465 = vadd.f32 %v367, %v464
      %v466 = vpop.f32.mrb[0].mxu0
      %v467 = vadd.f32 %v367, %v466
      %468 = vmatprep.mubr.f32.mxu0 0.0
      %469 = vmatmul.mubr.f32.gmra.mrb[0].mxu0 %v387
      %v470 = vpop.f32.mrb[0].mxu0
      %v471 = vadd.f32 %v372, %v470
      %v472 = vpop.f32.mrb[0].mxu0
      %v473 = vadd.f32 %v372, %v472
      %474 = vmatprep.mubr.f32.mxu0 0.0
      %475 = vmatmul.mubr.f32.gmra.mrb[0].mxu0 %v390
      %v476 = vpop.f32.mrb[0].mxu0
      %v477 = vadd.f32 %v377, %v476
      %v478 = vpop.f32.mrb[0].mxu0
      %v479 = vadd.f32 %v377, %v478
      %480 = vdwg.mxu0
      %v481 = vmul.f32 %v459, %v459
      %v482 = vmul.f32 %v461, %v461
      %v483 = vmul.f32 %v465, %v465
      %v484 = vmul.f32 %v467, %v467
      %v485 = vmul.f32 %v459, %v481
      %v486 = vmul.f32 %v461, %v482
      %v487 = vmul.f32 %v465, %v483
      %v488 = vmul.f32 %v467, %v484
      %v489 = vmul.f32 %v485, 0.044715
      %v490 = vmul.f32 %v486, 0.044715
      %v491 = vmul.f32 %v487, 0.044715
      %v492 = vmul.f32 %v488, 0.044715
      %v493 = vadd.f32 %v459, %v489
      %v494 = vadd.f32 %v461, %v490
      %v495 = vadd.f32 %v465, %v491
      %v496 = vadd.f32 %v467, %v492
      %v497 = vmul.f32 %v493, 0.7978846
      %v498 = vmul.f32 %v494, 0.7978846
      %v499 = vmul.f32 %v495, 0.7978846
      %v500 = vmul.f32 %v496, 0.7978846
      %v501 = vtanh.pop %v497
      %v502 = vtanh.pop %v498
      %v503 = vtanh.pop %v499
      %v504 = vtanh.pop %v500
      %v505 = vadd.f32 %v501, 1.0
      %v506 = vadd.f32 %v502, 1.0
      %v507 = vadd.f32 %v503, 1.0
      %v508 = vadd.f32 %v504, 1.0
      %v509 = vmul.f32 %v505, 0.5
      %v510 = vmul.f32 %v506, 0.5
      %v511 = vmul.f32 %v507, 0.5
      %v512 = vmul.f32 %v508, 0.5
      %v513 = vmul.f32 %v459, %v509
      %v514 = vmul.f32 %v461, %v510
      %v515 = vmul.f32 %v465, %v511
      %v516 = vmul.f32 %v467, %v512
      %v517 = vld [vmem:[%s4] sm:$0xff]
      %v518 = vld [vmem:[%s4 + $0x8] sm:$0xff]
      %v519 = vld [vmem:[%s5] sm:$0xff]
      %v520 = vld [vmem:[%s5 + $0x8] sm:$0xff]
      %522 = vset.pattern.permute.xlu0 0
      %523 = vperm.xlu0 %522, %v519
      %v524 = vpop.permute.xlu0 %523
      %527 = vset.pattern.permute.xlu0 0
      %528 = vperm.xlu0 %527, %v520
      %v529 = vpop.permute.xlu0 %528
      %vm531 = vcmask 130048
      %v533 = vsel %vm531, %v517, 0
      %v536 = vsel %vm531, %v518, 0
      %538 = vmatprep.subr.mxu0 %v514
      %539 = vmatpush1.msra.mxu0 %v513
      %540 = vmatprep.subr.mxu0 %v516
      %541 = vmatpush1.msra.mxu0 %v515
      %542 = vmatprep.subr.mxu0 0.0
      %543 = vmatpush1.msra.mxu0 0.0
      %544 = vmatprep.subr.mxu0 0.0
      %545 = vmatpush1.msra.mxu0 0.0
      %546 = vmatprep.subr.mxu0 0.0
      %547 = vmatpush1.msra.mxu0 0.0
      %548 = vmatprep.subr.mxu0 0.0
      %549 = vmatpush1.msra.mxu0 0.0
      %550 = vmatprep.subr.mxu0 0.0
      %551 = vmatpush1.msra.mxu0 0.0
      %552 = vmatprep.subr.mxu0 0.0
      %553 = vmatpush1.msra.mxu0 0.0
      %554 = vmatprep.subr.mxu0 0.0
      %555 = vmatpush1.msra.mxu0 0.0
      %556 = vmatprep.subr.mxu0 0.0
      %557 = vmatpush1.msra.mxu0 0.0
      %558 = vmatprep.subr.mxu0 0.0
      %559 = vmatpush1.msra.mxu0 0.0
      %560 = vmatprep.subr.mxu0 0.0
      %561 = vmatpush1.msra.mxu0 0.0
      %562 = vmatprep.subr.mxu0 0.0
      %563 = vmatpush1.msra.mxu0 0.0
      %564 = vmatprep.subr.mxu0 0.0
      %565 = vmatpush1.msra.mxu0 0.0
      %566 = vmatprep.subr.mxu0 0.0
      %567 = vmatpush1.msra.mxu0 0.0
      %568 = vmatprep.subr.mxu0 0.0
      %569 = vmatpush1.msra.mxu0 0.0
      %570 = vmatprep.subr.mxu0 0.0
      %571 = vmatpush1.msra.mxu0 0.0
      %572 = vmatprep.subr.mxu0 0.0
      %573 = vmatpush1.msra.mxu0 0.0
      %574 = vmatprep.subr.mxu0 0.0
      %575 = vmatpush1.msra.mxu0 0.0
      %576 = vmatprep.subr.mxu0 0.0
      %577 = vmatpush1.msra.mxu0 0.0
      %578 = vmatprep.subr.mxu0 0.0
      %579 = vmatpush1.msra.mxu0 0.0
      %580 = vmatprep.subr.mxu0 0.0
      %581 = vmatpush1.msra.mxu0 0.0
      %582 = vmatprep.subr.mxu0 0.0
      %583 = vmatpush1.msra.mxu0 0.0
      %584 = vmatprep.subr.mxu0 0.0
      %585 = vmatpush1.msra.mxu0 0.0
      %586 = vmatprep.subr.mxu0 0.0
      %587 = vmatpush1.msra.mxu0 0.0
      %588 = vmatprep.subr.mxu0 0.0
      %589 = vmatpush1.msra.mxu0 0.0
      %590 = vmatprep.subr.mxu0 0.0
      %591 = vmatpush1.msra.mxu0 0.0
      %592 = vmatprep.subr.mxu0 0.0
      %593 = vmatpush1.msra.mxu0 0.0
      %594 = vmatprep.subr.mxu0 0.0
      %595 = vmatpush1.msra.mxu0 0.0
      %596 = vmatprep.subr.mxu0 0.0
      %597 = vmatpush1.msra.mxu0 0.0
      %598 = vmatprep.subr.mxu0 0.0
      %599 = vmatpush1.msra.mxu0 0.0
      %600 = vmatprep.subr.mxu0 0.0
      %601 = vmatpush1.msra.mxu0 0.0
      %602 = vmatprep.mubr.f32.mxu0 0.0
      %603 = vmatmul.mubr.f32.gmra.mrb[0].mxu0 %v533
      %v604 = vpop.f32.mrb[0].mxu0
      %v605 = vadd.f32 %v524, %v604
      %v606 = vpop.f32.mrb[0].mxu0
      %v607 = vadd.f32 %v524, %v606
      %608 = vmatprep.mubr.f32.mxu0 0.0
      %609 = vmatmul.mubr.f32.gmra.mrb[0].mxu0 %v536
      %v610 = vpop.f32.mrb[0].mxu0
      %v611 = vadd.f32 %v529, %v610
      %v612 = vpop.f32.mrb[0].mxu0
      %v613 = vadd.f32 %v529, %v612
      %614 = vdwg.mxu0
      %v615 = vadd.f32 %v605, %v471
      %v616 = vadd.f32 %v607, %v473
      %v617 = vadd.f32 %v611, %v477
      %v618 = vadd.f32 %v613, %v479
      %v619 = vmul.f32 %v615, %v615
      %v620 = vmul.f32 %v616, %v616
      %v621 = vmul.f32 %v617, %v617
      %v622 = vmul.f32 %v618, %v618
      %v623 = vmul.f32 %v615, %v619
      %v624 = vmul.f32 %v616, %v620
      %v625 = vmul.f32 %v617, %v621
      %v626 = vmul.f32 %v618, %v622
      %v627 = vmul.f32 %v623, 0.044715
      %v628 = vmul.f32 %v624, 0.044715
      %v629 = vmul.f32 %v625, 0.044715
      %v630 = vmul.f32 %v626, 0.044715
      %v631 = vadd.f32 %v615, %v627
      %v632 = vadd.f32 %v616, %v628
      %v633 = vadd.f32 %v617, %v629
      %v634 = vadd.f32 %v618, %v630
      %v635 = vmul.f32 %v631, 0.7978846
      %v636 = vmul.f32 %v632, 0.7978846
      %v637 = vmul.f32 %v633, 0.7978846
      %v638 = vmul.f32 %v634, 0.7978846
      %v639 = vtanh.pop %v635
      %v640 = vtanh.pop %v636
      %v641 = vtanh.pop %v637
      %v642 = vtanh.pop %v638
      %v643 = vadd.f32 %v639, 1.0
      %v644 = vadd.f32 %v640, 1.0
      %v645 = vadd.f32 %v641, 1.0
      %v646 = vadd.f32 %v642, 1.0
      %v647 = vmul.f32 %v643, 0.5
      %v648 = vmul.f32 %v644, 0.5
      %v649 = vmul.f32 %v645, 0.5
      %v650 = vmul.f32 %v646, 0.5
      %v651 = vmul.f32 %v615, %v647
      %v652 = vmul.f32 %v616, %v648
      %v653 = vmul.f32 %v617, %v649
      %v654 = vmul.f32 %v618, %v650
      %655 = vst [vmem:[%s325] sm:$0xff] %v651
      %656 = vst [vmem:[%s325 + $0x8] sm:$0xff] %v652
      %657 = vst [vmem:[%s325 + $0x10] sm:$0xff] %v653
      %658 = vst [vmem:[%s325 + $0x18] sm:$0xff] %v654
      %s659 = smul.u32 2, %s22
      %p660 = scmp.lt.s32.totalorder %s21, 1
      %s661 = scalar_select %p660, %s21, 1
      %p662 = scmp.lt.s32.totalorder %s659, 1
      %s663 = scalar_select %p662, %s659, 1
      %s664 = smul.addr %s661, 4
      %s665 = sadd.s32 %s663, %s664
      %s666 = smul.addr %s665, 8
      %s667 = scalar_lea.vmem %s6, %s666
      // Predicated region
      $region45: #{_lambda_.7} parent=43 // pred_check
        %p668 = pneg %p189
      $region46: #{_lambda_.7} parent=43 // pred_check_branch
        %670 = sbr.rel (%p668) target = $region48
      $region47: #{_lambda_.7} parent=43 // pred_region
        %s671 = smul.u32 2, %s22
      $region48: #{_lambda_.7} parent=43 // pred_fallthru
        _
    $region44: #{_lambda_.7} parent=5 // pred_fallthru
      _
    %p672 = scmp.le.s32.totalorder 2, %s12
    // Predicated region
    $region49: #{_lambda_.7} parent=5 // pred_check
      %p673 = pneg %p672
    $region50: #{_lambda_.7} parent=5 // pred_check_branch
      %675 = sbr.rel (%p673) target = $region52
    $region51: #{_lambda_.7} parent=5 // pred_region
      %s676 = ssub.s32 %s12, 2
      // Predicated region
      $region53: #{_lambda_.7} parent=51 // pred_check
        %p677 = pneg %p195
      $region54: #{_lambda_.7} parent=51 // pred_check_branch
        %679 = sbr.rel (%p677) target = $region56
      $region55: #{_lambda_.7} parent=51 // pred_region
        %s680 = smul.u32 2, %s24
        %p681 = scmp.lt.s32.totalorder %s23, 1
        %s682 = scalar_select %p681, %s23, 1
        %p683 = scmp.lt.s32.totalorder %s680, 1
        %s684 = scalar_select %p683, %s680, 1
        %s685 = smul.addr %s682, 4
        %s686 = sadd.s32 %s684, %s685
        %s687 = smul.addr %s686, 8
        %s688 = scalar_lea.vmem %s6, %s687
      $region56: #{_lambda_.7} parent=51 // pred_fallthru
        _
    $region52: #{_lambda_.7} parent=5 // pred_fallthru
      _
  $region6: #{_lambda_.7} parent=0 // loop_footer
    %s16 = sadd.s32 1, %s12
  $region7: #{_lambda_.7} parent=0 // loop_footer_branch
    %11 = sbr.rel target = $region3
  $region8: #{_lambda_.7} parent=0 // loop_exit
    _

// kernel: _lambda_.8
$region0: #{_lambda_.8}
  #allocation0 [shape = 'u32[]', space=smem, size = 0x4, offset = 0x4, fixed_abs, tag = 'smem constant byte address 0x4 - core index']
  #allocation1 [shape = 'u32[144,128]{1,0:T(1,128)}', space=vmem, size = 0x12000, scoped, tag = 'internal scratch']
  #allocation2 [shape = 'f32[32,256]{1,0:T(8,128)}', space=vmem, size = 0x8000, scoped, tag = 'scratch operand']
  %s0 = inlined_call_operand.vmem [shape: f32[2,16,256], index: 0, kind: input, shape index: {}]
  %s1 = inlined_call_operand.vmem [shape: f32[2,16,256], index: 1, kind: input, shape index: {}]
  %s2 = inlined_call_operand.vmem [shape: f32[32,32], index: 2, kind: input, shape index: {}]
  %s3 = inlined_call_operand.vmem [shape: f32[32,1], index: 3, kind: input, shape index: {}]
  %s4 = inlined_call_operand.vmem [shape: f32[16,16], index: 4, kind: input, shape index: {}]
  %s5 = inlined_call_operand.vmem [shape: f32[16,1], index: 5, kind: input, shape index: {}]
  %s6 = inlined_call_operand.vmem [shape: f32[2,16,256], index: 6, kind: output, shape index: {}]
  %s7 = sld [smem:[#allocation0]]
  $region57: #{_lambda_.8} parent=0
    _
  %s9 = ssub.s32 1, %s7
  %s10 = scalar_select 0, %s9, %s7
  loop: start=0, step=1, limit=4
  $region2: #{_lambda_.8} parent=0 // loop_pre_header
    _
  $region3: #{_lambda_.8} parent=0 // loop_header
    %s12 = sphi 0, %s16
    %p13 = scmp.ge.s32.totalorder %s12, 4
    %s19 = sphi 0, %s31
    %s20 = sphi 0, %s27
    %s21 = sphi 0, %s19
    %s22 = sphi 0, %s20
    %s23 = sphi 0, %s21
    %s24 = sphi 0, %s22
    %s36 = sphi 0, %s38
    %s39 = sphi 0, %s36
    %s40 = sphi 0, %s39
    %s56 = sphi 0, %s40
    %s64 = sphi 0, %s66
    %s67 = sphi 0, %s64
    %s68 = sphi 0, %s67
    %s84 = sphi 0, %s68
    %s88 = sphi 0, %s88
    %s90 = sphi 0, %s88
    %s91 = sphi 0, %s90
    %s105 = sphi 0, %s91
    %s109 = sphi 0, %s109
    %s111 = sphi 0, %s109
    %s112 = sphi 0, %s111
    %s126 = sphi 0, %s112
    %s130 = sphi 0, %s130
    %s132 = sphi 0, %s130
    %s133 = sphi 0, %s132
    %s147 = sphi 0, %s133
    %s151 = sphi 0, %s151
    %s153 = sphi 0, %s151
    %s154 = sphi 0, %s153
    %s168 = sphi 0, %s154
    %s176 = sphi 0, %s178
    %s179 = sphi 0, %s176
    %s180 = sphi 0, %s179
    %s196 = sphi 0, %s180
  $region4: #{_lambda_.8} parent=0 // loop_header_branch
    %15 = sbr.rel (%p13) target = $region8
  $region5: #{_lambda_.8} parent=0 // loop_body
    %s17 = ssub.s32 %s12, 1
    %s18 = ssub.s32 %s12, 2
    %s25 = sadd.s32 1, %s20
    %p26 = scmp.ge.s32.totalorder %s25, 1
    %s27 = scalar_select %p26, 0, %s25
    %s28 = sadd.s32 1, %s19
    %s29 = scalar_select %p26, %s28, %s19
    %p30 = scmp.ge.s32.totalorder %s29, 2
    %s31 = scalar_select %p30, 0, %s29
    %s32 = ssub.s32 %s19, %s31
    %s33 = ssub.s32 %s20, %s27
    %s34 = sor.u32 %s32, %s33
    %p35 = scmp.eq.s32.totalorder %s34, 0
    %s37 = sadd.s32 %s36, 1
    %s38 = scalar_select %p35, %s36, %s37
    %p41 = pneg %p35
    %p42 = scmp.eq.s32.totalorder %s12, 1
    %p43 = por %p41, %p42
    %p44 = scmp.ne.s32.totalorder %s36, %s39
    %p45 = scmp.eq.s32.totalorder %s12, 0
    %p46 = por %p44, %p45
    %p47 = scmp.ne.s32.totalorder %s36, %s39
    %p48 = scmp.eq.s32.totalorder %s17, 1
    %p49 = por %p47, %p48
    %p50 = scmp.ne.s32.totalorder %s39, %s40
    %p51 = scmp.eq.s32.totalorder %s17, 0
    %p52 = por %p50, %p51
    %p53 = scmp.ne.s32.totalorder %s39, %s40
    %p54 = scmp.eq.s32.totalorder %s18, 1
    %p55 = por %p53, %p54
    %p57 = scmp.ne.s32.totalorder %s40, %s56
    %p58 = scmp.eq.s32.totalorder %s18, 0
    %p59 = por %p57, %p58
    %s60 = ssub.s32 %s19, %s31
    %s61 = ssub.s32 %s20, %s27
    %s62 = sor.u32 %s60, %s61
    %p63 = scmp.eq.s32.totalorder %s62, 0
    %s65 = sadd.s32 %s64, 1
    %s66 = scalar_select %p63, %s64, %s65
    %p69 = pneg %p63
    %p70 = scmp.eq.s32.totalorder %s12, 1
    %p71 = por %p69, %p70
    %p72 = scmp.ne.s32.totalorder %s64, %s67
    %p73 = scmp.eq.s32.totalorder %s12, 0
    %p74 = por %p72, %p73
    %p75 = scmp.ne.s32.totalorder %s64, %s67
    %p76 = scmp.eq.s32.totalorder %s17, 1
    %p77 = por %p75, %p76
    %p78 = scmp.ne.s32.totalorder %s67, %s68
    %p79 = scmp.eq.s32.totalorder %s17, 0
    %p80 = por %p78, %p79
    %p81 = scmp.ne.s32.totalorder %s67, %s68
    %p82 = scmp.eq.s32.totalorder %s18, 1
    %p83 = por %p81, %p82
    %p85 = scmp.ne.s32.totalorder %s68, %s84
    %p86 = scmp.eq.s32.totalorder %s18, 0
    %p87 = por %p85, %p86
    %s89 = sadd.s32 %s88, 1
    %p92 = scmp.eq.s32.totalorder %s12, 1
    %p93 = scmp.ne.s32.totalorder %s88, %s90
    %p94 = scmp.eq.s32.totalorder %s12, 0
    %p95 = por %p93, %p94
    %p96 = scmp.ne.s32.totalorder %s88, %s90
    %p97 = scmp.eq.s32.totalorder %s17, 1
    %p98 = por %p96, %p97
    %p99 = scmp.ne.s32.totalorder %s90, %s91
    %p100 = scmp.eq.s32.totalorder %s17, 0
    %p101 = por %p99, %p100
    %p102 = scmp.ne.s32.totalorder %s90, %s91
    %p103 = scmp.eq.s32.totalorder %s18, 1
    %p104 = por %p102, %p103
    %p106 = scmp.ne.s32.totalorder %s91, %s105
    %p107 = scmp.eq.s32.totalorder %s18, 0
    %p108 = por %p106, %p107
    %s110 = sadd.s32 %s109, 1
    %p113 = scmp.eq.s32.totalorder %s12, 1
    %p114 = scmp.ne.s32.totalorder %s109, %s111
    %p115 = scmp.eq.s32.totalorder %s12, 0
    %p116 = por %p114, %p115
    %p117 = scmp.ne.s32.totalorder %s109, %s111
    %p118 = scmp.eq.s32.totalorder %s17, 1
    %p119 = por %p117, %p118
    %p120 = scmp.ne.s32.totalorder %s111, %s112
    %p121 = scmp.eq.s32.totalorder %s17, 0
    %p122 = por %p120, %p121
    %p123 = scmp.ne.s32.totalorder %s111, %s112
    %p124 = scmp.eq.s32.totalorder %s18, 1
    %p125 = por %p123, %p124
    %p127 = scmp.ne.s32.totalorder %s112, %s126
    %p128 = scmp.eq.s32.totalorder %s18, 0
    %p129 = por %p127, %p128
    %s131 = sadd.s32 %s130, 1
    %p134 = scmp.eq.s32.totalorder %s12, 1
    %p135 = scmp.ne.s32.totalorder %s130, %s132
    %p136 = scmp.eq.s32.totalorder %s12, 0
    %p137 = por %p135, %p136
    %p138 = scmp.ne.s32.totalorder %s130, %s132
    %p139 = scmp.eq.s32.totalorder %s17, 1
    %p140 = por %p138, %p139
    %p141 = scmp.ne.s32.totalorder %s132, %s133
    %p142 = scmp.eq.s32.totalorder %s17, 0
    %p143 = por %p141, %p142
    %p144 = scmp.ne.s32.totalorder %s132, %s133
    %p145 = scmp.eq.s32.totalorder %s18, 1
    %p146 = por %p144, %p145
    %p148 = scmp.ne.s32.totalorder %s133, %s147
    %p149 = scmp.eq.s32.totalorder %s18, 0
    %p150 = por %p148, %p149
    %s152 = sadd.s32 %s151, 1
    %p155 = scmp.eq.s32.totalorder %s12, 1
    %p156 = scmp.ne.s32.totalorder %s151, %s153
    %p157 = scmp.eq.s32.totalorder %s12, 0
    %p158 = por %p156, %p157
    %p159 = scmp.ne.s32.totalorder %s151, %s153
    %p160 = scmp.eq.s32.totalorder %s17, 1
    %p161 = por %p159, %p160
    %p162 = scmp.ne.s32.totalorder %s153, %s154
    %p163 = scmp.eq.s32.totalorder %s17, 0
    %p164 = por %p162, %p163
    %p165 = scmp.ne.s32.totalorder %s153, %s154
    %p166 = scmp.eq.s32.totalorder %s18, 1
    %p167 = por %p165, %p166
    %p169 = scmp.ne.s32.totalorder %s154, %s168
    %p170 = scmp.eq.s32.totalorder %s18, 0
    %p171 = por %p169, %p170
    %s172 = ssub.s32 %s19, %s31
    %s173 = ssub.s32 %s20, %s27
    %s174 = sor.u32 %s172, %s173
    %p175 = scmp.eq.s32.totalorder %s174, 0
    %s177 = sadd.s32 %s176, 1
    %s178 = scalar_select %p175, %s176, %s177
    %p181 = pneg %p175
    %p182 = scmp.eq.s32.totalorder %s12, 1
    %p183 = por %p181, %p182
    %p184 = scmp.ne.s32.totalorder %s176, %s179
    %p185 = scmp.eq.s32.totalorder %s12, 0
    %p186 = por %p184, %p185
    %p187 = scmp.ne.s32.totalorder %s176, %s179
    %p188 = scmp.eq.s32.totalorder %s17, 1
    %p189 = por %p187, %p188
    %p190 = scmp.ne.s32.totalorder %s179, %s180
    %p191 = scmp.eq.s32.totalorder %s17, 0
    %p192 = por %p190, %p191
    %p193 = scmp.ne.s32.totalorder %s179, %s180
    %p194 = scmp.eq.s32.totalorder %s18, 1
    %p195 = por %p193, %p194
    %p197 = scmp.ne.s32.totalorder %s180, %s196
    %p198 = scmp.eq.s32.totalorder %s18, 0
    %p199 = por %p197, %p198
    %p200 = scmp.le.s32.totalorder 1, %s12
    %p201 = scmp.lt.s32.totalorder %s12, 3
    %p202 = pnand %p200, %p201
    %p203 = pneg %p202
    // Predicated region
    $region9: #{_lambda_.8} parent=5 // pred_check
      _
    $region10: #{_lambda_.8} parent=5 // pred_check_branch
      %205 = sbr.rel (%p202) target = $region12
    $region11: #{_lambda_.8} parent=5 // pred_region
      %s206 = ssub.s32 %s12, 1
      // Predicated region
      $region13: #{_lambda_.8} parent=11 // pred_check
        %p207 = pneg %p101
      $region14: #{_lambda_.8} parent=11 // pred_check_branch
        %209 = sbr.rel (%p207) target = $region16
      $region15: #{_lambda_.8} parent=11 // pred_region
        _
      $region16: #{_lambda_.8} parent=11 // pred_fallthru
        _
      // Predicated region
      $region17: #{_lambda_.8} parent=11 // pred_check
        %p210 = pneg %p122
      $region18: #{_lambda_.8} parent=11 // pred_check_branch
        %212 = sbr.rel (%p210) target = $region20
      $region19: #{_lambda_.8} parent=11 // pred_region
        _
      $region20: #{_lambda_.8} parent=11 // pred_fallthru
        _
      // Predicated region
      $region21: #{_lambda_.8} parent=11 // pred_check
        %p213 = pneg %p143
      $region22: #{_lambda_.8} parent=11 // pred_check_branch
        %215 = sbr.rel (%p213) target = $region24
      $region23: #{_lambda_.8} parent=11 // pred_region
        _
      $region24: #{_lambda_.8} parent=11 // pred_fallthru
        _
      // Predicated region
      $region25: #{_lambda_.8} parent=11 // pred_check
        %p216 = pneg %p164
      $region26: #{_lambda_.8} parent=11 // pred_check_branch
        %218 = sbr.rel (%p216) target = $region28
      $region27: #{_lambda_.8} parent=11 // pred_region
        _
      $region28: #{_lambda_.8} parent=11 // pred_fallthru
        _
    $region12: #{_lambda_.8} parent=5 // pred_fallthru
      _
    %p219 = scmp.lt.s32.totalorder %s12, 2
    // Predicated region
    $region29: #{_lambda_.8} parent=5 // pred_check
      %p220 = pneg %p219
    $region30: #{_lambda_.8} parent=5 // pred_check_branch
      %222 = sbr.rel (%p220) target = $region32
    $region31: #{_lambda_.8} parent=5 // pred_region
      // Predicated region
      $region33: #{_lambda_.8} parent=31 // pred_check
        %p223 = pneg %p46
      $region34: #{_lambda_.8} parent=31 // pred_check_branch
        %225 = sbr.rel (%p223) target = $region36
      $region35: #{_lambda_.8} parent=31 // pred_region
        %s226 = smul.u32 2, %s20
        %p227 = scmp.lt.s32.totalorder %s19, 1
        %s228 = scalar_select %p227, %s19, 1
        %p229 = scmp.lt.s32.totalorder %s226, 1
        %s230 = scalar_select %p229, %s226, 1
        %s231 = smul.addr %s228, 4
        %s232 = sadd.s32 %s230, %s231
        %s233 = smul.addr %s232, 8
        %s234 = scalar_lea.vmem %s0, %s233
        %s235 = smul.u32 2, %s20
      $region36: #{_lambda_.8} parent=31 // pred_fallthru
        _
      // Predicated region
      $region37: #{_lambda_.8} parent=31 // pred_check
        %p236 = pneg %p74
      $region38: #{_lambda_.8} parent=31 // pred_check_branch
        %238 = sbr.rel (%p236) target = $region40
      $region39: #{_lambda_.8} parent=31 // pred_region
        %s239 = smul.u32 2, %s20
        %p240 = scmp.lt.s32.totalorder %s19, 1
        %s241 = scalar_select %p240, %s19, 1
        %p242 = scmp.lt.s32.totalorder %s239, 1
        %s243 = scalar_select %p242, %s239, 1
        %s244 = smul.addr %s241, 4
        %s245 = sadd.s32 %s243, %s244
        %s246 = smul.addr %s245, 8
        %s247 = scalar_lea.vmem %s1, %s246
        %s248 = smul.u32 2, %s20
      $region40: #{_lambda_.8} parent=31 // pred_fallthru
        _
    $region32: #{_lambda_.8} parent=5 // pred_fallthru
      _
    %p249 = scmp.le.s32.totalorder 1, %s12
    %p250 = scmp.lt.s32.totalorder %s12, 3
    %p251 = pnand %p249, %p250
    %p252 = pneg %p251
    // Predicated region
    $region41: #{_lambda_.8} parent=5 // pred_check
      _
    $region42: #{_lambda_.8} parent=5 // pred_check_branch
      %254 = sbr.rel (%p251) target = $region44
    $region43: #{_lambda_.8} parent=5 // pred_region
      %s255 = ssub.s32 %s12, 1
      %s256 = smul.u32 2, %s22
      %p257 = scmp.lt.s32.totalorder %s21, 1
      %s258 = scalar_select %p257, %s21, 1
      %p259 = scmp.lt.s32.totalorder %s256, 1
      %s260 = scalar_select %p259, %s256, 1
      %s261 = smul.addr %s258, 4
      %s262 = sadd.s32 %s260, %s261
      %s263 = smul.addr %s262, 8
      %s264 = scalar_lea.vmem %s0, %s263
      %p265 = pneg %p52
      %p266 = pneg %p49
      %s267 = smul.u32 2, %s22
      %p268 = scmp.lt.s32.totalorder %s21, 1
      %s269 = scalar_select %p268, %s21, 1
      %p270 = scmp.lt.s32.totalorder %s267, 1
      %s271 = scalar_select %p270, %s267, 1
      %s272 = smul.addr %s269, 4
      %s273 = sadd.s32 %s271, %s272
      %s274 = smul.addr %s273, 8
      %s275 = scalar_lea.vmem %s1, %s274
      %p276 = pneg %p80
      %p277 = pneg %p77
      %p278 = pneg %p101
      %p279 = pneg %p98
      %p280 = pneg %p122
      %p281 = pneg %p119
      %p282 = pneg %p143
      %p283 = pneg %p140
      %p284 = pneg %p164
      %p285 = pneg %p161
      %p286 = pneg %p192
      %p287 = pneg %p189
      %s288 = smul.u32 2, %s22
      %p289 = scmp.lt.s32.totalorder %s21, 1
      %s290 = scalar_select %p289, %s21, 1
      %p291 = scmp.lt.s32.totalorder %s288, 1
      %s292 = scalar_select %p291, %s288, 1
      %s293 = smul.addr %s290, 4
      %s294 = sadd.s32 %s292, %s293
      %s295 = smul.addr %s294, 8
      %s296 = scalar_lea.vmem %s6, %s295
      %s297 = smul.u32 2, %s22
      %p298 = scmp.lt.s32.totalorder %s21, 1
      %s299 = scalar_select %p298, %s21, 1
      %p300 = scmp.lt.s32.totalorder %s297, 1
      %s301 = scalar_select %p300, %s297, 1
      %s302 = smul.addr %s299, 4
      %s303 = sadd.s32 %s301, %s302
      %s304 = smul.addr %s303, 8
      %s305 = scalar_lea.vmem %s0, %s304
      %s306 = smul.u32 2, %s22
      %s307 = smul.u32 2, %s22
      %p308 = scmp.lt.s32.totalorder %s21, 1
      %s309 = scalar_select %p308, %s21, 1
      %p310 = scmp.lt.s32.totalorder %s307, 1
      %s311 = scalar_select %p310, %s307, 1
      %s312 = smul.addr %s309, 4
      %s313 = sadd.s32 %s311, %s312
      %s314 = smul.addr %s313, 8
      %s315 = scalar_lea.vmem %s1, %s314
      %s316 = smul.u32 2, %s22
      %s317 = smul.u32 2, %s22
      %p318 = scmp.lt.s32.totalorder %s21, 1
      %s319 = scalar_select %p318, %s21, 1
      %p320 = scmp.lt.s32.totalorder %s317, 1
      %s321 = scalar_select %p320, %s317, 1
      %s322 = smul.addr %s319, 4
      %s323 = sadd.s32 %s321, %s322
      %s324 = smul.addr %s323, 8
      %s325 = scalar_lea.vmem %s6, %s324
      %s326 = smul.u32 2, %s22
      %v327 = vld [vmem:[%s305] sm:$0xff]
      %v328 = vld [vmem:[%s305 + $0x8] sm:$0xff]
      %v329 = vld [vmem:[%s305 + $0x10] sm:$0xff]
      %v330 = vld [vmem:[%s305 + $0x18] sm:$0xff]
      %331 = vst [vmem:[#allocation2] sm:$0xff] %v327
      %332 = vst [vmem:[#allocation2 + $0x8] sm:$0xff] %v328
      %333 = vst [vmem:[#allocation2 + $0x10] sm:$0xff] %v329
      %334 = vst [vmem:[#allocation2 + $0x18] sm:$0xff] %v330
      %v335 = vld [vmem:[%s315] sm:$0xff]
      %v336 = vld [vmem:[%s315 + $0x8] sm:$0xff]
      %v337 = vld [vmem:[%s315 + $0x10] sm:$0xff]
      %v338 = vld [vmem:[%s315 + $0x18] sm:$0xff]
      %339 = vst [vmem:[#allocation2 + $0x20] sm:$0xff] %v335
      %340 = vst [vmem:[#allocation2 + $0x28] sm:$0xff] %v336
      %341 = vst [vmem:[#allocation2 + $0x30] sm:$0xff] %v337
      %342 = vst [vmem:[#allocation2 + $0x38] sm:$0xff] %v338
      %v343 = vld [vmem:[%s2] sm:$0xff]
      %v344 = vld [vmem:[%s2 + $0x8] sm:$0xff]
      %v345 = vld [vmem:[%s2 + $0x10] sm:$0xff]
      %v346 = vld [vmem:[%s2 + $0x18] sm:$0xff]
      %v347 = vld [vmem:[#allocation2] sm:$0xff]
      %v348 = vld [vmem:[#allocation2 + $0x8] sm:$0xff]
      %v349 = vld [vmem:[#allocation2 + $0x10] sm:$0xff]
      %v350 = vld [vmem:[#allocation2 + $0x18] sm:$0xff]
      %v351 = vld [vmem:[#allocation2 + $0x20] sm:$0xff]
      %v352 = vld [vmem:[#allocation2 + $0x28] sm:$0xff]
      %v353 = vld [vmem:[#allocation2 + $0x30] sm:$0xff]
      %v354 = vld [vmem:[#allocation2 + $0x38] sm:$0xff]
      %v355 = vld [vmem:[%s3] sm:$0xff]
      %v356 = vld [vmem:[%s3 + $0x8] sm:$0xff]
      %v357 = vld [vmem:[%s3 + $0x10] sm:$0xff]
      %v358 = vld [vmem:[%s3 + $0x18] sm:$0xff]
      %360 = vset.pattern.permute.xlu0 0
      %361 = vperm.xlu0 %360, %v355
      %v362 = vpop.permute.xlu0 %361
      %365 = vset.pattern.permute.xlu0 0
      %366 = vperm.xlu0 %365, %v356
      %v367 = vpop.permute.xlu0 %366
      %370 = vset.pattern.permute.xlu0 0
      %371 = vperm.xlu0 %370, %v357
      %v372 = vpop.permute.xlu0 %371
      %375 = vset.pattern.permute.xlu0 0
      %376 = vperm.xlu0 %375, %v358
      %v377 = vpop.permute.xlu0 %376
      %vm379 = vcmask 261120
      %v381 = vsel %vm379, %v343, 0
      %v384 = vsel %vm379, %v344, 0
      %v387 = vsel %vm379, %v345, 0
      %v390 = vsel %vm379, %v346, 0
      %392 = vmatprep.subr.mxu0 %v348
      %393 = vmatpush1.msra.mxu0 %v347
      %394 = vmatprep.subr.mxu0 %v350
      %395 = vmatpush1.msra.mxu0 %v349
      %396 = vmatprep.subr.mxu0 %v352
      %397 = vmatpush1.msra.mxu0 %v351
      %398 = vmatprep.subr.mxu0 %v354
      %399 = vmatpush1.msra.mxu0 %v353
      %400 = vmatprep.subr.mxu0 0.0
      %401 = vmatpush1.msra.mxu0 0.0
      %402 = vmatprep.subr.mxu0 0.0
      %403 = vmatpush1.msra.mxu0 0.0
      %404 = vmatprep.subr.mxu0 0.0
      %405 = vmatpush1.msra.mxu0 0.0
      %406 = vmatprep.subr.mxu0 0.0
      %407 = vmatpush1.msra.mxu0 0.0
      %408 = vmatprep.subr.mxu0 0.0
      %409 = vmatpush1.msra.mxu0 0.0
      %410 = vmatprep.subr.mxu0 0.0
      %411 = vmatpush1.msra.mxu0 0.0
      %412 = vmatprep.subr.mxu0 0.0
      %413 = vmatpush1.msra.mxu0 0.0
      %414 = vmatprep.subr.mxu0 0.0
      %415 = vmatpush1.msra.mxu0 0.0
      %416 = vmatprep.subr.mxu0 0.0
      %417 = vmatpush1.msra.mxu0 0.0
      %418 = vmatprep.subr.mxu0 0.0
      %419 = vmatpush1.msra.mxu0 0.0
      %420 = vmatprep.subr.mxu0 0.0
      %421 = vmatpush1.msra.mxu0 0.0
      %422 = vmatprep.subr.mxu0 0.0
      %423 = vmatpush1.msra.mxu0 0.0
      %424 = vmatprep.subr.mxu0 0.0
      %425 = vmatpush1.msra.mxu0 0.0
      %426 = vmatprep.subr.mxu0 0.0
      %427 = vmatpush1.msra.mxu0 0.0
      %428 = vmatprep.subr.mxu0 0.0
      %429 = vmatpush1.msra.mxu0 0.0
      %430 = vmatprep.subr.mxu0 0.0
      %431 = vmatpush1.msra.mxu0 0.0
      %432 = vmatprep.subr.mxu0 0.0
      %433 = vmatpush1.msra.mxu0 0.0
      %434 = vmatprep.subr.mxu0 0.0
      %435 = vmatpush1.msra.mxu0 0.0
      %436 = vmatprep.subr.mxu0 0.0
      %437 = vmatpush1.msra.mxu0 0.0
      %438 = vmatprep.subr.mxu0 0.0
      %439 = vmatpush1.msra.mxu0 0.0
      %440 = vmatprep.subr.mxu0 0.0
      %441 = vmatpush1.msra.mxu0 0.0
      %442 = vmatprep.subr.mxu0 0.0
      %443 = vmatpush1.msra.mxu0 0.0
      %444 = vmatprep.subr.mxu0 0.0
      %445 = vmatpush1.msra.mxu0 0.0
      %446 = vmatprep.subr.mxu0 0.0
      %447 = vmatpush1.msra.mxu0 0.0
      %448 = vmatprep.subr.mxu0 0.0
      %449 = vmatpush1.msra.mxu0 0.0
      %450 = vmatprep.subr.mxu0 0.0
      %451 = vmatpush1.msra.mxu0 0.0
      %452 = vmatprep.subr.mxu0 0.0
      %453 = vmatpush1.msra.mxu0 0.0
      %454 = vmatprep.subr.mxu0 0.0
      %455 = vmatpush1.msra.mxu0 0.0
      %456 = vmatprep.mubr.f32.mxu0 0.0
      %457 = vmatmul.mubr.f32.gmra.mrb[0].mxu0 %v381
      %v458 = vpop.f32.mrb[0].mxu0
      %v459 = vadd.f32 %v362, %v458
      %v460 = vpop.f32.mrb[0].mxu0
      %v461 = vadd.f32 %v362, %v460
      %462 = vmatprep.mubr.f32.mxu0 0.0
      %463 = vmatmul.mubr.f32.gmra.mrb[0].mxu0 %v384
      %v464 = vpop.f32.mrb[0].mxu0
      %v465 = vadd.f32 %v367, %v464
      %v466 = vpop.f32.mrb[0].mxu0
      %v467 = vadd.f32 %v367, %v466
      %468 = vmatprep.mubr.f32.mxu0 0.0
      %469 = vmatmul.mubr.f32.gmra.mrb[0].mxu0 %v387
      %v470 = vpop.f32.mrb[0].mxu0
      %v471 = vadd.f32 %v372, %v470
      %v472 = vpop.f32.mrb[0].mxu0
      %v473 = vadd.f32 %v372, %v472
      %474 = vmatprep.mubr.f32.mxu0 0.0
      %475 = vmatmul.mubr.f32.gmra.mrb[0].mxu0 %v390
      %v476 = vpop.f32.mrb[0].mxu0
      %v477 = vadd.f32 %v377, %v476
      %v478 = vpop.f32.mrb[0].mxu0
      %v479 = vadd.f32 %v377, %v478
      %480 = vdwg.mxu0
      %v481 = vmul.f32 %v459, %v459
      %v482 = vmul.f32 %v461, %v461
      %v483 = vmul.f32 %v465, %v465
      %v484 = vmul.f32 %v467, %v467
      %v485 = vmul.f32 %v459, %v481
      %v486 = vmul.f32 %v461, %v482
      %v487 = vmul.f32 %v465, %v483
      %v488 = vmul.f32 %v467, %v484
      %v489 = vmul.f32 %v485, 0.044715
      %v490 = vmul.f32 %v486, 0.044715
      %v491 = vmul.f32 %v487, 0.044715
      %v492 = vmul.f32 %v488, 0.044715
      %v493 = vadd.f32 %v459, %v489
      %v494 = vadd.f32 %v461, %v490
      %v495 = vadd.f32 %v465, %v491
      %v496 = vadd.f32 %v467, %v492
      %v497 = vmul.f32 %v493, 0.7978846
      %v498 = vmul.f32 %v494, 0.7978846
      %v499 = vmul.f32 %v495, 0.7978846
      %v500 = vmul.f32 %v496, 0.7978846
      %v501 = vtanh.pop %v497
      %v502 = vtanh.pop %v498
      %v503 = vtanh.pop %v499
      %v504 = vtanh.pop %v500
      %v505 = vadd.f32 %v501, 1.0
      %v506 = vadd.f32 %v502, 1.0
      %v507 = vadd.f32 %v503, 1.0
      %v508 = vadd.f32 %v504, 1.0
      %v509 = vmul.f32 %v505, 0.5
      %v510 = vmul.f32 %v506, 0.5
      %v511 = vmul.f32 %v507, 0.5
      %v512 = vmul.f32 %v508, 0.5
      %v513 = vmul.f32 %v459, %v509
      %v514 = vmul.f32 %v461, %v510
      %v515 = vmul.f32 %v465, %v511
      %v516 = vmul.f32 %v467, %v512
      %v517 = vld [vmem:[%s4] sm:$0xff]
      %v518 = vld [vmem:[%s4 + $0x8] sm:$0xff]
      %v519 = vld [vmem:[%s5] sm:$0xff]
      %v520 = vld [vmem:[%s5 + $0x8] sm:$0xff]
      %522 = vset.pattern.permute.xlu0 0
      %523 = vperm.xlu0 %522, %v519
      %v524 = vpop.permute.xlu0 %523
      %527 = vset.pattern.permute.xlu0 0
      %528 = vperm.xlu0 %527, %v520
      %v529 = vpop.permute.xlu0 %528
      %vm531 = vcmask 130048
      %v533 = vsel %vm531, %v517, 0
      %v536 = vsel %vm531, %v518, 0
      %538 = vmatprep.subr.mxu0 %v514
      %539 = vmatpush1.msra.mxu0 %v513
      %540 = vmatprep.subr.mxu0 %v516
      %541 = vmatpush1.msra.mxu0 %v515
      %542 = vmatprep.subr.mxu0 0.0
      %543 = vmatpush1.msra.mxu0 0.0
      %544 = vmatprep.subr.mxu0 0.0
      %545 = vmatpush1.msra.mxu0 0.0
      %546 = vmatprep.subr.mxu0 0.0
      %547 = vmatpush1.msra.mxu0 0.0
      %548 = vmatprep.subr.mxu0 0.0
      %549 = vmatpush1.msra.mxu0 0.0
      %550 = vmatprep.subr.mxu0 0.0
      %551 = vmatpush1.msra.mxu0 0.0
      %552 = vmatprep.subr.mxu0 0.0
      %553 = vmatpush1.msra.mxu0 0.0
      %554 = vmatprep.subr.mxu0 0.0
      %555 = vmatpush1.msra.mxu0 0.0
      %556 = vmatprep.subr.mxu0 0.0
      %557 = vmatpush1.msra.mxu0 0.0
      %558 = vmatprep.subr.mxu0 0.0
      %559 = vmatpush1.msra.mxu0 0.0
      %560 = vmatprep.subr.mxu0 0.0
      %561 = vmatpush1.msra.mxu0 0.0
      %562 = vmatprep.subr.mxu0 0.0
      %563 = vmatpush1.msra.mxu0 0.0
      %564 = vmatprep.subr.mxu0 0.0
      %565 = vmatpush1.msra.mxu0 0.0
      %566 = vmatprep.subr.mxu0 0.0
      %567 = vmatpush1.msra.mxu0 0.0
      %568 = vmatprep.subr.mxu0 0.0
      %569 = vmatpush1.msra.mxu0 0.0
      %570 = vmatprep.subr.mxu0 0.0
      %571 = vmatpush1.msra.mxu0 0.0
      %572 = vmatprep.subr.mxu0 0.0
      %573 = vmatpush1.msra.mxu0 0.0
      %574 = vmatprep.subr.mxu0 0.0
      %575 = vmatpush1.msra.mxu0 0.0
      %576 = vmatprep.subr.mxu0 0.0
      %577 = vmatpush1.msra.mxu0 0.0
      %578 = vmatprep.subr.mxu0 0.0
      %579 = vmatpush1.msra.mxu0 0.0
      %580 = vmatprep.subr.mxu0 0.0
      %581 = vmatpush1.msra.mxu0 0.0
      %582 = vmatprep.subr.mxu0 0.0
      %583 = vmatpush1.msra.mxu0 0.0
      %584 = vmatprep.subr.mxu0 0.0
      %585 = vmatpush1.msra.mxu0 0.0
      %586 = vmatprep.subr.mxu0 0.0
      %587 = vmatpush1.msra.mxu0 0.0
      %588 = vmatprep.subr.mxu0 0.0
      %589 = vmatpush1.msra.mxu0 0.0
      %590 = vmatprep.subr.mxu0 0.0
      %591 = vmatpush1.msra.mxu0 0.0
      %592 = vmatprep.subr.mxu0 0.0
      %593 = vmatpush1.msra.mxu0 0.0
      %594 = vmatprep.subr.mxu0 0.0
      %595 = vmatpush1.msra.mxu0 0.0
      %596 = vmatprep.subr.mxu0 0.0
      %597 = vmatpush1.msra.mxu0 0.0
      %598 = vmatprep.subr.mxu0 0.0
      %599 = vmatpush1.msra.mxu0 0.0
      %600 = vmatprep.subr.mxu0 0.0
      %601 = vmatpush1.msra.mxu0 0.0
      %602 = vmatprep.mubr.f32.mxu0 0.0
      %603 = vmatmul.mubr.f32.gmra.mrb[0].mxu0 %v533
      %v604 = vpop.f32.mrb[0].mxu0
      %v605 = vadd.f32 %v524, %v604
      %v606 = vpop.f32.mrb[0].mxu0
      %v607 = vadd.f32 %v524, %v606
      %608 = vmatprep.mubr.f32.mxu0 0.0
      %609 = vmatmul.mubr.f32.gmra.mrb[0].mxu0 %v536
      %v610 = vpop.f32.mrb[0].mxu0
      %v611 = vadd.f32 %v529, %v610
      %v612 = vpop.f32.mrb[0].mxu0
      %v613 = vadd.f32 %v529, %v612
      %614 = vdwg.mxu0
      %v615 = vadd.f32 %v605, %v471
      %v616 = vadd.f32 %v607, %v473
      %v617 = vadd.f32 %v611, %v477
      %v618 = vadd.f32 %v613, %v479
      %619 = vst [vmem:[%s325] sm:$0xff] %v615
      %620 = vst [vmem:[%s325 + $0x8] sm:$0xff] %v616
      %621 = vst [vmem:[%s325 + $0x10] sm:$0xff] %v617
      %622 = vst [vmem:[%s325 + $0x18] sm:$0xff] %v618
      %s623 = smul.u32 2, %s22
      %p624 = scmp.lt.s32.totalorder %s21, 1
      %s625 = scalar_select %p624, %s21, 1
      %p626 = scmp.lt.s32.totalorder %s623, 1
      %s627 = scalar_select %p626, %s623, 1
      %s628 = smul.addr %s625, 4
      %s629 = sadd.s32 %s627, %s628
      %s630 = smul.addr %s629, 8
      %s631 = scalar_lea.vmem %s6, %s630
      // Predicated region
      $region45: #{_lambda_.8} parent=43 // pred_check
        %p632 = pneg %p189
      $region46: #{_lambda_.8} parent=43 // pred_check_branch
        %634 = sbr.rel (%p632) target = $region48
      $region47: #{_lambda_.8} parent=43 // pred_region
        %s635 = smul.u32 2, %s22
      $region48: #{_lambda_.8} parent=43 // pred_fallthru
        _
    $region44: #{_lambda_.8} parent=5 // pred_fallthru
      _
    %p636 = scmp.le.s32.totalorder 2, %s12
    // Predicated region
    $region49: #{_lambda_.8} parent=5 // pred_check
      %p637 = pneg %p636
    $region50: #{_lambda_.8} parent=5 // pred_check_branch
      %639 = sbr.rel (%p637) target = $region52
    $region51: #{_lambda_.8} parent=5 // pred_region
      %s640 = ssub.s32 %s12, 2
      // Predicated region
      $region53: #{_lambda_.8} parent=51 // pred_check
        %p641 = pneg %p195
      $region54: #{_lambda_.8} parent=51 // pred_check_branch
        %643 = sbr.rel (%p641) target = $region56
      $region55: #{_lambda_.8} parent=51 // pred_region
        %s644 = smul.u32 2, %s24
        %p645 = scmp.lt.s32.totalorder %s23, 1
        %s646 = scalar_select %p645, %s23, 1
        %p647 = scmp.lt.s32.totalorder %s644, 1
        %s648 = scalar_select %p647, %s644, 1
        %s649 = smul.addr %s646, 4
        %s650 = sadd.s32 %s648, %s649
        %s651 = smul.addr %s650, 8
        %s652 = scalar_lea.vmem %s6, %s651
      $region56: #{_lambda_.8} parent=51 // pred_fallthru
        _
    $region52: #{_lambda_.8} parent=5 // pred_fallthru
      _
  $region6: #{_lambda_.8} parent=0 // loop_footer
    %s16 = sadd.s32 1, %s12
  $region7: #{_lambda_.8} parent=0 // loop_footer_branch
    %11 = sbr.rel target = $region3
  $region8: #{_lambda_.8} parent=0 // loop_exit
    _

// kernel: _lambda_.11
$region0: #{_lambda_.11}
  #allocation0 [shape = 'u32[]', space=smem, size = 0x4, offset = 0x4, fixed_abs, tag = 'smem constant byte address 0x4 - core index']
  #allocation1 [shape = 'u32[144,128]{1,0:T(1,128)}', space=vmem, size = 0x12000, scoped, tag = 'internal scratch']
  #allocation2 [shape = 'f32[1,1]{1,0:T(1,128)S(1)}', space=vmem, size = 0x200, scoped, tag = 'scoped memory for _lambda_.11']
  %s0 = inlined_call_operand.vmem [shape: f32[4,16,256], index: 0, kind: input, shape index: {}]
  %s1 = inlined_call_operand.vmem [shape: f32[32,16], index: 1, kind: input, shape index: {}]
  %s2 = inlined_call_operand.vmem [shape: f32[32,1], index: 2, kind: input, shape index: {}]
  %s3 = inlined_call_operand.vmem [shape: f32[1,32], index: 3, kind: input, shape index: {}]
  %s4 = inlined_call_operand.<no memory space> [shape: f32[1,1], index: 4, kind: input, shape index: {}]
  %s5 = inlined_call_operand.vmem [shape: f32[4,1,256], index: 5, kind: output, shape index: {}]
  %s6 = sld [smem:[#allocation0]]
  $region53: #{_lambda_.11} parent=0
    _
  %s8 = ssub.s32 1, %s6
  %s9 = scalar_select 0, %s8, %s6
  %v10 = vstv %s4
  %11 = vst [vmem:[#allocation2] sm:$0x1] %v10
  loop: start=0, step=1, limit=6
  $region2: #{_lambda_.11} parent=0 // loop_pre_header
    _
  $region3: #{_lambda_.11} parent=0 // loop_header
    %s13 = sphi 0, %s17
    %p14 = scmp.ge.s32.totalorder %s13, 6
    %s20 = sphi 0, %s32
    %s21 = sphi 0, %s28
    %s22 = sphi 0, %s20
    %s23 = sphi 0, %s21
    %s24 = sphi 0, %s22
    %s25 = sphi 0, %s23
    %s37 = sphi 0, %s39
    %s40 = sphi 0, %s37
    %s41 = sphi 0, %s40
    %s57 = sphi 0, %s41
    %s61 = sphi 0, %s61
    %s63 = sphi 0, %s61
    %s64 = sphi 0, %s63
    %s78 = sphi 0, %s64
    %s82 = sphi 0, %s82
    %s84 = sphi 0, %s82
    %s85 = sphi 0, %s84
    %s99 = sphi 0, %s85
    %s103 = sphi 0, %s103
    %s105 = sphi 0, %s103
    %s106 = sphi 0, %s105
    %s120 = sphi 0, %s106
    %s124 = sphi 0, %s124
    %s126 = sphi 0, %s124
    %s127 = sphi 0, %s126
    %s141 = sphi 0, %s127
    %s149 = sphi 0, %s151
    %s152 = sphi 0, %s149
    %s153 = sphi 0, %s152
    %s169 = sphi 0, %s153
  $region4: #{_lambda_.11} parent=0 // loop_header_branch
    %16 = sbr.rel (%p14) target = $region8
  $region5: #{_lambda_.11} parent=0 // loop_body
    %s18 = ssub.s32 %s13, 1
    %s19 = ssub.s32 %s13, 2
    %s26 = sadd.s32 1, %s21
    %p27 = scmp.ge.s32.totalorder %s26, 1
    %s28 = scalar_select %p27, 0, %s26
    %s29 = sadd.s32 1, %s20
    %s30 = scalar_select %p27, %s29, %s20
    %p31 = scmp.ge.s32.totalorder %s30, 4
    %s32 = scalar_select %p31, 0, %s30
    %s33 = ssub.s32 %s20, %s32
    %s34 = ssub.s32 %s21, %s28
    %s35 = sor.u32 %s33, %s34
    %p36 = scmp.eq.s32.totalorder %s35, 0
    %s38 = sadd.s32 %s37, 1
    %s39 = scalar_select %p36, %s37, %s38
    %p42 = pneg %p36
    %p43 = scmp.eq.s32.totalorder %s13, 3
    %p44 = por %p42, %p43
    %p45 = scmp.ne.s32.totalorder %s37, %s40
    %p46 = scmp.eq.s32.totalorder %s13, 0
    %p47 = por %p45, %p46
    %p48 = scmp.ne.s32.totalorder %s37, %s40
    %p49 = scmp.eq.s32.totalorder %s18, 3
    %p50 = por %p48, %p49
    %p51 = scmp.ne.s32.totalorder %s40, %s41
    %p52 = scmp.eq.s32.totalorder %s18, 0
    %p53 = por %p51, %p52
    %p54 = scmp.ne.s32.totalorder %s40, %s41
    %p55 = scmp.eq.s32.totalorder %s19, 3
    %p56 = por %p54, %p55
    %p58 = scmp.ne.s32.totalorder %s41, %s57
    %p59 = scmp.eq.s32.totalorder %s19, 0
    %p60 = por %p58, %p59
    %s62 = sadd.s32 %s61, 1
    %p65 = scmp.eq.s32.totalorder %s13, 3
    %p66 = scmp.ne.s32.totalorder %s61, %s63
    %p67 = scmp.eq.s32.totalorder %s13, 0
    %p68 = por %p66, %p67
    %p69 = scmp.ne.s32.totalorder %s61, %s63
    %p70 = scmp.eq.s32.totalorder %s18, 3
    %p71 = por %p69, %p70
    %p72 = scmp.ne.s32.totalorder %s63, %s64
    %p73 = scmp.eq.s32.totalorder %s18, 0
    %p74 = por %p72, %p73
    %p75 = scmp.ne.s32.totalorder %s63, %s64
    %p76 = scmp.eq.s32.totalorder %s19, 3
    %p77 = por %p75, %p76
    %p79 = scmp.ne.s32.totalorder %s64, %s78
    %p80 = scmp.eq.s32.totalorder %s19, 0
    %p81 = por %p79, %p80
    %s83 = sadd.s32 %s82, 1
    %p86 = scmp.eq.s32.totalorder %s13, 3
    %p87 = scmp.ne.s32.totalorder %s82, %s84
    %p88 = scmp.eq.s32.totalorder %s13, 0
    %p89 = por %p87, %p88
    %p90 = scmp.ne.s32.totalorder %s82, %s84
    %p91 = scmp.eq.s32.totalorder %s18, 3
    %p92 = por %p90, %p91
    %p93 = scmp.ne.s32.totalorder %s84, %s85
    %p94 = scmp.eq.s32.totalorder %s18, 0
    %p95 = por %p93, %p94
    %p96 = scmp.ne.s32.totalorder %s84, %s85
    %p97 = scmp.eq.s32.totalorder %s19, 3
    %p98 = por %p96, %p97
    %p100 = scmp.ne.s32.totalorder %s85, %s99
    %p101 = scmp.eq.s32.totalorder %s19, 0
    %p102 = por %p100, %p101
    %s104 = sadd.s32 %s103, 1
    %p107 = scmp.eq.s32.totalorder %s13, 3
    %p108 = scmp.ne.s32.totalorder %s103, %s105
    %p109 = scmp.eq.s32.totalorder %s13, 0
    %p110 = por %p108, %p109
    %p111 = scmp.ne.s32.totalorder %s103, %s105
    %p112 = scmp.eq.s32.totalorder %s18, 3
    %p113 = por %p111, %p112
    %p114 = scmp.ne.s32.totalorder %s105, %s106
    %p115 = scmp.eq.s32.totalorder %s18, 0
    %p116 = por %p114, %p115
    %p117 = scmp.ne.s32.totalorder %s105, %s106
    %p118 = scmp.eq.s32.totalorder %s19, 3
    %p119 = por %p117, %p118
    %p121 = scmp.ne.s32.totalorder %s106, %s120
    %p122 = scmp.eq.s32.totalorder %s19, 0
    %p123 = por %p121, %p122
    %s125 = sadd.s32 %s124, 1
    %p128 = scmp.eq.s32.totalorder %s13, 3
    %p129 = scmp.ne.s32.totalorder %s124, %s126
    %p130 = scmp.eq.s32.totalorder %s13, 0
    %p131 = por %p129, %p130
    %p132 = scmp.ne.s32.totalorder %s124, %s126
    %p133 = scmp.eq.s32.totalorder %s18, 3
    %p134 = por %p132, %p133
    %p135 = scmp.ne.s32.totalorder %s126, %s127
    %p136 = scmp.eq.s32.totalorder %s18, 0
    %p137 = por %p135, %p136
    %p138 = scmp.ne.s32.totalorder %s126, %s127
    %p139 = scmp.eq.s32.totalorder %s19, 3
    %p140 = por %p138, %p139
    %p142 = scmp.ne.s32.totalorder %s127, %s141
    %p143 = scmp.eq.s32.totalorder %s19, 0
    %p144 = por %p142, %p143
    %s145 = ssub.s32 %s20, %s32
    %s146 = ssub.s32 %s21, %s28
    %s147 = sor.u32 %s145, %s146
    %p148 = scmp.eq.s32.totalorder %s147, 0
    %s150 = sadd.s32 %s149, 1
    %s151 = scalar_select %p148, %s149, %s150
    %p154 = pneg %p148
    %p155 = scmp.eq.s32.totalorder %s13, 3
    %p156 = por %p154, %p155
    %p157 = scmp.ne.s32.totalorder %s149, %s152
    %p158 = scmp.eq.s32.totalorder %s13, 0
    %p159 = por %p157, %p158
    %p160 = scmp.ne.s32.totalorder %s149, %s152
    %p161 = scmp.eq.s32.totalorder %s18, 3
    %p162 = por %p160, %p161
    %p163 = scmp.ne.s32.totalorder %s152, %s153
    %p164 = scmp.eq.s32.totalorder %s18, 0
    %p165 = por %p163, %p164
    %p166 = scmp.ne.s32.totalorder %s152, %s153
    %p167 = scmp.eq.s32.totalorder %s19, 3
    %p168 = por %p166, %p167
    %p170 = scmp.ne.s32.totalorder %s153, %s169
    %p171 = scmp.eq.s32.totalorder %s19, 0
    %p172 = por %p170, %p171
    %p173 = scmp.le.s32.totalorder 1, %s13
    %p174 = scmp.lt.s32.totalorder %s13, 5
    %p175 = pnand %p173, %p174
    %p176 = pneg %p175
    // Predicated region
    $region9: #{_lambda_.11} parent=5 // pred_check
      _
    $region10: #{_lambda_.11} parent=5 // pred_check_branch
      %178 = sbr.rel (%p175) target = $region12
    $region11: #{_lambda_.11} parent=5 // pred_region
      %s179 = ssub.s32 %s13, 1
      // Predicated region
      $region13: #{_lambda_.11} parent=11 // pred_check
        %p180 = pneg %p74
      $region14: #{_lambda_.11} parent=11 // pred_check_branch
        %182 = sbr.rel (%p180) target = $region16
      $region15: #{_lambda_.11} parent=11 // pred_region
        _
      $region16: #{_lambda_.11} parent=11 // pred_fallthru
        _
      // Predicated region
      $region17: #{_lambda_.11} parent=11 // pred_check
        %p183 = pneg %p95
      $region18: #{_lambda_.11} parent=11 // pred_check_branch
        %185 = sbr.rel (%p183) target = $region20
      $region19: #{_lambda_.11} parent=11 // pred_region
        _
      $region20: #{_lambda_.11} parent=11 // pred_fallthru
        _
      // Predicated region
      $region21: #{_lambda_.11} parent=11 // pred_check
        %p186 = pneg %p116
      $region22: #{_lambda_.11} parent=11 // pred_check_branch
        %188 = sbr.rel (%p186) target = $region24
      $region23: #{_lambda_.11} parent=11 // pred_region
        _
      $region24: #{_lambda_.11} parent=11 // pred_fallthru
        _
      // Predicated region
      $region25: #{_lambda_.11} parent=11 // pred_check
        %p189 = pneg %p137
      $region26: #{_lambda_.11} parent=11 // pred_check_branch
        %191 = sbr.rel (%p189) target = $region28
      $region27: #{_lambda_.11} parent=11 // pred_region
        _
      $region28: #{_lambda_.11} parent=11 // pred_fallthru
        _
    $region12: #{_lambda_.11} parent=5 // pred_fallthru
      _
    %p192 = scmp.lt.s32.totalorder %s13, 4
    // Predicated region
    $region29: #{_lambda_.11} parent=5 // pred_check
      %p193 = pneg %p192
    $region30: #{_lambda_.11} parent=5 // pred_check_branch
      %195 = sbr.rel (%p193) target = $region32
    $region31: #{_lambda_.11} parent=5 // pred_region
      // Predicated region
      $region33: #{_lambda_.11} parent=31 // pred_check
        %p196 = pneg %p47
      $region34: #{_lambda_.11} parent=31 // pred_check_branch
        %198 = sbr.rel (%p196) target = $region36
      $region35: #{_lambda_.11} parent=31 // pred_region
        %s199 = smul.u32 2, %s21
        %p200 = scmp.lt.s32.totalorder %s20, 3
        %s201 = scalar_select %p200, %s20, 3
        %p202 = scmp.lt.s32.totalorder %s199, 1
        %s203 = scalar_select %p202, %s199, 1
        %s204 = smul.addr %s201, 4
        %s205 = sadd.s32 %s203, %s204
        %s206 = smul.addr %s205, 8
        %s207 = scalar_lea.vmem %s0, %s206
        %s208 = smul.u32 2, %s21
      $region36: #{_lambda_.11} parent=31 // pred_fallthru
        _
    $region32: #{_lambda_.11} parent=5 // pred_fallthru
      _
    %p209 = scmp.le.s32.totalorder 1, %s13
    %p210 = scmp.lt.s32.totalorder %s13, 5
    %p211 = pnand %p209, %p210
    %p212 = pneg %p211
    // Predicated region
    $region37: #{_lambda_.11} parent=5 // pred_check
      _
    $region38: #{_lambda_.11} parent=5 // pred_check_branch
      %214 = sbr.rel (%p211) target = $region40
    $region39: #{_lambda_.11} parent=5 // pred_region
      %s215 = ssub.s32 %s13, 1
      %s216 = smul.u32 2, %s23
      %p217 = scmp.lt.s32.totalorder %s22, 3
      %s218 = scalar_select %p217, %s22, 3
      %p219 = scmp.lt.s32.totalorder %s216, 1
      %s220 = scalar_select %p219, %s216, 1
      %s221 = smul.addr %s218, 4
      %s222 = sadd.s32 %s220, %s221
      %s223 = smul.addr %s222, 8
      %s224 = scalar_lea.vmem %s0, %s223
      %p225 = pneg %p53
      %p226 = pneg %p50
      %p227 = pneg %p74
      %p228 = pneg %p71
      %p229 = pneg %p95
      %p230 = pneg %p92
      %p231 = pneg %p116
      %p232 = pneg %p113
      %p233 = pneg %p137
      %p234 = pneg %p134
      %p235 = pneg %p165
      %p236 = pneg %p162
      %s237 = smul.u32 2, %s23
      %p238 = scmp.lt.s32.totalorder %s22, 3
      %s239 = scalar_select %p238, %s22, 3
      %p240 = scmp.lt.s32.totalorder %s237, 1
      %s241 = scalar_select %p240, %s237, 1
      %s242 = smul.addr %s239, 2
      %s243 = sadd.s32 %s241, %s242
      %s244 = scalar_lea.vmem %s5, %s243
      %s245 = smul.u32 2, %s23
      %p246 = scmp.lt.s32.totalorder %s22, 3
      %s247 = scalar_select %p246, %s22, 3
      %p248 = scmp.lt.s32.totalorder %s245, 1
      %s249 = scalar_select %p248, %s245, 1
      %s250 = smul.addr %s247, 4
      %s251 = sadd.s32 %s249, %s250
      %s252 = smul.addr %s251, 8
      %s253 = scalar_lea.vmem %s0, %s252
      %s254 = smul.u32 2, %s23
      %s255 = smul.u32 2, %s23
      %p256 = scmp.lt.s32.totalorder %s22, 3
      %s257 = scalar_select %p256, %s22, 3
      %p258 = scmp.lt.s32.totalorder %s255, 1
      %s259 = scalar_select %p258, %s255, 1
      %s260 = smul.addr %s257, 2
      %s261 = sadd.s32 %s259, %s260
      %s262 = scalar_lea.vmem %s5, %s261
      %s263 = smul.u32 2, %s23
      %v264 = vld [vmem:[%s1] sm:$0xff]
      %v265 = vld [vmem:[%s1 + $0x8] sm:$0xff]
      %v266 = vld [vmem:[%s1 + $0x10] sm:$0xff]
      %v267 = vld [vmem:[%s1 + $0x18] sm:$0xff]
      %v268 = vld [vmem:[%s253] sm:$0xff]
      %v269 = vld [vmem:[%s253 + $0x8] sm:$0xff]
      %v270 = vld [vmem:[%s253 + $0x10] sm:$0xff]
      %v271 = vld [vmem:[%s253 + $0x18] sm:$0xff]
      %v272 = vld [vmem:[%s2] sm:$0xff]
      %v273 = vld [vmem:[%s2 + $0x8] sm:$0xff]
      %v274 = vld [vmem:[%s2 + $0x10] sm:$0xff]
      %v275 = vld [vmem:[%s2 + $0x18] sm:$0xff]
      %277 = vset.pattern.permute.xlu0 0
      %278 = vperm.xlu0 %277, %v272
      %v279 = vpop.permute.xlu0 %278
      %282 = vset.pattern.permute.xlu0 0
      %283 = vperm.xlu0 %282, %v273
      %v284 = vpop.permute.xlu0 %283
      %287 = vset.pattern.permute.xlu0 0
      %288 = vperm.xlu0 %287, %v274
      %v289 = vpop.permute.xlu0 %288
      %292 = vset.pattern.permute.xlu0 0
      %293 = vperm.xlu0 %292, %v275
      %v294 = vpop.permute.xlu0 %293
      %vm296 = vcmask 130048
      %v298 = vsel %vm296, %v264, 0
      %v301 = vsel %vm296, %v265, 0
      %v304 = vsel %vm296, %v266, 0
      %v307 = vsel %vm296, %v267, 0
      %309 = vmatprep.subr.mxu0 %v269
      %310 = vmatpush1.msra.mxu0 %v268
      %311 = vmatprep.subr.mxu0 %v271
      %312 = vmatpush1.msra.mxu0 %v270
      %313 = vmatprep.subr.mxu0 0.0
      %314 = vmatpush1.msra.mxu0 0.0
      %315 = vmatprep.subr.mxu0 0.0
      %316 = vmatpush1.msra.mxu0 0.0
      %317 = vmatprep.subr.mxu0 0.0
      %318 = vmatpush1.msra.mxu0 0.0
      %319 = vmatprep.subr.mxu0 0.0
      %320 = vmatpush1.msra.mxu0 0.0
      %321 = vmatprep.subr.mxu0 0.0
      %322 = vmatpush1.msra.mxu0 0.0
      %323 = vmatprep.subr.mxu0 0.0
      %324 = vmatpush1.msra.mxu0 0.0
      %325 = vmatprep.subr.mxu0 0.0
      %326 = vmatpush1.msra.mxu0 0.0
      %327 = vmatprep.subr.mxu0 0.0
      %328 = vmatpush1.msra.mxu0 0.0
      %329 = vmatprep.subr.mxu0 0.0
      %330 = vmatpush1.msra.mxu0 0.0
      %331 = vmatprep.subr.mxu0 0.0
      %332 = vmatpush1.msra.mxu0 0.0
      %333 = vmatprep.subr.mxu0 0.0
      %334 = vmatpush1.msra.mxu0 0.0
      %335 = vmatprep.subr.mxu0 0.0
      %336 = vmatpush1.msra.mxu0 0.0
      %337 = vmatprep.subr.mxu0 0.0
      %338 = vmatpush1.msra.mxu0 0.0
      %339 = vmatprep.subr.mxu0 0.0
      %340 = vmatpush1.msra.mxu0 0.0
      %341 = vmatprep.subr.mxu0 0.0
      %342 = vmatpush1.msra.mxu0 0.0
      %343 = vmatprep.subr.mxu0 0.0
      %344 = vmatpush1.msra.mxu0 0.0
      %345 = vmatprep.subr.mxu0 0.0
      %346 = vmatpush1.msra.mxu0 0.0
      %347 = vmatprep.subr.mxu0 0.0
      %348 = vmatpush1.msra.mxu0 0.0
      %349 = vmatprep.subr.mxu0 0.0
      %350 = vmatpush1.msra.mxu0 0.0
      %351 = vmatprep.subr.mxu0 0.0
      %352 = vmatpush1.msra.mxu0 0.0
      %353 = vmatprep.subr.mxu0 0.0
      %354 = vmatpush1.msra.mxu0 0.0
      %355 = vmatprep.subr.mxu0 0.0
      %356 = vmatpush1.msra.mxu0 0.0
      %357 = vmatprep.subr.mxu0 0.0
      %358 = vmatpush1.msra.mxu0 0.0
      %359 = vmatprep.subr.mxu0 0.0
      %360 = vmatpush1.msra.mxu0 0.0
      %361 = vmatprep.subr.mxu0 0.0
      %362 = vmatpush1.msra.mxu0 0.0
      %363 = vmatprep.subr.mxu0 0.0
      %364 = vmatpush1.msra.mxu0 0.0
      %365 = vmatprep.subr.mxu0 0.0
      %366 = vmatpush1.msra.mxu0 0.0
      %367 = vmatprep.subr.mxu0 0.0
      %368 = vmatpush1.msra.mxu0 0.0
      %369 = vmatprep.subr.mxu0 0.0
      %370 = vmatpush1.msra.mxu0 0.0
      %371 = vmatprep.subr.mxu0 0.0
      %372 = vmatpush1.msra.mxu0 0.0
      %373 = vmatprep.mubr.f32.mxu0 0.0
      %374 = vmatmul.mubr.f32.gmra.mrb[0].mxu0 %v298
      %v375 = vpop.f32.mrb[0].mxu0
      %v376 = vadd.f32 %v279, %v375
      %v377 = vpop.f32.mrb[0].mxu0
      %v378 = vadd.f32 %v279, %v377
      %379 = vmatprep.mubr.f32.mxu0 0.0
      %380 = vmatmul.mubr.f32.gmra.mrb[0].mxu0 %v301
      %v381 = vpop.f32.mrb[0].mxu0
      %v382 = vadd.f32 %v284, %v381
      %v383 = vpop.f32.mrb[0].mxu0
      %v384 = vadd.f32 %v284, %v383
      %385 = vmatprep.mubr.f32.mxu0 0.0
      %386 = vmatmul.mubr.f32.gmra.mrb[0].mxu0 %v304
      %v387 = vpop.f32.mrb[0].mxu0
      %v388 = vadd.f32 %v289, %v387
      %v389 = vpop.f32.mrb[0].mxu0
      %v390 = vadd.f32 %v289, %v389
      %391 = vmatprep.mubr.f32.mxu0 0.0
      %392 = vmatmul.mubr.f32.gmra.mrb[0].mxu0 %v307
      %v393 = vpop.f32.mrb[0].mxu0
      %v394 = vadd.f32 %v294, %v393
      %v395 = vpop.f32.mrb[0].mxu0
      %v396 = vadd.f32 %v294, %v395
      %397 = vdwg.mxu0
      %v398 = vmul.f32 %v376, %v376
      %v399 = vmul.f32 %v378, %v378
      %v400 = vmul.f32 %v382, %v382
      %v401 = vmul.f32 %v384, %v384
      %v402 = vmul.f32 %v388, %v388
      %v403 = vmul.f32 %v390, %v390
      %v404 = vmul.f32 %v394, %v394
      %v405 = vmul.f32 %v396, %v396
      %v406 = vmul.f32 %v376, %v398
      %v407 = vmul.f32 %v378, %v399
      %v408 = vmul.f32 %v382, %v400
      %v409 = vmul.f32 %v384, %v401
      %v410 = vmul.f32 %v388, %v402
      %v411 = vmul.f32 %v390, %v403
      %v412 = vmul.f32 %v394, %v404
      %v413 = vmul.f32 %v396, %v405
      %v414 = vmul.f32 %v406, 0.044715
      %v415 = vmul.f32 %v407, 0.044715
      %v416 = vmul.f32 %v408, 0.044715
      %v417 = vmul.f32 %v409, 0.044715
      %v418 = vmul.f32 %v410, 0.044715
      %v419 = vmul.f32 %v411, 0.044715
      %v420 = vmul.f32 %v412, 0.044715
      %v421 = vmul.f32 %v413, 0.044715
      %v422 = vadd.f32 %v376, %v414
      %v423 = vadd.f32 %v378, %v415
      %v424 = vadd.f32 %v382, %v416
      %v425 = vadd.f32 %v384, %v417
      %v426 = vadd.f32 %v388, %v418
      %v427 = vadd.f32 %v390, %v419
      %v428 = vadd.f32 %v394, %v420
      %v429 = vadd.f32 %v396, %v421
      %v430 = vmul.f32 %v422, 0.7978846
      %v431 = vmul.f32 %v423, 0.7978846
      %v432 = vmul.f32 %v424, 0.7978846
      %v433 = vmul.f32 %v425, 0.7978846
      %v434 = vmul.f32 %v426, 0.7978846
      %v435 = vmul.f32 %v427, 0.7978846
      %v436 = vmul.f32 %v428, 0.7978846
      %v437 = vmul.f32 %v429, 0.7978846
      %v438 = vtanh.pop %v430
      %v439 = vtanh.pop %v431
      %v440 = vtanh.pop %v432
      %v441 = vtanh.pop %v433
      %v442 = vtanh.pop %v434
      %v443 = vtanh.pop %v435
      %v444 = vtanh.pop %v436
      %v445 = vtanh.pop %v437
      %v446 = vadd.f32 %v438, 1.0
      %v447 = vadd.f32 %v439, 1.0
      %v448 = vadd.f32 %v440, 1.0
      %v449 = vadd.f32 %v441, 1.0
      %v450 = vadd.f32 %v442, 1.0
      %v451 = vadd.f32 %v443, 1.0
      %v452 = vadd.f32 %v444, 1.0
      %v453 = vadd.f32 %v445, 1.0
      %v454 = vmul.f32 %v446, 0.5
      %v455 = vmul.f32 %v447, 0.5
      %v456 = vmul.f32 %v448, 0.5
      %v457 = vmul.f32 %v449, 0.5
      %v458 = vmul.f32 %v450, 0.5
      %v459 = vmul.f32 %v451, 0.5
      %v460 = vmul.f32 %v452, 0.5
      %v461 = vmul.f32 %v453, 0.5
      %v462 = vmul.f32 %v376, %v454
      %v463 = vmul.f32 %v378, %v455
      %v464 = vmul.f32 %v382, %v456
      %v465 = vmul.f32 %v384, %v457
      %v466 = vmul.f32 %v388, %v458
      %v467 = vmul.f32 %v390, %v459
      %v468 = vmul.f32 %v394, %v460
      %v469 = vmul.f32 %v396, %v461
      %v470 = vld [vmem:[%s3] sm:$0x1]
      %v471 = vld [vmem:[#allocation2] sm:$0x1]
      %473 = vset.pattern.permute.xlu0 0
      %474 = vperm.xlu0 %473, %v471
      %v475 = vpop.permute.xlu0 %474
      %v477 = vlaneseq
      %v478 = vshrl.u32 %v477, 7
      %v479 = vsub.s32 0, %v478
      %v480 = vrot.slane %v475, %v479
      %vm481 = vcmask 261120
      %v483 = vsel %vm481, %v470, 0
      %485 = vmatprep.subr.mxu0 %v463
      %486 = vmatpush1.msra.mxu0 %v462
      %487 = vmatprep.subr.mxu0 %v465
      %488 = vmatpush1.msra.mxu0 %v464
      %489 = vmatprep.subr.mxu0 %v467
      %490 = vmatpush1.msra.mxu0 %v466
      %491 = vmatprep.subr.mxu0 %v469
      %492 = vmatpush1.msra.mxu0 %v468
      %493 = vmatprep.subr.mxu0 0.0
      %494 = vmatpush1.msra.mxu0 0.0
      %495 = vmatprep.subr.mxu0 0.0
      %496 = vmatpush1.msra.mxu0 0.0
      %497 = vmatprep.subr.mxu0 0.0
      %498 = vmatpush1.msra.mxu0 0.0
      %499 = vmatprep.subr.mxu0 0.0
      %500 = vmatpush1.msra.mxu0 0.0
      %501 = vmatprep.subr.mxu0 0.0
      %502 = vmatpush1.msra.mxu0 0.0
      %503 = vmatprep.subr.mxu0 0.0
      %504 = vmatpush1.msra.mxu0 0.0
      %505 = vmatprep.subr.mxu0 0.0
      %506 = vmatpush1.msra.mxu0 0.0
      %507 = vmatprep.subr.mxu0 0.0
      %508 = vmatpush1.msra.mxu0 0.0
      %509 = vmatprep.subr.mxu0 0.0
      %510 = vmatpush1.msra.mxu0 0.0
      %511 = vmatprep.subr.mxu0 0.0
      %512 = vmatpush1.msra.mxu0 0.0
      %513 = vmatprep.subr.mxu0 0.0
      %514 = vmatpush1.msra.mxu0 0.0
      %515 = vmatprep.subr.mxu0 0.0
      %516 = vmatpush1.msra.mxu0 0.0
      %517 = vmatprep.subr.mxu0 0.0
      %518 = vmatpush1.msra.mxu0 0.0
      %519 = vmatprep.subr.mxu0 0.0
      %520 = vmatpush1.msra.mxu0 0.0
      %521 = vmatprep.subr.mxu0 0.0
      %522 = vmatpush1.msra.mxu0 0.0
      %523 = vmatprep.subr.mxu0 0.0
      %524 = vmatpush1.msra.mxu0 0.0
      %525 = vmatprep.subr.mxu0 0.0
      %526 = vmatpush1.msra.mxu0 0.0
      %527 = vmatprep.subr.mxu0 0.0
      %528 = vmatpush1.msra.mxu0 0.0
      %529 = vmatprep.subr.mxu0 0.0
      %530 = vmatpush1.msra.mxu0 0.0
      %531 = vmatprep.subr.mxu0 0.0
      %532 = vmatpush1.msra.mxu0 0.0
      %533 = vmatprep.subr.mxu0 0.0
      %534 = vmatpush1.msra.mxu0 0.0
      %535 = vmatprep.subr.mxu0 0.0
      %536 = vmatpush1.msra.mxu0 0.0
      %537 = vmatprep.subr.mxu0 0.0
      %538 = vmatpush1.msra.mxu0 0.0
      %539 = vmatprep.subr.mxu0 0.0
      %540 = vmatpush1.msra.mxu0 0.0
      %541 = vmatprep.subr.mxu0 0.0
      %542 = vmatpush1.msra.mxu0 0.0
      %543 = vmatprep.subr.mxu0 0.0
      %544 = vmatpush1.msra.mxu0 0.0
      %545 = vmatprep.subr.mxu0 0.0
      %546 = vmatpush1.msra.mxu0 0.0
      %547 = vmatprep.subr.mxu0 0.0
      %548 = vmatpush1.msra.mxu0 0.0
      %549 = vmatprep.mubr.f32.mxu0 0.0
      %550 = vmatmul.mubr.f32.gmra.mrb[0].mxu0 %v483
      %v551 = vpop.f32.mrb[0].mxu0
      %v552 = vadd.f32 %v480, %v551
      %v553 = vpop.f32.mrb[0].mxu0
      %v554 = vadd.f32 %v480, %v553
      %555 = vdwg.mxu0
      %v556 = vxor.u32 %v552, 2147483648
      %v557 = vxor.u32 %v554, 2147483648
      %v558 = vmul.f32 %v556, 1.442695
      %v559 = vpow.pop %v558
      %v560 = vmul.f32 %v557, 1.442695
      %v561 = vpow.pop %v560
      %v562 = vadd.f32 %v559, 1.0
      %v563 = vadd.f32 %v561, 1.0
      %v564 = vrcp.pop %v562
      %v565 = vmul.f32 1.0, %v564
      %v566 = vrcp.pop %v563
      %v567 = vmul.f32 1.0, %v566
      %v570 = vcombine.low %v565, %v567
      %v572 = vunpack.c.l.s4 1966171168
      %v573 = vunpack.c.0.s8 %v572
      %v574 = vlaneseq
      %v575 = vshrl.u32 %v574, 7
      %v576 = vsub.s32 %v573, %v575
      %v577 = vrot.slane %v570, %v576
      %v579 = vunpack.c.l.s4 1966171168
      %v580 = vunpack.c.0.s8 %v579
      %v581 = vlaneseq
      %v582 = vshrl.u32 %v581, 7
      %v583 = vsub.s32 %v580, %v582
      %v584 = vrot.slane %v577, %v583
      %v586 = vlaneseq
      %vm587 = vcmp.ge.s32.totalorder %v586, 0
      %vm588 = vcmp.lt.s32.totalorder %v586, 256
      %vm589 = vmand %vm587, %vm588
      %590 = vst.msk [vmem:[%s262] sm:$0x3] %vm589, %v584
      %s591 = smul.u32 2, %s23
      %p592 = scmp.lt.s32.totalorder %s22, 3
      %s593 = scalar_select %p592, %s22, 3
      %p594 = scmp.lt.s32.totalorder %s591, 1
      %s595 = scalar_select %p594, %s591, 1
      %s596 = smul.addr %s593, 2
      %s597 = sadd.s32 %s595, %s596
      %s598 = scalar_lea.vmem %s5, %s597
      // Predicated region
      $region41: #{_lambda_.11} parent=39 // pred_check
        %p599 = pneg %p162
      $region42: #{_lambda_.11} parent=39 // pred_check_branch
        %601 = sbr.rel (%p599) target = $region44
      $region43: #{_lambda_.11} parent=39 // pred_region
        %s602 = smul.u32 2, %s23
      $region44: #{_lambda_.11} parent=39 // pred_fallthru
        _
    $region40: #{_lambda_.11} parent=5 // pred_fallthru
      _
    %p603 = scmp.le.s32.totalorder 2, %s13
    // Predicated region
    $region45: #{_lambda_.11} parent=5 // pred_check
      %p604 = pneg %p603
    $region46: #{_lambda_.11} parent=5 // pred_check_branch
      %606 = sbr.rel (%p604) target = $region48
    $region47: #{_lambda_.11} parent=5 // pred_region
      %s607 = ssub.s32 %s13, 2
      // Predicated region
      $region49: #{_lambda_.11} parent=47 // pred_check
        %p608 = pneg %p168
      $region50: #{_lambda_.11} parent=47 // pred_check_branch
        %610 = sbr.rel (%p608) target = $region52
      $region51: #{_lambda_.11} parent=47 // pred_region
        %s611 = smul.u32 2, %s25
        %p612 = scmp.lt.s32.totalorder %s24, 3
        %s613 = scalar_select %p612, %s24, 3
        %p614 = scmp.lt.s32.totalorder %s611, 1
        %s615 = scalar_select %p614, %s611, 1
        %s616 = smul.addr %s613, 2
        %s617 = sadd.s32 %s615, %s616
        %s618 = scalar_lea.vmem %s5, %s617
      $region52: #{_lambda_.11} parent=47 // pred_fallthru
        _
    $region48: #{_lambda_.11} parent=5 // pred_fallthru
      _
  $region6: #{_lambda_.11} parent=0 // loop_footer
    %s17 = sadd.s32 1, %s13
  $region7: #{_lambda_.11} parent=0 // loop_footer_branch
    %12 = sbr.rel target = $region3
  $region8: #{_lambda_.11} parent=0 // loop_exit
    _

</llo_original>
